<compile_context>
chip_gen: v7x
topology: tpu7x:2x2x1
jax: 0.10.0
libtpu: 0.0.40
codegen_flags: <defaults>
</compile_context>

<pallas_src>
import math

import jax
import jax.numpy as jnp
from jax.experimental import pallas as pl
from jax.experimental.pallas import tpu as pltpu

EPS = 1e-5  # nn.InstanceNorm2d default eps


def _make_dense_block_kernel(dense_channel, depth, h, w):
    """Build the fused DenseBlock kernel + its scratch shapes."""
    c0 = dense_channel
    hw = h * w
    c_total = c0 * depth                      # widest skip (input of last layer)
    dil_max = 2 ** (depth - 1)
    need = dil_max * w                        # max |flat row shift| = dil*W
    pad = ((need + 127) // 128) * 128         # lane halo, 128-aligned
    hw_pad = hw + 2 * pad

    def kernel(x_ref, w_ref, p_ref, o_ref, skip_scr):
        # x_ref:    (1, C0, HW)          f32
        # w_ref:    (depth, 9, C0, Cin_max) bf16, zero-padded along Cin
        # p_ref:    (depth, C0, 4)       f32  [bias, gamma, beta, alpha]
        # o_ref:    (1, C0, HW)          f32
        # skip_scr: VMEM (C_total, HW_pad) f32

        # Zero ONLY the lane halos; every interior row is fully written before
        # it is read.  Redone every grid step (megacore-safe, tiny store).
        skip_scr[:, 0:pad] = jnp.zeros((c_total, pad), jnp.float32)
        skip_scr[:, pad + hw:hw_pad] = jnp.zeros((c_total, pad), jnp.float32)

        # Place this batch element's input at the bottom of the dense-skip slab.
        skip_scr[c_total - c0:c_total, pad:pad + hw] = x_ref[0]

        # Column masks (hoisted, reused by every layer); applied to the
        # (Cout, HW) partial products of the dc=+/-1 tap groups.
        col = jax.lax.broadcasted_iota(jnp.int32, (1, hw), 1) % w
        mask_l = (col > 0).astype(jnp.float32)        # tap reads from w-1
        mask_r = (col < w - 1).astype(jnp.float32)    # tap reads from w+1

        for i in range(depth):                # static unroll over layers
            cin = c0 * (i + 1)
            dil = 2 ** i
            c_lo = c_total - cin              # current skip = rows [c_lo, c_total)
            w_i = w_ref[i]                    # (9, C0, Cin_max) bf16

            acc_c = jnp.zeros((c0, hw), jnp.float32)
            acc_l = jnp.zeros((c0, hw), jnp.float32)
            acc_r = jnp.zeros((c0, hw), jnp.float32)

            for r in range(3):                # kh taps, dr = (kh-1)*dil rows
                dr = (r - 1) * dil
                off = pad + dr * w
                slab = skip_scr[c_lo:c_total, off:off + hw]       # (cin, hw) f32
                # dc = +/-1 taps: XLU lane rotate of the dc=0 slab; the wrapped
                # column is always masked out below, so identical to zero pad.
                slab_c = slab.astype(jnp.bfloat16)
                slab_l = pltpu.roll(slab, shift=1, axis=1).astype(jnp.bfloat16)
                slab_r = pltpu.roll(slab, shift=hw - 1, axis=1).astype(jnp.bfloat16)

                acc_l += jnp.dot(w_i[3 * r + 0, :, :cin], slab_l,
                                 preferred_element_type=jnp.float32)
                acc_c += jnp.dot(w_i[3 * r + 1, :, :cin], slab_c,
                                 preferred_element_type=jnp.float32)
                acc_r += jnp.dot(w_i[3 * r + 2, :, :cin], slab_r,
                                 preferred_element_type=jnp.float32)

            pars = p_ref[i]                   # (C0, 4)
            acc = acc_c + acc_l * mask_l + acc_r * mask_r + pars[:, 0:1]

            # InstanceNorm2d (affine): per-channel stats over spatial, biased
            # variance, numerically-safe two-pass form, f32 throughout.
            mean = jnp.mean(acc, axis=1, keepdims=True)
            cent = acc - mean
            var = jnp.mean(cent * cent, axis=1, keepdims=True)
            scale = pars[:, 1:2] * jax.lax.rsqrt(var + EPS)   # gamma folded in
            y = cent * scale + pars[:, 2:3]                   # + beta

            # PReLU (per-channel alpha), f32.
            y = jnp.where(y >= 0.0, y, pars[:, 3:4] * y)

            if i == depth - 1:
                o_ref[0] = y
            else:
                lo = c_total - (i + 2) * c0   # dense skip: new output goes on top
                skip_scr[lo:lo + c0, pad:pad + hw] = y

    scratch = [pltpu.VMEM((c_total, hw_pad), jnp.float32)]
    return kernel, scratch


def dense_block_forward(x, w_packed, p_packed):
    """Fused DenseBlock forward. x: (N, C0, H, W) f32."""
    n, c0, h, w = x.shape
    depth = w_packed.shape[0]
    hw = h * w
    kernel, scratch = _make_dense_block_kernel(c0, depth, h, w)

    x_flat = x.reshape(n, c0, hw)
    out = pl.pallas_call(
        kernel,
        out_shape=jax.ShapeDtypeStruct((n, c0, hw), jnp.float32),
        grid=(n,),
        in_specs=[
            pl.BlockSpec((1, c0, hw), lambda b: (b, 0, 0)),
            pl.BlockSpec(w_packed.shape, lambda b: (0, 0, 0, 0)),
            pl.BlockSpec(p_packed.shape, lambda b: (0, 0, 0)),
        ],
        out_specs=pl.BlockSpec((1, c0, hw), lambda b: (b, 0, 0)),
        scratch_shapes=scratch,
        compiler_params=pltpu.CompilerParams(
            dimension_semantics=("parallel",),     # megacore batch sharding on v7x
            vmem_limit_bytes=32 * 1024 * 1024),    # toy usage ~1 MiB; explicit budget
    )(x_flat, w_packed, p_packed)
    return out.reshape(n, c0, h, w)


def init_dense_block_params(key, dense_channel, depth):
    """Weights packed as (depth, 9, Cout, Cin_max) bf16, tap k = kh*3+kw matching
    torch weight[:, :, kh, kw]; columns [cin_i:Cin_max] are zero and never read.
    bias/gamma/beta/alpha packed into one (depth, Cout, 4) f32 array."""
    c0 = dense_channel
    cin_max = c0 * depth
    w_rows, p_rows = [], []
    for i in range(depth):
        cin = c0 * (i + 1)
        key, k1, k2 = jax.random.split(key, 3)
        fan_in = cin * 9
        wi = jax.random.normal(k1, (9, c0, cin), jnp.float32) / math.sqrt(fan_in)
        wi_p = jnp.zeros((9, c0, cin_max), jnp.float32).at[:, :, :cin].set(wi)
        w_rows.append(wi_p)
        b = jax.random.normal(k2, (c0,), jnp.float32) * 0.01
        gamma = jnp.ones((c0,), jnp.float32)        # InstanceNorm affine init
        beta = jnp.zeros((c0,), jnp.float32)
        alpha = jnp.full((c0,), 0.25, jnp.float32)  # PReLU default init
        p_rows.append(jnp.stack([b, gamma, beta, alpha], axis=1))   # (C0, 4)
    w_packed = jnp.stack(w_rows, axis=0).astype(jnp.bfloat16)       # (depth,9,C0,Cin_max)
    p_packed = jnp.stack(p_rows, axis=0)                            # (depth, C0, 4)
    return w_packed, p_packed


# ---------------- pure-JAX reference (for correctness check) ----------------
def _ref_forward(x, w_packed, p_packed):
    depth, _, c0, _ = w_packed.shape
    wf = w_packed.astype(jnp.float32)        # same bf16-rounded weights as kernel
    skip = x
    out = x
    for i in range(depth):
        cin = c0 * (i + 1)
        wk = wf[i, :, :, :cin].reshape(3, 3, c0, cin).transpose(2, 3, 0, 1)  # OIHW
        dil = 2 ** i
        y = jax.lax.conv_general_dilated(
            skip, wk, window_strides=(1, 1), padding=((dil, dil), (1, 1)),
            rhs_dilation=(dil, 1), dimension_numbers=("NCHW", "OIHW", "NCHW"),
            precision=jax.lax.Precision.HIGHEST)
        b, g, bt, a = [p_packed[i, :, j].reshape(1, c0, 1, 1) for j in range(4)]
        y = y + b
        mean = y.mean(axis=(2, 3), keepdims=True)
        var = ((y - mean) ** 2).mean(axis=(2, 3), keepdims=True)
        y = (y - mean) / jnp.sqrt(var + EPS)
        y = g * y + bt
        out = jnp.where(y >= 0, y, a * y)
        skip = jnp.concatenate([out, skip], axis=1)
    return out


if __name__ == "__main__":
    dense_channel, depth = 8, 4
    N, H, W = 2, 16, 16

    key = jax.random.PRNGKey(0)
    kx, kp = jax.random.split(key)
    x = jax.random.normal(kx, (N, dense_channel, H, W), jnp.float32)
    w_packed, p_packed = init_dense_block_params(kp, dense_channel, depth)

    out = dense_block_forward(x, w_packed, p_packed)
    out = jax.block_until_ready(out)

    ref = _ref_forward(x, w_packed, p_packed)
    assert out.shape == (N, dense_channel, H, W)
    # bf16 MXU operands vs f32 HIGHEST-precision reference -> loosened tolerance.
    assert jnp.allclose(out, ref, atol=5e-2, rtol=5e-2), "mismatch vs reference"

    print("KERNEL_OK")
</pallas_src>

<mosaic_0001>
module attributes {stable_mosaic.version = 11 : i64} {
  func.func @kernel(%arg0: i32, %arg1: memref<1x8x256xf32, #tpu.memory_space<vmem>>, %arg2: memref<4x9x8x32xbf16, #tpu.memory_space<vmem>>, %arg3: memref<4x8x4xf32, #tpu.memory_space<vmem>>, %arg4: memref<1x8x256xf32, #tpu.memory_space<vmem>>, %arg5: memref<32x512xf32, #tpu.memory_space<vmem>>) attributes {dimension_semantics = [#tpu.dimension_semantics<parallel>], iteration_bounds = array<i64: 2>, scalar_prefetch = 0 : i64, scratch_operands = 1 : i64, tpu.core_type = #tpu.core_type<tc>, window_params = [{transform_indices = @transform_0, window_bounds = array<i64: 1, 8, 256>}, {pipeline_mode = #tpu.pipeline_mode<synchronous>, transform_indices = @transform_1, window_bounds = array<i64: 4, 9, 8, 32>}, {pipeline_mode = #tpu.pipeline_mode<synchronous>, transform_indices = @transform_2, window_bounds = array<i64: 4, 8, 4>}, {transform_indices = @transform_3, window_bounds = array<i64: 1, 8, 256>}]} {
    %cst = arith.constant 0.000000e+00 : f32
    %0 = vector.broadcast %cst : f32 to vector<32x128xf32>
    %c0 = arith.constant 0 : index
    %c0_0 = arith.constant 0 : index
    %1 = vector.load %arg5[%c0, %c0_0] : memref<32x512xf32, #tpu.memory_space<vmem>>, vector<32x128xf32>
    tpu.vector_store %arg5[%c0, %c0_0], %0 {strides = array<i32>} : memref<32x512xf32, #tpu.memory_space<vmem>>, vector<32x128xf32>,
    %cst_1 = arith.constant 0.000000e+00 : f32
    %2 = vector.broadcast %cst_1 : f32 to vector<32x128xf32>
    %c0_2 = arith.constant 0 : index
    %c384 = arith.constant 384 : index
    %3 = vector.load %arg5[%c0_2, %c384] : memref<32x512xf32, #tpu.memory_space<vmem>>, vector<32x128xf32>
    tpu.vector_store %arg5[%c0_2, %c384], %2 {strides = array<i32>} : memref<32x512xf32, #tpu.memory_space<vmem>>, vector<32x128xf32>,
    %c0_3 = arith.constant 0 : index
    %c0_4 = arith.constant 0 : index
    %c0_5 = arith.constant 0 : index
    %4 = vector.load %arg1[%c0_3, %c0_4, %c0_5] : memref<1x8x256xf32, #tpu.memory_space<vmem>>, vector<1x8x256xf32>
    %5 = vector.shape_cast %4 : vector<1x8x256xf32> to vector<8x256xf32>
    %c24 = arith.constant 24 : index
    %c128 = arith.constant 128 : index
    %6 = vector.load %arg5[%c24, %c128] : memref<32x512xf32, #tpu.memory_space<vmem>>, vector<8x256xf32>
    tpu.vector_store %arg5[%c24, %c128], %5 {strides = array<i32>} : memref<32x512xf32, #tpu.memory_space<vmem>>, vector<8x256xf32>,
    %7 = tpu.iota {dimensions = array<i32: 1>} : vector<1x256xi32>
    %c16_i32 = arith.constant 16 : i32
    %c0_i32 = arith.constant 0 : i32
    %8 = arith.cmpi eq, %c16_i32, %c0_i32 : i32
    %c1_i32 = arith.constant 1 : i32
    %9 = arith.select %8, %c1_i32, %c16_i32 : i32
    %10 = vector.broadcast %9 : i32 to vector<1x256xi32>
    %11 = arith.remsi %7, %10 : vector<1x256xi32>
    %c0_i32_6 = arith.constant 0 : i32
    %12 = vector.broadcast %c0_i32_6 : i32 to vector<1x256xi32>
    %13 = arith.cmpi ne, %11, %12 : vector<1x256xi32>
    %c0_i32_7 = arith.constant 0 : i32
    %14 = vector.broadcast %c0_i32_7 : i32 to vector<1x256xi32>
    %15 = arith.cmpi slt, %11, %14 : vector<1x256xi32>
    %c0_i32_8 = arith.constant 0 : i32
    %16 = arith.cmpi slt, %9, %c0_i32_8 : i32
    %17 = vector.broadcast %16 : i1 to vector<1x256xi1>
    %18 = vector.broadcast %17 : vector<1x256xi1> to vector<1x256xi1>
    %19 = arith.xori %15, %18 : vector<1x256xi1>
    %20 = arith.andi %19, %13 : vector<1x256xi1>
    %21 = vector.broadcast %9 : i32 to vector<1x256xi32>
    %22 = arith.addi %11, %21 : vector<1x256xi32>
    %23 = arith.select %20, %22, %11 : vector<1x256xi1>, vector<1x256xi32>
    %c0_i32_9 = arith.constant 0 : i32
    %24 = vector.broadcast %c0_i32_9 : i32 to vector<1x256xi32>
    %25 = arith.cmpi sgt, %23, %24 : vector<1x256xi32>
    %26 = arith.extui %25 : vector<1x256xi1> to vector<1x256xi32>
    %27 = arith.sitofp %26 : vector<1x256xi32> to vector<1x256xf32>
    %c15_i32 = arith.constant 15 : i32
    %28 = vector.broadcast %c15_i32 : i32 to vector<1x256xi32>
    %29 = arith.cmpi slt, %23, %28 : vector<1x256xi32>
    %30 = arith.extui %29 : vector<1x256xi1> to vector<1x256xi32>
    %31 = arith.sitofp %30 : vector<1x256xi32> to vector<1x256xf32>
    %c0_10 = arith.constant 0 : index
    %c0_11 = arith.constant 0 : index
    %c0_12 = arith.constant 0 : index
    %c0_13 = arith.constant 0 : index
    %32 = vector.load %arg2[%c0_10, %c0_11, %c0_12, %c0_13] : memref<4x9x8x32xbf16, #tpu.memory_space<vmem>>, vector<1x9x8x32xbf16>
    %33 = vector.shape_cast %32 : vector<1x9x8x32xbf16> to vector<9x8x32xbf16>
    %cst_14 = arith.constant 0.000000e+00 : f32
    %34 = vector.broadcast %cst_14 : f32 to vector<8x256xf32>
    %cst_15 = arith.constant 0.000000e+00 : f32
    %35 = vector.broadcast %cst_15 : f32 to vector<8x256xf32>
    %cst_16 = arith.constant 0.000000e+00 : f32
    %36 = vector.broadcast %cst_16 : f32 to vector<8x256xf32>
    %c24_17 = arith.constant 24 : index
    %c112 = arith.constant 112 : index
    %37 = vector.load %arg5[%c24_17, %c112] : memref<32x512xf32, #tpu.memory_space<vmem>>, vector<8x256xf32>
    %38 = arith.truncf %37 : vector<8x256xf32> to vector<8x256xbf16>
    %c1_i32_18 = arith.constant 1 : i32
    %39 = tpu.dynamic_rotate %37 by %c1_i32_18 dim 1 : vector<8x256xf32>, i32 -> vector<8x256xf32>
    %40 = arith.truncf %39 : vector<8x256xf32> to vector<8x256xbf16>
    %c255_i32 = arith.constant 255 : i32
    %41 = tpu.dynamic_rotate %37 by %c255_i32 dim 1 : vector<8x256xf32>, i32 -> vector<8x256xf32>
    %42 = arith.truncf %41 : vector<8x256xf32> to vector<8x256xbf16>
    %43 = vector.extract_strided_slice %33 {offsets = [0, 0, 0], sizes = [1, 8, 8], strides = [1, 1, 1]} : vector<9x8x32xbf16> to vector<1x8x8xbf16>
    %44 = vector.shape_cast %43 : vector<1x8x8xbf16> to vector<8x8xbf16>
    %cst_19 = arith.constant dense<0.000000e+00> : vector<8x256xf32>
    %45 = tpu.matmul %44, %40, %cst_19 {dimension_numbers = #tpu.dot_dimension_numbers<[1], [0], [0], [1], [0, 0, 1, 1], [], []>} : vector<8x8xbf16>, vector<8x256xbf16>, vector<8x256xf32> -> vector<8x256xf32>
    %46 = arith.addf %35, %45 : vector<8x256xf32>
    %47 = vector.extract_strided_slice %33 {offsets = [1, 0, 0], sizes = [1, 8, 8], strides = [1, 1, 1]} : vector<9x8x32xbf16> to vector<1x8x8xbf16>
    %48 = vector.shape_cast %47 : vector<1x8x8xbf16> to vector<8x8xbf16>
    %cst_20 = arith.constant dense<0.000000e+00> : vector<8x256xf32>
    %49 = tpu.matmul %48, %38, %cst_20 {dimension_numbers = #tpu.dot_dimension_numbers<[1], [0], [0], [1], [0, 0, 1, 1], [], []>} : vector<8x8xbf16>, vector<8x256xbf16>, vector<8x256xf32> -> vector<8x256xf32>
    %50 = arith.addf %34, %49 : vector<8x256xf32>
    %51 = vector.extract_strided_slice %33 {offsets = [2, 0, 0], sizes = [1, 8, 8], strides = [1, 1, 1]} : vector<9x8x32xbf16> to vector<1x8x8xbf16>
    %52 = vector.shape_cast %51 : vector<1x8x8xbf16> to vector<8x8xbf16>
    %cst_21 = arith.constant dense<0.000000e+00> : vector<8x256xf32>
    %53 = tpu.matmul %52, %42, %cst_21 {dimension_numbers = #tpu.dot_dimension_numbers<[1], [0], [0], [1], [0, 0, 1, 1], [], []>} : vector<8x8xbf16>, vector<8x256xbf16>, vector<8x256xf32> -> vector<8x256xf32>
    %54 = arith.addf %36, %53 : vector<8x256xf32>
    %c24_22 = arith.constant 24 : index
    %c128_23 = arith.constant 128 : index
    %55 = vector.load %arg5[%c24_22, %c128_23] : memref<32x512xf32, #tpu.memory_space<vmem>>, vector<8x256xf32>
    %56 = arith.truncf %55 : vector<8x256xf32> to vector<8x256xbf16>
    %c1_i32_24 = arith.constant 1 : i32
    %57 = tpu.dynamic_rotate %55 by %c1_i32_24 dim 1 : vector<8x256xf32>, i32 -> vector<8x256xf32>
    %58 = arith.truncf %57 : vector<8x256xf32> to vector<8x256xbf16>
    %c255_i32_25 = arith.constant 255 : i32
    %59 = tpu.dynamic_rotate %55 by %c255_i32_25 dim 1 : vector<8x256xf32>, i32 -> vector<8x256xf32>
    %60 = arith.truncf %59 : vector<8x256xf32> to vector<8x256xbf16>
    %61 = vector.extract_strided_slice %33 {offsets = [3, 0, 0], sizes = [1, 8, 8], strides = [1, 1, 1]} : vector<9x8x32xbf16> to vector<1x8x8xbf16>
    %62 = vector.shape_cast %61 : vector<1x8x8xbf16> to vector<8x8xbf16>
    %cst_26 = arith.constant dense<0.000000e+00> : vector<8x256xf32>
    %63 = tpu.matmul %62, %58, %cst_26 {dimension_numbers = #tpu.dot_dimension_numbers<[1], [0], [0], [1], [0, 0, 1, 1], [], []>} : vector<8x8xbf16>, vector<8x256xbf16>, vector<8x256xf32> -> vector<8x256xf32>
    %64 = arith.addf %46, %63 : vector<8x256xf32>
    %65 = vector.extract_strided_slice %33 {offsets = [4, 0, 0], sizes = [1, 8, 8], strides = [1, 1, 1]} : vector<9x8x32xbf16> to vector<1x8x8xbf16>
    %66 = vector.shape_cast %65 : vector<1x8x8xbf16> to vector<8x8xbf16>
    %cst_27 = arith.constant dense<0.000000e+00> : vector<8x256xf32>
    %67 = tpu.matmul %66, %56, %cst_27 {dimension_numbers = #tpu.dot_dimension_numbers<[1], [0], [0], [1], [0, 0, 1, 1], [], []>} : vector<8x8xbf16>, vector<8x256xbf16>, vector<8x256xf32> -> vector<8x256xf32>
    %68 = arith.addf %50, %67 : vector<8x256xf32>
    %69 = vector.extract_strided_slice %33 {offsets = [5, 0, 0], sizes = [1, 8, 8], strides = [1, 1, 1]} : vector<9x8x32xbf16> to vector<1x8x8xbf16>
    %70 = vector.shape_cast %69 : vector<1x8x8xbf16> to vector<8x8xbf16>
    %cst_28 = arith.constant dense<0.000000e+00> : vector<8x256xf32>
    %71 = tpu.matmul %70, %60, %cst_28 {dimension_numbers = #tpu.dot_dimension_numbers<[1], [0], [0], [1], [0, 0, 1, 1], [], []>} : vector<8x8xbf16>, vector<8x256xbf16>, vector<8x256xf32> -> vector<8x256xf32>
    %72 = arith.addf %54, %71 : vector<8x256xf32>
    %c24_29 = arith.constant 24 : index
    %c144 = arith.constant 144 : index
    %73 = vector.load %arg5[%c24_29, %c144] : memref<32x512xf32, #tpu.memory_space<vmem>>, vector<8x256xf32>
    %74 = arith.truncf %73 : vector<8x256xf32> to vector<8x256xbf16>
    %c1_i32_30 = arith.constant 1 : i32
    %75 = tpu.dynamic_rotate %73 by %c1_i32_30 dim 1 : vector<8x256xf32>, i32 -> vector<8x256xf32>
    %76 = arith.truncf %75 : vector<8x256xf32> to vector<8x256xbf16>
    %c255_i32_31 = arith.constant 255 : i32
    %77 = tpu.dynamic_rotate %73 by %c255_i32_31 dim 1 : vector<8x256xf32>, i32 -> vector<8x256xf32>
    %78 = arith.truncf %77 : vector<8x256xf32> to vector<8x256xbf16>
    %79 = vector.extract_strided_slice %33 {offsets = [6, 0, 0], sizes = [1, 8, 8], strides = [1, 1, 1]} : vector<9x8x32xbf16> to vector<1x8x8xbf16>
    %80 = vector.shape_cast %79 : vector<1x8x8xbf16> to vector<8x8xbf16>
    %cst_32 = arith.constant dense<0.000000e+00> : vector<8x256xf32>
    %81 = tpu.matmul %80, %76, %cst_32 {dimension_numbers = #tpu.dot_dimension_numbers<[1], [0], [0], [1], [0, 0, 1, 1], [], []>} : vector<8x8xbf16>, vector<8x256xbf16>, vector<8x256xf32> -> vector<8x256xf32>
    %82 = arith.addf %64, %81 : vector<8x256xf32>
    %83 = vector.extract_strided_slice %33 {offsets = [7, 0, 0], sizes = [1, 8, 8], strides = [1, 1, 1]} : vector<9x8x32xbf16> to vector<1x8x8xbf16>
    %84 = vector.shape_cast %83 : vector<1x8x8xbf16> to vector<8x8xbf16>
    %cst_33 = arith.constant dense<0.000000e+00> : vector<8x256xf32>
    %85 = tpu.matmul %84, %74, %cst_33 {dimension_numbers = #tpu.dot_dimension_numbers<[1], [0], [0], [1], [0, 0, 1, 1], [], []>} : vector<8x8xbf16>, vector<8x256xbf16>, vector<8x256xf32> -> vector<8x256xf32>
    %86 = arith.addf %68, %85 : vector<8x256xf32>
    %87 = vector.extract_strided_slice %33 {offsets = [8, 0, 0], sizes = [1, 8, 8], strides = [1, 1, 1]} : vector<9x8x32xbf16> to vector<1x8x8xbf16>
    %88 = vector.shape_cast %87 : vector<1x8x8xbf16> to vector<8x8xbf16>
    %cst_34 = arith.constant dense<0.000000e+00> : vector<8x256xf32>
    %89 = tpu.matmul %88, %78, %cst_34 {dimension_numbers = #tpu.dot_dimension_numbers<[1], [0], [0], [1], [0, 0, 1, 1], [], []>} : vector<8x8xbf16>, vector<8x256xbf16>, vector<8x256xf32> -> vector<8x256xf32>
    %90 = arith.addf %72, %89 : vector<8x256xf32>
    %c0_35 = arith.constant 0 : index
    %c0_36 = arith.constant 0 : index
    %c0_37 = arith.constant 0 : index
    %91 = vector.load %arg3[%c0_35, %c0_36, %c0_37] : memref<4x8x4xf32, #tpu.memory_space<vmem>>, vector<1x8x4xf32>
    %92 = vector.shape_cast %91 : vector<1x8x4xf32> to vector<8x4xf32>
    %93 = vector.broadcast %27 : vector<1x256xf32> to vector<8x256xf32>
    %94 = arith.mulf %82, %93 : vector<8x256xf32>
    %95 = arith.addf %86, %94 : vector<8x256xf32>
    %96 = vector.broadcast %31 : vector<1x256xf32> to vector<8x256xf32>
    %97 = arith.mulf %90, %96 : vector<8x256xf32>
    %98 = arith.addf %95, %97 : vector<8x256xf32>
    %99 = vector.extract_strided_slice %92 {offsets = [0, 0], sizes = [8, 1], strides = [1, 1]} : vector<8x4xf32> to vector<8x1xf32>
    %100 = vector.broadcast %99 : vector<8x1xf32> to vector<8x256xf32>
    %101 = arith.addf %98, %100 : vector<8x256xf32>
    %cst_38 = arith.constant dense<0.000000e+00> : vector<8xf32>
    %102 = vector.multi_reduction <add>, %101, %cst_38 [1] : vector<8x256xf32> to vector<8xf32>
    %103 = vector.shape_cast %102 : vector<8xf32> to vector<8x1xf32>
    %cst_39 = arith.constant 2.560000e+02 : f32
    %104 = vector.broadcast %cst_39 : f32 to vector<8x1xf32>
    %105 = arith.divf %103, %104 : vector<8x1xf32>
    %106 = vector.broadcast %105 : vector<8x1xf32> to vector<8x256xf32>
    %107 = arith.subf %101, %106 : vector<8x256xf32>
    %108 = arith.mulf %107, %107 : vector<8x256xf32>
    %cst_40 = arith.constant dense<0.000000e+00> : vector<8xf32>
    %109 = vector.multi_reduction <add>, %108, %cst_40 [1] : vector<8x256xf32> to vector<8xf32>
    %110 = vector.shape_cast %109 : vector<8xf32> to vector<8x1xf32>
    %cst_41 = arith.constant 2.560000e+02 : f32
    %111 = vector.broadcast %cst_41 : f32 to vector<8x1xf32>
    %112 = arith.divf %110, %111 : vector<8x1xf32>
    %113 = vector.extract_strided_slice %92 {offsets = [0, 1], sizes = [8, 1], strides = [1, 1]} : vector<8x4xf32> to vector<8x1xf32>
    %cst_42 = arith.constant 9.99999974E-6 : f32
    %114 = vector.broadcast %cst_42 : f32 to vector<8x1xf32>
    %115 = arith.addf %112, %114 : vector<8x1xf32>
    %116 = math.rsqrt %115 : vector<8x1xf32>
    %117 = arith.mulf %113, %116 : vector<8x1xf32>
    %118 = vector.broadcast %117 : vector<8x1xf32> to vector<8x256xf32>
    %119 = arith.mulf %107, %118 : vector<8x256xf32>
    %120 = vector.extract_strided_slice %92 {offsets = [0, 2], sizes = [8, 1], strides = [1, 1]} : vector<8x4xf32> to vector<8x1xf32>
    %121 = vector.broadcast %120 : vector<8x1xf32> to vector<8x256xf32>
    %122 = arith.addf %119, %121 : vector<8x256xf32>
    %cst_43 = arith.constant 0.000000e+00 : f32
    %123 = vector.broadcast %cst_43 : f32 to vector<8x256xf32>
    %124 = arith.cmpf oge, %122, %123 : vector<8x256xf32>
    %125 = vector.extract_strided_slice %92 {offsets = [0, 3], sizes = [8, 1], strides = [1, 1]} : vector<8x4xf32> to vector<8x1xf32>
    %126 = vector.broadcast %125 : vector<8x1xf32> to vector<8x256xf32>
    %127 = arith.mulf %126, %122 : vector<8x256xf32>
    %128 = arith.select %124, %122, %127 : vector<8x256xi1>, vector<8x256xf32>
    %c16 = arith.constant 16 : index
    %c128_44 = arith.constant 128 : index
    %129 = vector.load %arg5[%c16, %c128_44] : memref<32x512xf32, #tpu.memory_space<vmem>>, vector<8x256xf32>
    tpu.vector_store %arg5[%c16, %c128_44], %128 {strides = array<i32>} : memref<32x512xf32, #tpu.memory_space<vmem>>, vector<8x256xf32>,
    %c1 = arith.constant 1 : index
    %c0_45 = arith.constant 0 : index
    %c0_46 = arith.constant 0 : index
    %c0_47 = arith.constant 0 : index
    %130 = vector.load %arg2[%c1, %c0_45, %c0_46, %c0_47] : memref<4x9x8x32xbf16, #tpu.memory_space<vmem>>, vector<1x9x8x32xbf16>
    %131 = vector.shape_cast %130 : vector<1x9x8x32xbf16> to vector<9x8x32xbf16>
    %cst_48 = arith.constant 0.000000e+00 : f32
    %132 = vector.broadcast %cst_48 : f32 to vector<8x256xf32>
    %cst_49 = arith.constant 0.000000e+00 : f32
    %133 = vector.broadcast %cst_49 : f32 to vector<8x256xf32>
    %cst_50 = arith.constant 0.000000e+00 : f32
    %134 = vector.broadcast %cst_50 : f32 to vector<8x256xf32>
    %c16_51 = arith.constant 16 : index
    %c96 = arith.constant 96 : index
    %135 = vector.load %arg5[%c16_51, %c96] : memref<32x512xf32, #tpu.memory_space<vmem>>, vector<16x256xf32>
    %136 = arith.truncf %135 : vector<16x256xf32> to vector<16x256xbf16>
    %c1_i32_52 = arith.constant 1 : i32
    %137 = tpu.dynamic_rotate %135 by %c1_i32_52 dim 1 : vector<16x256xf32>, i32 -> vector<16x256xf32>
    %138 = arith.truncf %137 : vector<16x256xf32> to vector<16x256xbf16>
    %c255_i32_53 = arith.constant 255 : i32
    %139 = tpu.dynamic_rotate %135 by %c255_i32_53 dim 1 : vector<16x256xf32>, i32 -> vector<16x256xf32>
    %140 = arith.truncf %139 : vector<16x256xf32> to vector<16x256xbf16>
    %141 = vector.extract_strided_slice %131 {offsets = [0, 0, 0], sizes = [1, 8, 16], strides = [1, 1, 1]} : vector<9x8x32xbf16> to vector<1x8x16xbf16>
    %142 = vector.shape_cast %141 : vector<1x8x16xbf16> to vector<8x16xbf16>
    %cst_54 = arith.constant dense<0.000000e+00> : vector<8x256xf32>
    %143 = tpu.matmul %142, %138, %cst_54 {dimension_numbers = #tpu.dot_dimension_numbers<[1], [0], [0], [1], [0, 0, 1, 1], [], []>} : vector<8x16xbf16>, vector<16x256xbf16>, vector<8x256xf32> -> vector<8x256xf32>
    %144 = arith.addf %133, %143 : vector<8x256xf32>
    %145 = vector.extract_strided_slice %131 {offsets = [1, 0, 0], sizes = [1, 8, 16], strides = [1, 1, 1]} : vector<9x8x32xbf16> to vector<1x8x16xbf16>
    %146 = vector.shape_cast %145 : vector<1x8x16xbf16> to vector<8x16xbf16>
    %cst_55 = arith.constant dense<0.000000e+00> : vector<8x256xf32>
    %147 = tpu.matmul %146, %136, %cst_55 {dimension_numbers = #tpu.dot_dimension_numbers<[1], [0], [0], [1], [0, 0, 1, 1], [], []>} : vector<8x16xbf16>, vector<16x256xbf16>, vector<8x256xf32> -> vector<8x256xf32>
    %148 = arith.addf %132, %147 : vector<8x256xf32>
    %149 = vector.extract_strided_slice %131 {offsets = [2, 0, 0], sizes = [1, 8, 16], strides = [1, 1, 1]} : vector<9x8x32xbf16> to vector<1x8x16xbf16>
    %150 = vector.shape_cast %149 : vector<1x8x16xbf16> to vector<8x16xbf16>
    %cst_56 = arith.constant dense<0.000000e+00> : vector<8x256xf32>
    %151 = tpu.matmul %150, %140, %cst_56 {dimension_numbers = #tpu.dot_dimension_numbers<[1], [0], [0], [1], [0, 0, 1, 1], [], []>} : vector<8x16xbf16>, vector<16x256xbf16>, vector<8x256xf32> -> vector<8x256xf32>
    %152 = arith.addf %134, %151 : vector<8x256xf32>
    %c16_57 = arith.constant 16 : index
    %c128_58 = arith.constant 128 : index
    %153 = vector.load %arg5[%c16_57, %c128_58] : memref<32x512xf32, #tpu.memory_space<vmem>>, vector<16x256xf32>
    %154 = arith.truncf %153 : vector<16x256xf32> to vector<16x256xbf16>
    %c1_i32_59 = arith.constant 1 : i32
    %155 = tpu.dynamic_rotate %153 by %c1_i32_59 dim 1 : vector<16x256xf32>, i32 -> vector<16x256xf32>
    %156 = arith.truncf %155 : vector<16x256xf32> to vector<16x256xbf16>
    %c255_i32_60 = arith.constant 255 : i32
    %157 = tpu.dynamic_rotate %153 by %c255_i32_60 dim 1 : vector<16x256xf32>, i32 -> vector<16x256xf32>
    %158 = arith.truncf %157 : vector<16x256xf32> to vector<16x256xbf16>
    %159 = vector.extract_strided_slice %131 {offsets = [3, 0, 0], sizes = [1, 8, 16], strides = [1, 1, 1]} : vector<9x8x32xbf16> to vector<1x8x16xbf16>
    %160 = vector.shape_cast %159 : vector<1x8x16xbf16> to vector<8x16xbf16>
    %cst_61 = arith.constant dense<0.000000e+00> : vector<8x256xf32>
    %161 = tpu.matmul %160, %156, %cst_61 {dimension_numbers = #tpu.dot_dimension_numbers<[1], [0], [0], [1], [0, 0, 1, 1], [], []>} : vector<8x16xbf16>, vector<16x256xbf16>, vector<8x256xf32> -> vector<8x256xf32>
    %162 = arith.addf %144, %161 : vector<8x256xf32>
    %163 = vector.extract_strided_slice %131 {offsets = [4, 0, 0], sizes = [1, 8, 16], strides = [1, 1, 1]} : vector<9x8x32xbf16> to vector<1x8x16xbf16>
    %164 = vector.shape_cast %163 : vector<1x8x16xbf16> to vector<8x16xbf16>
    %cst_62 = arith.constant dense<0.000000e+00> : vector<8x256xf32>
    %165 = tpu.matmul %164, %154, %cst_62 {dimension_numbers = #tpu.dot_dimension_numbers<[1], [0], [0], [1], [0, 0, 1, 1], [], []>} : vector<8x16xbf16>, vector<16x256xbf16>, vector<8x256xf32> -> vector<8x256xf32>
    %166 = arith.addf %148, %165 : vector<8x256xf32>
    %167 = vector.extract_strided_slice %131 {offsets = [5, 0, 0], sizes = [1, 8, 16], strides = [1, 1, 1]} : vector<9x8x32xbf16> to vector<1x8x16xbf16>
    %168 = vector.shape_cast %167 : vector<1x8x16xbf16> to vector<8x16xbf16>
    %cst_63 = arith.constant dense<0.000000e+00> : vector<8x256xf32>
    %169 = tpu.matmul %168, %158, %cst_63 {dimension_numbers = #tpu.dot_dimension_numbers<[1], [0], [0], [1], [0, 0, 1, 1], [], []>} : vector<8x16xbf16>, vector<16x256xbf16>, vector<8x256xf32> -> vector<8x256xf32>
    %170 = arith.addf %152, %169 : vector<8x256xf32>
    %c16_64 = arith.constant 16 : index
    %c160 = arith.constant 160 : index
    %171 = vector.load %arg5[%c16_64, %c160] : memref<32x512xf32, #tpu.memory_space<vmem>>, vector<16x256xf32>
    %172 = arith.truncf %171 : vector<16x256xf32> to vector<16x256xbf16>
    %c1_i32_65 = arith.constant 1 : i32
    %173 = tpu.dynamic_rotate %171 by %c1_i32_65 dim 1 : vector<16x256xf32>, i32 -> vector<16x256xf32>
    %174 = arith.truncf %173 : vector<16x256xf32> to vector<16x256xbf16>
    %c255_i32_66 = arith.constant 255 : i32
    %175 = tpu.dynamic_rotate %171 by %c255_i32_66 dim 1 : vector<16x256xf32>, i32 -> vector<16x256xf32>
    %176 = arith.truncf %175 : vector<16x256xf32> to vector<16x256xbf16>
    %177 = vector.extract_strided_slice %131 {offsets = [6, 0, 0], sizes = [1, 8, 16], strides = [1, 1, 1]} : vector<9x8x32xbf16> to vector<1x8x16xbf16>
    %178 = vector.shape_cast %177 : vector<1x8x16xbf16> to vector<8x16xbf16>
    %cst_67 = arith.constant dense<0.000000e+00> : vector<8x256xf32>
    %179 = tpu.matmul %178, %174, %cst_67 {dimension_numbers = #tpu.dot_dimension_numbers<[1], [0], [0], [1], [0, 0, 1, 1], [], []>} : vector<8x16xbf16>, vector<16x256xbf16>, vector<8x256xf32> -> vector<8x256xf32>
    %180 = arith.addf %162, %179 : vector<8x256xf32>
    %181 = vector.extract_strided_slice %131 {offsets = [7, 0, 0], sizes = [1, 8, 16], strides = [1, 1, 1]} : vector<9x8x32xbf16> to vector<1x8x16xbf16>
    %182 = vector.shape_cast %181 : vector<1x8x16xbf16> to vector<8x16xbf16>
    %cst_68 = arith.constant dense<0.000000e+00> : vector<8x256xf32>
    %183 = tpu.matmul %182, %172, %cst_68 {dimension_numbers = #tpu.dot_dimension_numbers<[1], [0], [0], [1], [0, 0, 1, 1], [], []>} : vector<8x16xbf16>, vector<16x256xbf16>, vector<8x256xf32> -> vector<8x256xf32>
    %184 = arith.addf %166, %183 : vector<8x256xf32>
    %185 = vector.extract_strided_slice %131 {offsets = [8, 0, 0], sizes = [1, 8, 16], strides = [1, 1, 1]} : vector<9x8x32xbf16> to vector<1x8x16xbf16>
    %186 = vector.shape_cast %185 : vector<1x8x16xbf16> to vector<8x16xbf16>
    %cst_69 = arith.constant dense<0.000000e+00> : vector<8x256xf32>
    %187 = tpu.matmul %186, %176, %cst_69 {dimension_numbers = #tpu.dot_dimension_numbers<[1], [0], [0], [1], [0, 0, 1, 1], [], []>} : vector<8x16xbf16>, vector<16x256xbf16>, vector<8x256xf32> -> vector<8x256xf32>
    %188 = arith.addf %170, %187 : vector<8x256xf32>
    %c1_70 = arith.constant 1 : index
    %c0_71 = arith.constant 0 : index
    %c0_72 = arith.constant 0 : index
    %189 = vector.load %arg3[%c1_70, %c0_71, %c0_72] : memref<4x8x4xf32, #tpu.memory_space<vmem>>, vector<1x8x4xf32>
    %190 = vector.shape_cast %189 : vector<1x8x4xf32> to vector<8x4xf32>
    %191 = vector.broadcast %27 : vector<1x256xf32> to vector<8x256xf32>
    %192 = arith.mulf %180, %191 : vector<8x256xf32>
    %193 = arith.addf %184, %192 : vector<8x256xf32>
    %194 = vector.broadcast %31 : vector<1x256xf32> to vector<8x256xf32>
    %195 = arith.mulf %188, %194 : vector<8x256xf32>
    %196 = arith.addf %193, %195 : vector<8x256xf32>
    %197 = vector.extract_strided_slice %190 {offsets = [0, 0], sizes = [8, 1], strides = [1, 1]} : vector<8x4xf32> to vector<8x1xf32>
    %198 = vector.broadcast %197 : vector<8x1xf32> to vector<8x256xf32>
    %199 = arith.addf %196, %198 : vector<8x256xf32>
    %cst_73 = arith.constant dense<0.000000e+00> : vector<8xf32>
    %200 = vector.multi_reduction <add>, %199, %cst_73 [1] : vector<8x256xf32> to vector<8xf32>
    %201 = vector.shape_cast %200 : vector<8xf32> to vector<8x1xf32>
    %cst_74 = arith.constant 2.560000e+02 : f32
    %202 = vector.broadcast %cst_74 : f32 to vector<8x1xf32>
    %203 = arith.divf %201, %202 : vector<8x1xf32>
    %204 = vector.broadcast %203 : vector<8x1xf32> to vector<8x256xf32>
    %205 = arith.subf %199, %204 : vector<8x256xf32>
    %206 = arith.mulf %205, %205 : vector<8x256xf32>
    %cst_75 = arith.constant dense<0.000000e+00> : vector<8xf32>
    %207 = vector.multi_reduction <add>, %206, %cst_75 [1] : vector<8x256xf32> to vector<8xf32>
    %208 = vector.shape_cast %207 : vector<8xf32> to vector<8x1xf32>
    %cst_76 = arith.constant 2.560000e+02 : f32
    %209 = vector.broadcast %cst_76 : f32 to vector<8x1xf32>
    %210 = arith.divf %208, %209 : vector<8x1xf32>
    %211 = vector.extract_strided_slice %190 {offsets = [0, 1], sizes = [8, 1], strides = [1, 1]} : vector<8x4xf32> to vector<8x1xf32>
    %cst_77 = arith.constant 9.99999974E-6 : f32
    %212 = vector.broadcast %cst_77 : f32 to vector<8x1xf32>
    %213 = arith.addf %210, %212 : vector<8x1xf32>
    %214 = math.rsqrt %213 : vector<8x1xf32>
    %215 = arith.mulf %211, %214 : vector<8x1xf32>
    %216 = vector.broadcast %215 : vector<8x1xf32> to vector<8x256xf32>
    %217 = arith.mulf %205, %216 : vector<8x256xf32>
    %218 = vector.extract_strided_slice %190 {offsets = [0, 2], sizes = [8, 1], strides = [1, 1]} : vector<8x4xf32> to vector<8x1xf32>
    %219 = vector.broadcast %218 : vector<8x1xf32> to vector<8x256xf32>
    %220 = arith.addf %217, %219 : vector<8x256xf32>
    %cst_78 = arith.constant 0.000000e+00 : f32
    %221 = vector.broadcast %cst_78 : f32 to vector<8x256xf32>
    %222 = arith.cmpf oge, %220, %221 : vector<8x256xf32>
    %223 = vector.extract_strided_slice %190 {offsets = [0, 3], sizes = [8, 1], strides = [1, 1]} : vector<8x4xf32> to vector<8x1xf32>
    %224 = vector.broadcast %223 : vector<8x1xf32> to vector<8x256xf32>
    %225 = arith.mulf %224, %220 : vector<8x256xf32>
    %226 = arith.select %222, %220, %225 : vector<8x256xi1>, vector<8x256xf32>
    %c8 = arith.constant 8 : index
    %c128_79 = arith.constant 128 : index
    %227 = vector.load %arg5[%c8, %c128_79] : memref<32x512xf32, #tpu.memory_space<vmem>>, vector<8x256xf32>
    tpu.vector_store %arg5[%c8, %c128_79], %226 {strides = array<i32>} : memref<32x512xf32, #tpu.memory_space<vmem>>, vector<8x256xf32>,
    %c2 = arith.constant 2 : index
    %c0_80 = arith.constant 0 : index
    %c0_81 = arith.constant 0 : index
    %c0_82 = arith.constant 0 : index
    %228 = vector.load %arg2[%c2, %c0_80, %c0_81, %c0_82] : memref<4x9x8x32xbf16, #tpu.memory_space<vmem>>, vector<1x9x8x32xbf16>
    %229 = vector.shape_cast %228 : vector<1x9x8x32xbf16> to vector<9x8x32xbf16>
    %cst_83 = arith.constant 0.000000e+00 : f32
    %230 = vector.broadcast %cst_83 : f32 to vector<8x256xf32>
    %cst_84 = arith.constant 0.000000e+00 : f32
    %231 = vector.broadcast %cst_84 : f32 to vector<8x256xf32>
    %cst_85 = arith.constant 0.000000e+00 : f32
    %232 = vector.broadcast %cst_85 : f32 to vector<8x256xf32>
    %c8_86 = arith.constant 8 : index
    %c64 = arith.constant 64 : index
    %233 = vector.load %arg5[%c8_86, %c64] : memref<32x512xf32, #tpu.memory_space<vmem>>, vector<24x256xf32>
    %234 = arith.truncf %233 : vector<24x256xf32> to vector<24x256xbf16>
    %c1_i32_87 = arith.constant 1 : i32
    %235 = tpu.dynamic_rotate %233 by %c1_i32_87 dim 1 : vector<24x256xf32>, i32 -> vector<24x256xf32>
    %236 = arith.truncf %235 : vector<24x256xf32> to vector<24x256xbf16>
    %c255_i32_88 = arith.constant 255 : i32
    %237 = tpu.dynamic_rotate %233 by %c255_i32_88 dim 1 : vector<24x256xf32>, i32 -> vector<24x256xf32>
    %238 = arith.truncf %237 : vector<24x256xf32> to vector<24x256xbf16>
    %239 = vector.extract_strided_slice %229 {offsets = [0, 0, 0], sizes = [1, 8, 24], strides = [1, 1, 1]} : vector<9x8x32xbf16> to vector<1x8x24xbf16>
    %240 = vector.shape_cast %239 : vector<1x8x24xbf16> to vector<8x24xbf16>
    %cst_89 = arith.constant dense<0.000000e+00> : vector<8x256xf32>
    %241 = tpu.matmul %240, %236, %cst_89 {dimension_numbers = #tpu.dot_dimension_numbers<[1], [0], [0], [1], [0, 0, 1, 1], [], []>} : vector<8x24xbf16>, vector<24x256xbf16>, vector<8x256xf32> -> vector<8x256xf32>
    %242 = arith.addf %231, %241 : vector<8x256xf32>
    %243 = vector.extract_strided_slice %229 {offsets = [1, 0, 0], sizes = [1, 8, 24], strides = [1, 1, 1]} : vector<9x8x32xbf16> to vector<1x8x24xbf16>
    %244 = vector.shape_cast %243 : vector<1x8x24xbf16> to vector<8x24xbf16>
    %cst_90 = arith.constant dense<0.000000e+00> : vector<8x256xf32>
    %245 = tpu.matmul %244, %234, %cst_90 {dimension_numbers = #tpu.dot_dimension_numbers<[1], [0], [0], [1], [0, 0, 1, 1], [], []>} : vector<8x24xbf16>, vector<24x256xbf16>, vector<8x256xf32> -> vector<8x256xf32>
    %246 = arith.addf %230, %245 : vector<8x256xf32>
    %247 = vector.extract_strided_slice %229 {offsets = [2, 0, 0], sizes = [1, 8, 24], strides = [1, 1, 1]} : vector<9x8x32xbf16> to vector<1x8x24xbf16>
    %248 = vector.shape_cast %247 : vector<1x8x24xbf16> to vector<8x24xbf16>
    %cst_91 = arith.constant dense<0.000000e+00> : vector<8x256xf32>
    %249 = tpu.matmul %248, %238, %cst_91 {dimension_numbers = #tpu.dot_dimension_numbers<[1], [0], [0], [1], [0, 0, 1, 1], [], []>} : vector<8x24xbf16>, vector<24x256xbf16>, vector<8x256xf32> -> vector<8x256xf32>
    %250 = arith.addf %232, %249 : vector<8x256xf32>
    %c8_92 = arith.constant 8 : index
    %c128_93 = arith.constant 128 : index
    %251 = vector.load %arg5[%c8_92, %c128_93] : memref<32x512xf32, #tpu.memory_space<vmem>>, vector<24x256xf32>
    %252 = arith.truncf %251 : vector<24x256xf32> to vector<24x256xbf16>
    %c1_i32_94 = arith.constant 1 : i32
    %253 = tpu.dynamic_rotate %251 by %c1_i32_94 dim 1 : vector<24x256xf32>, i32 -> vector<24x256xf32>
    %254 = arith.truncf %253 : vector<24x256xf32> to vector<24x256xbf16>
    %c255_i32_95 = arith.constant 255 : i32
    %255 = tpu.dynamic_rotate %251 by %c255_i32_95 dim 1 : vector<24x256xf32>, i32 -> vector<24x256xf32>
    %256 = arith.truncf %255 : vector<24x256xf32> to vector<24x256xbf16>
    %257 = vector.extract_strided_slice %229 {offsets = [3, 0, 0], sizes = [1, 8, 24], strides = [1, 1, 1]} : vector<9x8x32xbf16> to vector<1x8x24xbf16>
    %258 = vector.shape_cast %257 : vector<1x8x24xbf16> to vector<8x24xbf16>
    %cst_96 = arith.constant dense<0.000000e+00> : vector<8x256xf32>
    %259 = tpu.matmul %258, %254, %cst_96 {dimension_numbers = #tpu.dot_dimension_numbers<[1], [0], [0], [1], [0, 0, 1, 1], [], []>} : vector<8x24xbf16>, vector<24x256xbf16>, vector<8x256xf32> -> vector<8x256xf32>
    %260 = arith.addf %242, %259 : vector<8x256xf32>
    %261 = vector.extract_strided_slice %229 {offsets = [4, 0, 0], sizes = [1, 8, 24], strides = [1, 1, 1]} : vector<9x8x32xbf16> to vector<1x8x24xbf16>
    %262 = vector.shape_cast %261 : vector<1x8x24xbf16> to vector<8x24xbf16>
    %cst_97 = arith.constant dense<0.000000e+00> : vector<8x256xf32>
    %263 = tpu.matmul %262, %252, %cst_97 {dimension_numbers = #tpu.dot_dimension_numbers<[1], [0], [0], [1], [0, 0, 1, 1], [], []>} : vector<8x24xbf16>, vector<24x256xbf16>, vector<8x256xf32> -> vector<8x256xf32>
    %264 = arith.addf %246, %263 : vector<8x256xf32>
    %265 = vector.extract_strided_slice %229 {offsets = [5, 0, 0], sizes = [1, 8, 24], strides = [1, 1, 1]} : vector<9x8x32xbf16> to vector<1x8x24xbf16>
    %266 = vector.shape_cast %265 : vector<1x8x24xbf16> to vector<8x24xbf16>
    %cst_98 = arith.constant dense<0.000000e+00> : vector<8x256xf32>
    %267 = tpu.matmul %266, %256, %cst_98 {dimension_numbers = #tpu.dot_dimension_numbers<[1], [0], [0], [1], [0, 0, 1, 1], [], []>} : vector<8x24xbf16>, vector<24x256xbf16>, vector<8x256xf32> -> vector<8x256xf32>
    %268 = arith.addf %250, %267 : vector<8x256xf32>
    %c8_99 = arith.constant 8 : index
    %c192 = arith.constant 192 : index
    %269 = vector.load %arg5[%c8_99, %c192] : memref<32x512xf32, #tpu.memory_space<vmem>>, vector<24x256xf32>
    %270 = arith.truncf %269 : vector<24x256xf32> to vector<24x256xbf16>
    %c1_i32_100 = arith.constant 1 : i32
    %271 = tpu.dynamic_rotate %269 by %c1_i32_100 dim 1 : vector<24x256xf32>, i32 -> vector<24x256xf32>
    %272 = arith.truncf %271 : vector<24x256xf32> to vector<24x256xbf16>
    %c255_i32_101 = arith.constant 255 : i32
    %273 = tpu.dynamic_rotate %269 by %c255_i32_101 dim 1 : vector<24x256xf32>, i32 -> vector<24x256xf32>
    %274 = arith.truncf %273 : vector<24x256xf32> to vector<24x256xbf16>
    %275 = vector.extract_strided_slice %229 {offsets = [6, 0, 0], sizes = [1, 8, 24], strides = [1, 1, 1]} : vector<9x8x32xbf16> to vector<1x8x24xbf16>
    %276 = vector.shape_cast %275 : vector<1x8x24xbf16> to vector<8x24xbf16>
    %cst_102 = arith.constant dense<0.000000e+00> : vector<8x256xf32>
    %277 = tpu.matmul %276, %272, %cst_102 {dimension_numbers = #tpu.dot_dimension_numbers<[1], [0], [0], [1], [0, 0, 1, 1], [], []>} : vector<8x24xbf16>, vector<24x256xbf16>, vector<8x256xf32> -> vector<8x256xf32>
    %278 = arith.addf %260, %277 : vector<8x256xf32>
    %279 = vector.extract_strided_slice %229 {offsets = [7, 0, 0], sizes = [1, 8, 24], strides = [1, 1, 1]} : vector<9x8x32xbf16> to vector<1x8x24xbf16>
    %280 = vector.shape_cast %279 : vector<1x8x24xbf16> to vector<8x24xbf16>
    %cst_103 = arith.constant dense<0.000000e+00> : vector<8x256xf32>
    %281 = tpu.matmul %280, %270, %cst_103 {dimension_numbers = #tpu.dot_dimension_numbers<[1], [0], [0], [1], [0, 0, 1, 1], [], []>} : vector<8x24xbf16>, vector<24x256xbf16>, vector<8x256xf32> -> vector<8x256xf32>
    %282 = arith.addf %264, %281 : vector<8x256xf32>
    %283 = vector.extract_strided_slice %229 {offsets = [8, 0, 0], sizes = [1, 8, 24], strides = [1, 1, 1]} : vector<9x8x32xbf16> to vector<1x8x24xbf16>
    %284 = vector.shape_cast %283 : vector<1x8x24xbf16> to vector<8x24xbf16>
    %cst_104 = arith.constant dense<0.000000e+00> : vector<8x256xf32>
    %285 = tpu.matmul %284, %274, %cst_104 {dimension_numbers = #tpu.dot_dimension_numbers<[1], [0], [0], [1], [0, 0, 1, 1], [], []>} : vector<8x24xbf16>, vector<24x256xbf16>, vector<8x256xf32> -> vector<8x256xf32>
    %286 = arith.addf %268, %285 : vector<8x256xf32>
    %c2_105 = arith.constant 2 : index
    %c0_106 = arith.constant 0 : index
    %c0_107 = arith.constant 0 : index
    %287 = vector.load %arg3[%c2_105, %c0_106, %c0_107] : memref<4x8x4xf32, #tpu.memory_space<vmem>>, vector<1x8x4xf32>
    %288 = vector.shape_cast %287 : vector<1x8x4xf32> to vector<8x4xf32>
    %289 = vector.broadcast %27 : vector<1x256xf32> to vector<8x256xf32>
    %290 = arith.mulf %278, %289 : vector<8x256xf32>
    %291 = arith.addf %282, %290 : vector<8x256xf32>
    %292 = vector.broadcast %31 : vector<1x256xf32> to vector<8x256xf32>
    %293 = arith.mulf %286, %292 : vector<8x256xf32>
    %294 = arith.addf %291, %293 : vector<8x256xf32>
    %295 = vector.extract_strided_slice %288 {offsets = [0, 0], sizes = [8, 1], strides = [1, 1]} : vector<8x4xf32> to vector<8x1xf32>
    %296 = vector.broadcast %295 : vector<8x1xf32> to vector<8x256xf32>
    %297 = arith.addf %294, %296 : vector<8x256xf32>
    %cst_108 = arith.constant dense<0.000000e+00> : vector<8xf32>
    %298 = vector.multi_reduction <add>, %297, %cst_108 [1] : vector<8x256xf32> to vector<8xf32>
    %299 = vector.shape_cast %298 : vector<8xf32> to vector<8x1xf32>
    %cst_109 = arith.constant 2.560000e+02 : f32
    %300 = vector.broadcast %cst_109 : f32 to vector<8x1xf32>
    %301 = arith.divf %299, %300 : vector<8x1xf32>
    %302 = vector.broadcast %301 : vector<8x1xf32> to vector<8x256xf32>
    %303 = arith.subf %297, %302 : vector<8x256xf32>
    %304 = arith.mulf %303, %303 : vector<8x256xf32>
    %cst_110 = arith.constant dense<0.000000e+00> : vector<8xf32>
    %305 = vector.multi_reduction <add>, %304, %cst_110 [1] : vector<8x256xf32> to vector<8xf32>
    %306 = vector.shape_cast %305 : vector<8xf32> to vector<8x1xf32>
    %cst_111 = arith.constant 2.560000e+02 : f32
    %307 = vector.broadcast %cst_111 : f32 to vector<8x1xf32>
    %308 = arith.divf %306, %307 : vector<8x1xf32>
    %309 = vector.extract_strided_slice %288 {offsets = [0, 1], sizes = [8, 1], strides = [1, 1]} : vector<8x4xf32> to vector<8x1xf32>
    %cst_112 = arith.constant 9.99999974E-6 : f32
    %310 = vector.broadcast %cst_112 : f32 to vector<8x1xf32>
    %311 = arith.addf %308, %310 : vector<8x1xf32>
    %312 = math.rsqrt %311 : vector<8x1xf32>
    %313 = arith.mulf %309, %312 : vector<8x1xf32>
    %314 = vector.broadcast %313 : vector<8x1xf32> to vector<8x256xf32>
    %315 = arith.mulf %303, %314 : vector<8x256xf32>
    %316 = vector.extract_strided_slice %288 {offsets = [0, 2], sizes = [8, 1], strides = [1, 1]} : vector<8x4xf32> to vector<8x1xf32>
    %317 = vector.broadcast %316 : vector<8x1xf32> to vector<8x256xf32>
    %318 = arith.addf %315, %317 : vector<8x256xf32>
    %cst_113 = arith.constant 0.000000e+00 : f32
    %319 = vector.broadcast %cst_113 : f32 to vector<8x256xf32>
    %320 = arith.cmpf oge, %318, %319 : vector<8x256xf32>
    %321 = vector.extract_strided_slice %288 {offsets = [0, 3], sizes = [8, 1], strides = [1, 1]} : vector<8x4xf32> to vector<8x1xf32>
    %322 = vector.broadcast %321 : vector<8x1xf32> to vector<8x256xf32>
    %323 = arith.mulf %322, %318 : vector<8x256xf32>
    %324 = arith.select %320, %318, %323 : vector<8x256xi1>, vector<8x256xf32>
    %c0_114 = arith.constant 0 : index
    %c128_115 = arith.constant 128 : index
    %325 = vector.load %arg5[%c0_114, %c128_115] : memref<32x512xf32, #tpu.memory_space<vmem>>, vector<8x256xf32>
    tpu.vector_store %arg5[%c0_114, %c128_115], %324 {strides = array<i32>} : memref<32x512xf32, #tpu.memory_space<vmem>>, vector<8x256xf32>,
    %c3 = arith.constant 3 : index
    %c0_116 = arith.constant 0 : index
    %c0_117 = arith.constant 0 : index
    %c0_118 = arith.constant 0 : index
    %326 = vector.load %arg2[%c3, %c0_116, %c0_117, %c0_118] : memref<4x9x8x32xbf16, #tpu.memory_space<vmem>>, vector<1x9x8x32xbf16>
    %327 = vector.shape_cast %326 : vector<1x9x8x32xbf16> to vector<9x8x32xbf16>
    %cst_119 = arith.constant 0.000000e+00 : f32
    %328 = vector.broadcast %cst_119 : f32 to vector<8x256xf32>
    %cst_120 = arith.constant 0.000000e+00 : f32
    %329 = vector.broadcast %cst_120 : f32 to vector<8x256xf32>
    %cst_121 = arith.constant 0.000000e+00 : f32
    %330 = vector.broadcast %cst_121 : f32 to vector<8x256xf32>
    %c0_122 = arith.constant 0 : index
    %c0_123 = arith.constant 0 : index
    %331 = vector.load %arg5[%c0_122, %c0_123] : memref<32x512xf32, #tpu.memory_space<vmem>>, vector<32x256xf32>
    %332 = arith.truncf %331 : vector<32x256xf32> to vector<32x256xbf16>
    %c1_i32_124 = arith.constant 1 : i32
    %333 = tpu.dynamic_rotate %331 by %c1_i32_124 dim 1 : vector<32x256xf32>, i32 -> vector<32x256xf32>
    %334 = arith.truncf %333 : vector<32x256xf32> to vector<32x256xbf16>
    %c255_i32_125 = arith.constant 255 : i32
    %335 = tpu.dynamic_rotate %331 by %c255_i32_125 dim 1 : vector<32x256xf32>, i32 -> vector<32x256xf32>
    %336 = arith.truncf %335 : vector<32x256xf32> to vector<32x256xbf16>
    %337 = vector.extract_strided_slice %327 {offsets = [0, 0, 0], sizes = [1, 8, 32], strides = [1, 1, 1]} : vector<9x8x32xbf16> to vector<1x8x32xbf16>
    %338 = vector.shape_cast %337 : vector<1x8x32xbf16> to vector<8x32xbf16>
    %cst_126 = arith.constant dense<0.000000e+00> : vector<8x256xf32>
    %339 = tpu.matmul %338, %334, %cst_126 {dimension_numbers = #tpu.dot_dimension_numbers<[1], [0], [0], [1], [0, 0, 1, 1], [], []>} : vector<8x32xbf16>, vector<32x256xbf16>, vector<8x256xf32> -> vector<8x256xf32>
    %340 = arith.addf %329, %339 : vector<8x256xf32>
    %341 = vector.extract_strided_slice %327 {offsets = [1, 0, 0], sizes = [1, 8, 32], strides = [1, 1, 1]} : vector<9x8x32xbf16> to vector<1x8x32xbf16>
    %342 = vector.shape_cast %341 : vector<1x8x32xbf16> to vector<8x32xbf16>
    %cst_127 = arith.constant dense<0.000000e+00> : vector<8x256xf32>
    %343 = tpu.matmul %342, %332, %cst_127 {dimension_numbers = #tpu.dot_dimension_numbers<[1], [0], [0], [1], [0, 0, 1, 1], [], []>} : vector<8x32xbf16>, vector<32x256xbf16>, vector<8x256xf32> -> vector<8x256xf32>
    %344 = arith.addf %328, %343 : vector<8x256xf32>
    %345 = vector.extract_strided_slice %327 {offsets = [2, 0, 0], sizes = [1, 8, 32], strides = [1, 1, 1]} : vector<9x8x32xbf16> to vector<1x8x32xbf16>
    %346 = vector.shape_cast %345 : vector<1x8x32xbf16> to vector<8x32xbf16>
    %cst_128 = arith.constant dense<0.000000e+00> : vector<8x256xf32>
    %347 = tpu.matmul %346, %336, %cst_128 {dimension_numbers = #tpu.dot_dimension_numbers<[1], [0], [0], [1], [0, 0, 1, 1], [], []>} : vector<8x32xbf16>, vector<32x256xbf16>, vector<8x256xf32> -> vector<8x256xf32>
    %348 = arith.addf %330, %347 : vector<8x256xf32>
    %c0_129 = arith.constant 0 : index
    %c128_130 = arith.constant 128 : index
    %349 = vector.load %arg5[%c0_129, %c128_130] : memref<32x512xf32, #tpu.memory_space<vmem>>, vector<32x256xf32>
    %350 = arith.truncf %349 : vector<32x256xf32> to vector<32x256xbf16>
    %c1_i32_131 = arith.constant 1 : i32
    %351 = tpu.dynamic_rotate %349 by %c1_i32_131 dim 1 : vector<32x256xf32>, i32 -> vector<32x256xf32>
    %352 = arith.truncf %351 : vector<32x256xf32> to vector<32x256xbf16>
    %c255_i32_132 = arith.constant 255 : i32
    %353 = tpu.dynamic_rotate %349 by %c255_i32_132 dim 1 : vector<32x256xf32>, i32 -> vector<32x256xf32>
    %354 = arith.truncf %353 : vector<32x256xf32> to vector<32x256xbf16>
    %355 = vector.extract_strided_slice %327 {offsets = [3, 0, 0], sizes = [1, 8, 32], strides = [1, 1, 1]} : vector<9x8x32xbf16> to vector<1x8x32xbf16>
    %356 = vector.shape_cast %355 : vector<1x8x32xbf16> to vector<8x32xbf16>
    %cst_133 = arith.constant dense<0.000000e+00> : vector<8x256xf32>
    %357 = tpu.matmul %356, %352, %cst_133 {dimension_numbers = #tpu.dot_dimension_numbers<[1], [0], [0], [1], [0, 0, 1, 1], [], []>} : vector<8x32xbf16>, vector<32x256xbf16>, vector<8x256xf32> -> vector<8x256xf32>
    %358 = arith.addf %340, %357 : vector<8x256xf32>
    %359 = vector.extract_strided_slice %327 {offsets = [4, 0, 0], sizes = [1, 8, 32], strides = [1, 1, 1]} : vector<9x8x32xbf16> to vector<1x8x32xbf16>
    %360 = vector.shape_cast %359 : vector<1x8x32xbf16> to vector<8x32xbf16>
    %cst_134 = arith.constant dense<0.000000e+00> : vector<8x256xf32>
    %361 = tpu.matmul %360, %350, %cst_134 {dimension_numbers = #tpu.dot_dimension_numbers<[1], [0], [0], [1], [0, 0, 1, 1], [], []>} : vector<8x32xbf16>, vector<32x256xbf16>, vector<8x256xf32> -> vector<8x256xf32>
    %362 = arith.addf %344, %361 : vector<8x256xf32>
    %363 = vector.extract_strided_slice %327 {offsets = [5, 0, 0], sizes = [1, 8, 32], strides = [1, 1, 1]} : vector<9x8x32xbf16> to vector<1x8x32xbf16>
    %364 = vector.shape_cast %363 : vector<1x8x32xbf16> to vector<8x32xbf16>
    %cst_135 = arith.constant dense<0.000000e+00> : vector<8x256xf32>
    %365 = tpu.matmul %364, %354, %cst_135 {dimension_numbers = #tpu.dot_dimension_numbers<[1], [0], [0], [1], [0, 0, 1, 1], [], []>} : vector<8x32xbf16>, vector<32x256xbf16>, vector<8x256xf32> -> vector<8x256xf32>
    %366 = arith.addf %348, %365 : vector<8x256xf32>
    %c0_136 = arith.constant 0 : index
    %c256 = arith.constant 256 : index
    %367 = vector.load %arg5[%c0_136, %c256] : memref<32x512xf32, #tpu.memory_space<vmem>>, vector<32x256xf32>
    %368 = arith.truncf %367 : vector<32x256xf32> to vector<32x256xbf16>
    %c1_i32_137 = arith.constant 1 : i32
    %369 = tpu.dynamic_rotate %367 by %c1_i32_137 dim 1 : vector<32x256xf32>, i32 -> vector<32x256xf32>
    %370 = arith.truncf %369 : vector<32x256xf32> to vector<32x256xbf16>
    %c255_i32_138 = arith.constant 255 : i32
    %371 = tpu.dynamic_rotate %367 by %c255_i32_138 dim 1 : vector<32x256xf32>, i32 -> vector<32x256xf32>
    %372 = arith.truncf %371 : vector<32x256xf32> to vector<32x256xbf16>
    %373 = vector.extract_strided_slice %327 {offsets = [6, 0, 0], sizes = [1, 8, 32], strides = [1, 1, 1]} : vector<9x8x32xbf16> to vector<1x8x32xbf16>
    %374 = vector.shape_cast %373 : vector<1x8x32xbf16> to vector<8x32xbf16>
    %cst_139 = arith.constant dense<0.000000e+00> : vector<8x256xf32>
    %375 = tpu.matmul %374, %370, %cst_139 {dimension_numbers = #tpu.dot_dimension_numbers<[1], [0], [0], [1], [0, 0, 1, 1], [], []>} : vector<8x32xbf16>, vector<32x256xbf16>, vector<8x256xf32> -> vector<8x256xf32>
    %376 = arith.addf %358, %375 : vector<8x256xf32>
    %377 = vector.extract_strided_slice %327 {offsets = [7, 0, 0], sizes = [1, 8, 32], strides = [1, 1, 1]} : vector<9x8x32xbf16> to vector<1x8x32xbf16>
    %378 = vector.shape_cast %377 : vector<1x8x32xbf16> to vector<8x32xbf16>
    %cst_140 = arith.constant dense<0.000000e+00> : vector<8x256xf32>
    %379 = tpu.matmul %378, %368, %cst_140 {dimension_numbers = #tpu.dot_dimension_numbers<[1], [0], [0], [1], [0, 0, 1, 1], [], []>} : vector<8x32xbf16>, vector<32x256xbf16>, vector<8x256xf32> -> vector<8x256xf32>
    %380 = arith.addf %362, %379 : vector<8x256xf32>
    %381 = vector.extract_strided_slice %327 {offsets = [8, 0, 0], sizes = [1, 8, 32], strides = [1, 1, 1]} : vector<9x8x32xbf16> to vector<1x8x32xbf16>
    %382 = vector.shape_cast %381 : vector<1x8x32xbf16> to vector<8x32xbf16>
    %cst_141 = arith.constant dense<0.000000e+00> : vector<8x256xf32>
    %383 = tpu.matmul %382, %372, %cst_141 {dimension_numbers = #tpu.dot_dimension_numbers<[1], [0], [0], [1], [0, 0, 1, 1], [], []>} : vector<8x32xbf16>, vector<32x256xbf16>, vector<8x256xf32> -> vector<8x256xf32>
    %384 = arith.addf %366, %383 : vector<8x256xf32>
    %c3_142 = arith.constant 3 : index
    %c0_143 = arith.constant 0 : index
    %c0_144 = arith.constant 0 : index
    %385 = vector.load %arg3[%c3_142, %c0_143, %c0_144] : memref<4x8x4xf32, #tpu.memory_space<vmem>>, vector<1x8x4xf32>
    %386 = vector.shape_cast %385 : vector<1x8x4xf32> to vector<8x4xf32>
    %387 = vector.broadcast %27 : vector<1x256xf32> to vector<8x256xf32>
    %388 = arith.mulf %376, %387 : vector<8x256xf32>
    %389 = arith.addf %380, %388 : vector<8x256xf32>
    %390 = vector.broadcast %31 : vector<1x256xf32> to vector<8x256xf32>
    %391 = arith.mulf %384, %390 : vector<8x256xf32>
    %392 = arith.addf %389, %391 : vector<8x256xf32>
    %393 = vector.extract_strided_slice %386 {offsets = [0, 0], sizes = [8, 1], strides = [1, 1]} : vector<8x4xf32> to vector<8x1xf32>
    %394 = vector.broadcast %393 : vector<8x1xf32> to vector<8x256xf32>
    %395 = arith.addf %392, %394 : vector<8x256xf32>
    %cst_145 = arith.constant dense<0.000000e+00> : vector<8xf32>
    %396 = vector.multi_reduction <add>, %395, %cst_145 [1] : vector<8x256xf32> to vector<8xf32>
    %397 = vector.shape_cast %396 : vector<8xf32> to vector<8x1xf32>
    %cst_146 = arith.constant 2.560000e+02 : f32
    %398 = vector.broadcast %cst_146 : f32 to vector<8x1xf32>
    %399 = arith.divf %397, %398 : vector<8x1xf32>
    %400 = vector.broadcast %399 : vector<8x1xf32> to vector<8x256xf32>
    %401 = arith.subf %395, %400 : vector<8x256xf32>
    %402 = arith.mulf %401, %401 : vector<8x256xf32>
    %cst_147 = arith.constant dense<0.000000e+00> : vector<8xf32>
    %403 = vector.multi_reduction <add>, %402, %cst_147 [1] : vector<8x256xf32> to vector<8xf32>
    %404 = vector.shape_cast %403 : vector<8xf32> to vector<8x1xf32>
    %cst_148 = arith.constant 2.560000e+02 : f32
    %405 = vector.broadcast %cst_148 : f32 to vector<8x1xf32>
    %406 = arith.divf %404, %405 : vector<8x1xf32>
    %407 = vector.extract_strided_slice %386 {offsets = [0, 1], sizes = [8, 1], strides = [1, 1]} : vector<8x4xf32> to vector<8x1xf32>
    %cst_149 = arith.constant 9.99999974E-6 : f32
    %408 = vector.broadcast %cst_149 : f32 to vector<8x1xf32>
    %409 = arith.addf %406, %408 : vector<8x1xf32>
    %410 = math.rsqrt %409 : vector<8x1xf32>
    %411 = arith.mulf %407, %410 : vector<8x1xf32>
    %412 = vector.broadcast %411 : vector<8x1xf32> to vector<8x256xf32>
    %413 = arith.mulf %401, %412 : vector<8x256xf32>
    %414 = vector.extract_strided_slice %386 {offsets = [0, 2], sizes = [8, 1], strides = [1, 1]} : vector<8x4xf32> to vector<8x1xf32>
    %415 = vector.broadcast %414 : vector<8x1xf32> to vector<8x256xf32>
    %416 = arith.addf %413, %415 : vector<8x256xf32>
    %cst_150 = arith.constant 0.000000e+00 : f32
    %417 = vector.broadcast %cst_150 : f32 to vector<8x256xf32>
    %418 = arith.cmpf oge, %416, %417 : vector<8x256xf32>
    %419 = vector.extract_strided_slice %386 {offsets = [0, 3], sizes = [8, 1], strides = [1, 1]} : vector<8x4xf32> to vector<8x1xf32>
    %420 = vector.broadcast %419 : vector<8x1xf32> to vector<8x256xf32>
    %421 = arith.mulf %420, %416 : vector<8x256xf32>
    %422 = arith.select %418, %416, %421 : vector<8x256xi1>, vector<8x256xf32>
    %c0_151 = arith.constant 0 : index
    %c0_152 = arith.constant 0 : index
    %c0_153 = arith.constant 0 : index
    %423 = vector.load %arg4[%c0_151, %c0_152, %c0_153] : memref<1x8x256xf32, #tpu.memory_space<vmem>>, vector<1x8x256xf32>
    %424 = vector.shape_cast %423 : vector<1x8x256xf32> to vector<8x256xf32>
    %425 = vector.shape_cast %422 : vector<8x256xf32> to vector<1x8x256xf32>
    tpu.vector_store %arg4[%c0_151, %c0_152, %c0_153], %425 {strides = array<i32>} : memref<1x8x256xf32, #tpu.memory_space<vmem>>, vector<1x8x256xf32>,
    return
  }
  func.func @transform_0(%arg0: i32) -> (i32, i32, i32) {
    %c0_i32 = arith.constant 0 : i32
    %c0_i32_0 = arith.constant 0 : i32
    %c0_i32_1 = arith.constant 0 : i32
    return %arg0, %c0_i32, %c0_i32_0 : i32, i32, i32
  }
  func.func @transform_1(%arg0: i32) -> (i32, i32, i32, i32) {
    %c0_i32 = arith.constant 0 : i32
    %c0_i32_0 = arith.constant 0 : i32
    %c0_i32_1 = arith.constant 0 : i32
    %c0_i32_2 = arith.constant 0 : i32
    %c0_i32_3 = arith.constant 0 : i32
    return %c0_i32, %c0_i32_0, %c0_i32_1, %c0_i32_2 : i32, i32, i32, i32
  }
  func.func @transform_2(%arg0: i32) -> (i32, i32, i32) {
    %c0_i32 = arith.constant 0 : i32
    %c0_i32_0 = arith.constant 0 : i32
    %c0_i32_1 = arith.constant 0 : i32
    %c0_i32_2 = arith.constant 0 : i32
    return %c0_i32, %c0_i32_0, %c0_i32_1 : i32, i32, i32
  }
  func.func @transform_3(%arg0: i32) -> (i32, i32, i32) {
    %c0_i32 = arith.constant 0 : i32
    %c0_i32_0 = arith.constant 0 : i32
    %c0_i32_1 = arith.constant 0 : i32
    return %arg0, %c0_i32, %c0_i32_0 : i32, i32, i32
  }
}

</mosaic_0001>

<llo_original>
// kernel: tpu_custom_call.1
$region0: #{tpu_custom_call.1}
  #allocation0 [shape = 'u32[]', space=smem, size = 0x4, offset = 0x4, fixed_abs, tag = 'smem constant byte address 0x4 - core index']
  #allocation1 [shape = 'u32[144,128]{1,0:T(1,128)}', space=vmem, size = 0x12000, scoped, tag = 'internal scratch']
  #allocation2 [shape = 'f32[32,512]{1,0:T(8,128)}', space=vmem, size = 0x10000, scoped, tag = 'scratch operand']
  %s0 = inlined_call_operand.vmem [shape: f32[2,8,256], index: 0, kind: input, shape index: {}]
  %s1 = inlined_call_operand.hbm [shape: bf16[4,9,8,32], index: 1, kind: input, shape index: {}]
  %s2 = inlined_call_operand.vmem [shape: f32[4,8,4], index: 2, kind: input, shape index: {}]
  %s3 = inlined_call_operand.hbm [shape: f32[2,8,256], index: 3, kind: output, shape index: {}]
  %s4 = sld [smem:[#allocation0]]
  $region49: #{tpu_custom_call.1} parent=0
    _
  %s6 = ssub.s32 1, %s4
  %s7 = scalar_select 0, %s6, %s4
  $region1: #{tpu_custom_call.1} parent=0
    #allocation3 [shape = 'u8[73728]{0}', space=vmem, size = 0x12000, scoped, tag = 'input window, operand 1, single buffered']
    #allocation4 [shape = 's32[2]{0}', space=sflag, size = 0x8, scoped, tag = 'scoped memory for tpu_custom_call.1']
    #allocation5 [shape = 's32[2]{0}', space=sflag, size = 0x8, scoped, tag = 'scoped memory for tpu_custom_call.1']
    #allocation6 [shape = 'u8[16384]{0}', space=vmem, size = 0x4000, scoped, tag = 'output window, operand 0']
    %8 = vsyncpa [#allocation4], 0
    %9 = vsyncpa [#allocation5], 0
    %s10 = scalar_lea.sflag [#allocation5], 1
    %11 = vsyncpa %s10, 0
    loop: start=0, step=1, limit=4
    $region2: #{tpu_custom_call.1} parent=1 // loop_pre_header
      _
    $region3: #{tpu_custom_call.1} parent=1 // loop_header
      %s13 = sphi 0, %s17
      %p14 = scmp.ge.s32.totalorder %s13, 4
      %s23 = sphi 0, %s25
      %s26 = sphi 0, %s23
      %s27 = sphi 0, %s26
      %s43 = sphi 0, %s27
      %s47 = sphi 0, %s47
      %s49 = sphi 0, %s47
      %s50 = sphi 0, %s49
      %s64 = sphi 0, %s50
      %s68 = sphi 0, %s68
      %s70 = sphi 0, %s68
      %s71 = sphi 0, %s70
      %s85 = sphi 0, %s71
      %s91 = sphi 0, %s93
      %s94 = sphi 0, %s91
      %s95 = sphi 0, %s94
      %s111 = sphi 0, %s95
    $region4: #{tpu_custom_call.1} parent=1 // loop_header_branch
      %16 = sbr.rel (%p14) target = $region8
    $region5: #{tpu_custom_call.1} parent=1 // loop_body
      %s18 = ssub.s32 %s13, 1
      %s19 = ssub.s32 %s13, 2
      %s20 = sadd.s32 %s13, 1
      %s21 = ssub.s32 %s13, %s20
      %p22 = scmp.eq.s32.totalorder %s21, 0
      %s24 = sadd.s32 %s23, 1
      %s25 = scalar_select %p22, %s23, %s24
      %p28 = pneg %p22
      %p29 = scmp.eq.s32.totalorder %s13, 1
      %p30 = por %p28, %p29
      %p31 = scmp.ne.s32.totalorder %s23, %s26
      %p32 = scmp.eq.s32.totalorder %s13, 0
      %p33 = por %p31, %p32
      %p34 = scmp.ne.s32.totalorder %s23, %s26
      %p35 = scmp.eq.s32.totalorder %s18, 1
      %p36 = por %p34, %p35
      %p37 = scmp.ne.s32.totalorder %s26, %s27
      %p38 = scmp.eq.s32.totalorder %s18, 0
      %p39 = por %p37, %p38
      %p40 = scmp.ne.s32.totalorder %s26, %s27
      %p41 = scmp.eq.s32.totalorder %s19, 1
      %p42 = por %p40, %p41
      %p44 = scmp.ne.s32.totalorder %s27, %s43
      %p45 = scmp.eq.s32.totalorder %s19, 0
      %p46 = por %p44, %p45
      %s48 = sadd.s32 %s47, 1
      %p51 = scmp.eq.s32.totalorder %s13, 1
      %p52 = scmp.ne.s32.totalorder %s47, %s49
      %p53 = scmp.eq.s32.totalorder %s13, 0
      %p54 = por %p52, %p53
      %p55 = scmp.ne.s32.totalorder %s47, %s49
      %p56 = scmp.eq.s32.totalorder %s18, 1
      %p57 = por %p55, %p56
      %p58 = scmp.ne.s32.totalorder %s49, %s50
      %p59 = scmp.eq.s32.totalorder %s18, 0
      %p60 = por %p58, %p59
      %p61 = scmp.ne.s32.totalorder %s49, %s50
      %p62 = scmp.eq.s32.totalorder %s19, 1
      %p63 = por %p61, %p62
      %p65 = scmp.ne.s32.totalorder %s50, %s64
      %p66 = scmp.eq.s32.totalorder %s19, 0
      %p67 = por %p65, %p66
      %s69 = sadd.s32 %s68, 1
      %p72 = scmp.eq.s32.totalorder %s13, 1
      %p73 = scmp.ne.s32.totalorder %s68, %s70
      %p74 = scmp.eq.s32.totalorder %s13, 0
      %p75 = por %p73, %p74
      %p76 = scmp.ne.s32.totalorder %s68, %s70
      %p77 = scmp.eq.s32.totalorder %s18, 1
      %p78 = por %p76, %p77
      %p79 = scmp.ne.s32.totalorder %s70, %s71
      %p80 = scmp.eq.s32.totalorder %s18, 0
      %p81 = por %p79, %p80
      %p82 = scmp.ne.s32.totalorder %s70, %s71
      %p83 = scmp.eq.s32.totalorder %s19, 1
      %p84 = por %p82, %p83
      %p86 = scmp.ne.s32.totalorder %s71, %s85
      %p87 = scmp.eq.s32.totalorder %s19, 0
      %p88 = por %p86, %p87
      %s89 = ssub.s32 %s13, %s20
      %p90 = scmp.eq.s32.totalorder %s89, 0
      %s92 = sadd.s32 %s91, 1
      %s93 = scalar_select %p90, %s91, %s92
      %p96 = pneg %p90
      %p97 = scmp.eq.s32.totalorder %s13, 1
      %p98 = por %p96, %p97
      %p99 = scmp.ne.s32.totalorder %s91, %s94
      %p100 = scmp.eq.s32.totalorder %s13, 0
      %p101 = por %p99, %p100
      %p102 = scmp.ne.s32.totalorder %s91, %s94
      %p103 = scmp.eq.s32.totalorder %s18, 1
      %p104 = por %p102, %p103
      %p105 = scmp.ne.s32.totalorder %s94, %s95
      %p106 = scmp.eq.s32.totalorder %s18, 0
      %p107 = por %p105, %p106
      %p108 = scmp.ne.s32.totalorder %s94, %s95
      %p109 = scmp.eq.s32.totalorder %s19, 1
      %p110 = por %p108, %p109
      %p112 = scmp.ne.s32.totalorder %s95, %s111
      %p113 = scmp.eq.s32.totalorder %s19, 0
      %p114 = por %p112, %p113
      %p115 = scmp.le.s32.totalorder 1, %s13
      %p116 = scmp.lt.s32.totalorder %s13, 3
      %p117 = pnand %p115, %p116
      %p118 = pneg %p117
      // Predicated region
      $region9: #{tpu_custom_call.1} parent=5 // pred_check
        _
      $region10: #{tpu_custom_call.1} parent=5 // pred_check_branch
        %120 = sbr.rel (%p117) target = $region12
      $region11: #{tpu_custom_call.1} parent=5 // pred_region
        %s121 = ssub.s32 %s13, 1
        // Predicated region
        $region13: #{tpu_custom_call.1} parent=11 // pred_check
          %p122 = pneg %p60
        $region14: #{tpu_custom_call.1} parent=11 // pred_check_branch
          %124 = sbr.rel (%p122) target = $region16
        $region15: #{tpu_custom_call.1} parent=11 // pred_region
          %s126 = ssub.s32 2304, 2304
          %127 = vsyncadd [#allocation4], %s126
          %s128 = sshll.u32 [#allocation3], 4
          %s129 = int_to_ptr.vmem [resolvable:$true] %s128
          %134 = dma.hbm_to_vmem [thread:$0]  %s1, 2304, %s129, [#allocation4], 64, 64, 4
        $region16: #{tpu_custom_call.1} parent=11 // pred_fallthru
          _
        // Predicated region
        $region17: #{tpu_custom_call.1} parent=11 // pred_check
          %p135 = pneg %p81
        $region18: #{tpu_custom_call.1} parent=11 // pred_check_branch
          %137 = sbr.rel (%p135) target = $region20
        $region19: #{tpu_custom_call.1} parent=11 // pred_region
          _
        $region20: #{tpu_custom_call.1} parent=11 // pred_fallthru
          _
      $region12: #{tpu_custom_call.1} parent=5 // pred_fallthru
        _
      %p138 = scmp.lt.s32.totalorder %s13, 2
      // Predicated region
      $region21: #{tpu_custom_call.1} parent=5 // pred_check
        %p139 = pneg %p138
      $region22: #{tpu_custom_call.1} parent=5 // pred_check_branch
        %141 = sbr.rel (%p139) target = $region24
      $region23: #{tpu_custom_call.1} parent=5 // pred_region
        // Predicated region
        $region25: #{tpu_custom_call.1} parent=23 // pred_check
          %p142 = pneg %p33
        $region26: #{tpu_custom_call.1} parent=23 // pred_check_branch
          %144 = sbr.rel (%p142) target = $region28
        $region27: #{tpu_custom_call.1} parent=23 // pred_region
          %p145 = scmp.lt.s32.totalorder %s13, 1
          %s146 = scalar_select %p145, %s13, 1
          %s147 = smul.addr %s146, 2
          %s148 = smul.addr %s147, 8
          %s149 = scalar_lea.vmem %s0, %s148
        $region28: #{tpu_custom_call.1} parent=23 // pred_fallthru
          _
      $region24: #{tpu_custom_call.1} parent=5 // pred_fallthru
        _
      %p150 = scmp.le.s32.totalorder 1, %s13
      %p151 = scmp.lt.s32.totalorder %s13, 3
      %p152 = pnand %p150, %p151
      %p153 = pneg %p152
      // Predicated region
      $region29: #{tpu_custom_call.1} parent=5 // pred_check
        _
      $region30: #{tpu_custom_call.1} parent=5 // pred_check_branch
        %155 = sbr.rel (%p152) target = $region32
      $region31: #{tpu_custom_call.1} parent=5 // pred_region
        %s156 = ssub.s32 %s13, 1
        // Predicated region
        $region33: #{tpu_custom_call.1} parent=31 // pred_check
          %p157 = pneg %p60
        $region34: #{tpu_custom_call.1} parent=31 // pred_check_branch
          %159 = sbr.rel (%p157) target = $region36
        $region35: #{tpu_custom_call.1} parent=31 // pred_region
          %160 = dma.done [#allocation4], 2304
        $region36: #{tpu_custom_call.1} parent=31 // pred_fallthru
          _
        %p161 = scmp.lt.s32.totalorder %s18, 1
        %s162 = scalar_select %p161, %s18, 1
        %s163 = smul.addr %s162, 2
        %s164 = smul.addr %s163, 8
        %s165 = scalar_lea.vmem %s0, %s164
        %p166 = pneg %p39
        %p167 = pneg %p36
        %p168 = pneg %p60
        %p169 = pneg %p57
        %p170 = pneg %p81
        %p171 = pneg %p78
        %p172 = pneg %p107
        %p173 = pneg %p104
        %s174 = sand.u32 %s94, 1
        %s175 = scalar_lea.sflag [#allocation5], %s174
        %s176 = sand.u32 %s94, 1
        %s177 = smul.addr %s176, 16
        %s178 = scalar_lea.vmem [#allocation6], %s177
        %p179 = scmp.lt.s32.totalorder %s18, 1
        %s180 = scalar_select %p179, %s18, 1
        %s181 = smul.addr %s180, 2
        %s182 = smul.addr %s181, 8
        %s183 = scalar_lea.vmem %s0, %s182
        %185 = vst [vmem:[#allocation2] sm:$0xff] 0.0
        %186 = vst [vmem:[#allocation2 + $0x20] sm:$0xff] 0.0
        %187 = vst [vmem:[#allocation2 + $0x40] sm:$0xff] 0.0
        %188 = vst [vmem:[#allocation2 + $0x60] sm:$0xff] 0.0
        %189 = vst [vmem:[#allocation2 + $0x18] sm:$0xff] 0.0
        %190 = vst [vmem:[#allocation2 + $0x38] sm:$0xff] 0.0
        %191 = vst [vmem:[#allocation2 + $0x58] sm:$0xff] 0.0
        %192 = vst [vmem:[#allocation2 + $0x78] sm:$0xff] 0.0
        %v193 = vld [vmem:[%s183] sm:$0xff]
        %v194 = vld [vmem:[%s183 + $0x8] sm:$0xff]
        %195 = vst [vmem:[#allocation2 + $0x68] sm:$0xff] %v193
        %196 = vst [vmem:[#allocation2 + $0x70] sm:$0xff] %v194
        %v197 = vlaneseq
        %v198 = vand.u32 %v197, 127
        %v199 = vadd.s32 %v198, 128
        %vm200 = vcmp.lt.s32.totalorder %v198, 0
        %v201 = vsub.s32 0, %v198
        %v202 = vsel %vm200, %v201, %v198
        %v203 = vshrl.u32 %v202, 4
        %v204 = vand.u32 %v202, 15
        %v205 = vsub.s32 0, %v204
        %v206 = vsel %vm200, %v205, %v204
        %vm207 = vcmp.lt.s32.totalorder %v199, 0
        %v208 = vsub.s32 0, %v199
        %v209 = vsel %vm207, %v208, %v199
        %v210 = vshrl.u32 %v209, 4
        %v211 = vand.u32 %v209, 15
        %v212 = vsub.s32 0, %v211
        %v213 = vsel %vm207, %v212, %v211
        %vm214 = vcmp.ne.s32.totalorder %v206, 0
        %vm215 = vcmp.ne.s32.totalorder %v213, 0
        %vm216 = vcmp.lt.s32.totalorder %v206, 0
        %vm217 = vcmp.lt.s32.totalorder %v213, 0
        %vm218 = vmand %vm216, %vm214
        %vm219 = vmand %vm217, %vm215
        %v220 = vadd.s32 %v206, 16
        %v221 = vadd.s32 %v213, 16
        %v222 = vsel %vm218, %v220, %v206
        %v223 = vsel %vm219, %v221, %v213
        %vm224 = vcmp.gt.s32.totalorder %v222, 0
        %vm225 = vcmp.gt.s32.totalorder %v223, 0
        %v226 = vsel %vm224, 1, 0
        %v227 = vsel %vm225, 1, 0
        %v228 = vcvt.s32.f32 %v226
        %v229 = vcvt.s32.f32 %v227
        %vm230 = vcmp.lt.s32.totalorder %v222, 15
        %vm231 = vcmp.lt.s32.totalorder %v223, 15
        %v232 = vsel %vm230, 1, 0
        %v233 = vsel %vm231, 1, 0
        %v234 = vcvt.s32.f32 %v232
        %v235 = vcvt.s32.f32 %v233
        %v236 = vld [vmem:[#allocation3] sm:$0xf]
        %v237 = vld [vmem:[#allocation3 + $0x4] sm:$0xf]
        %v238 = vld [vmem:[#allocation3 + $0x8] sm:$0xf]
        %v239 = vld [vmem:[#allocation3 + $0xc] sm:$0xf]
        %v240 = vld [vmem:[#allocation3 + $0x10] sm:$0xf]
        %v241 = vld [vmem:[#allocation3 + $0x14] sm:$0xf]
        %v242 = vld [vmem:[#allocation3 + $0x18] sm:$0xf]
        %v243 = vld [vmem:[#allocation3 + $0x1c] sm:$0xf]
        %v244 = vld [vmem:[#allocation3 + $0x20] sm:$0xf]
        %v245 = vld [vmem:[#allocation2 + $0x60] sm:$0xff]
        %v246 = vld [vmem:[#allocation2 + $0x68] sm:$0xff]
        %v247 = vld [vmem:[#allocation2 + $0x70] sm:$0xff]
        %v248 = vpack.c.bf16 %v245, %v245
        %v249 = vpack.c.bf16 %v246, %v246
        %v250 = vpack.c.bf16 %v247, %v247
        %254 = vrot.lane.b32.xlu0 %v245, 16
        %v255 = vpop.permute.xlu0 %254
        %256 = vrot.lane.b32.xlu0 %v246, 16
        %v257 = vpop.permute.xlu0 %256
        %258 = vrot.lane.b32.xlu0 %v247, 16
        %v259 = vpop.permute.xlu0 %258
        %vm260 = vcmask 130048
        %v261 = vsel %vm260, %v255, %v257
        %v262 = vsel %vm260, %v257, %v259
        %265 = vrot.lane.b32.xlu0 %v261, 1
        %v266 = vpop.permute.xlu0 %265
        %267 = vrot.lane.b32.xlu0 %v262, 1
        %v268 = vpop.permute.xlu0 %267
        %vm269 = vcmp.lt.s32.totalorder %v198, 1
        %v270 = vsel %vm269, %v266, %v268
        %v271 = vsel %vm269, %v268, %v266
        %v272 = vpack.c.bf16 %v271, %v271
        %v273 = vpack.c.bf16 %v270, %v270
        %274 = vrot.lane.b32.xlu0 %v261, 127
        %v275 = vpop.permute.xlu0 %274
        %276 = vrot.lane.b32.xlu0 %v262, 127
        %v277 = vpop.permute.xlu0 %276
        %vm278 = vcmp.lt.s32.totalorder %v198, 127
        %v279 = vsel %vm278, %v275, %v277
        %v280 = vsel %vm278, %v277, %v275
        %v281 = vpack.c.bf16 %v279, %v279
        %v282 = vpack.c.bf16 %v280, %v280
        %283 = vrot.lane.b32.xlu0 %v246, 1
        %v284 = vpop.permute.xlu0 %283
        %285 = vrot.lane.b32.xlu0 %v247, 1
        %v286 = vpop.permute.xlu0 %285
        %v287 = vsel %vm269, %v284, %v286
        %v288 = vsel %vm269, %v286, %v284
        %v289 = vpack.c.bf16 %v288, %v288
        %v290 = vpack.c.bf16 %v287, %v287
        %291 = vrot.lane.b32.xlu0 %v246, 127
        %v292 = vpop.permute.xlu0 %291
        %293 = vrot.lane.b32.xlu0 %v247, 127
        %v294 = vpop.permute.xlu0 %293
        %v295 = vsel %vm278, %v292, %v294
        %v296 = vsel %vm278, %v294, %v292
        %v297 = vpack.c.bf16 %v295, %v295
        %v298 = vpack.c.bf16 %v296, %v296
        %vm299 = vcmask 64512
        %v301 = vsel %vm299, %v239, 0
        %vm303 = vcmask 1043456
        %v305 = vsel %vm303, %v289, 0
        %v308 = vsel %vm303, %v290, 0
        %310 = vmatprep.subr.bf16.mxu0 %v308
        %311 = vmatpush1.bf16.msra.mxu0 %v305
        %312 = vmatprep.subr.bf16.mxu0 0
        %313 = vmatpush1.bf16.msra.mxu0 0
        %314 = vmatprep.subr.bf16.mxu0 0
        %315 = vmatpush1.bf16.msra.mxu0 0
        %316 = vmatprep.subr.bf16.mxu0 0
        %317 = vmatpush1.bf16.msra.mxu0 0
        %318 = vmatprep.subr.bf16.mxu0 0
        %319 = vmatpush1.bf16.msra.mxu0 0
        %320 = vmatprep.subr.bf16.mxu0 0
        %321 = vmatpush1.bf16.msra.mxu0 0
        %322 = vmatprep.subr.bf16.mxu0 0
        %323 = vmatpush1.bf16.msra.mxu0 0
        %324 = vmatprep.subr.bf16.mxu0 0
        %325 = vmatpush1.bf16.msra.mxu0 0
        %326 = vmatprep.subr.bf16.mxu0 0
        %327 = vmatpush1.bf16.msra.mxu0 0
        %328 = vmatprep.subr.bf16.mxu0 0
        %329 = vmatpush1.bf16.msra.mxu0 0
        %330 = vmatprep.subr.bf16.mxu0 0
        %331 = vmatpush1.bf16.msra.mxu0 0
        %332 = vmatprep.subr.bf16.mxu0 0
        %333 = vmatpush1.bf16.msra.mxu0 0
        %334 = vmatprep.subr.bf16.mxu0 0
        %335 = vmatpush1.bf16.msra.mxu0 0
        %336 = vmatprep.subr.bf16.mxu0 0
        %337 = vmatpush1.bf16.msra.mxu0 0
        %338 = vmatprep.subr.bf16.mxu0 0
        %339 = vmatpush1.bf16.msra.mxu0 0
        %340 = vmatprep.subr.bf16.mxu0 0
        %341 = vmatpush1.bf16.msra.mxu0 0
        %342 = vmatprep.mubr.bf16.mxu0 0
        %343 = vmatmul.mubr.bf16.gmra.mrb[0].mxu0 %v301
        %v344 = vpop.f32.mrb[0].mxu0
        %v345 = vadd.f32 0.0, %v344
        %v346 = vpop.f32.mrb[0].mxu0
        %v347 = vadd.f32 0.0, %v346
        %v348 = vpop.f32.mrb[0].mxu0
        %v349 = vpop.f32.mrb[0].mxu0
        %350 = vdwg.mxu0
        %v352 = vsel %vm299, %v236, 0
        %v355 = vsel %vm303, %v272, 0
        %v358 = vsel %vm303, %v273, 0
        %360 = vmatprep.subr.bf16.mxu0 %v358
        %361 = vmatpush1.bf16.msra.mxu0 %v355
        %362 = vmatprep.subr.bf16.mxu0 0
        %363 = vmatpush1.bf16.msra.mxu0 0
        %364 = vmatprep.subr.bf16.mxu0 0
        %365 = vmatpush1.bf16.msra.mxu0 0
        %366 = vmatprep.subr.bf16.mxu0 0
        %367 = vmatpush1.bf16.msra.mxu0 0
        %368 = vmatprep.subr.bf16.mxu0 0
        %369 = vmatpush1.bf16.msra.mxu0 0
        %370 = vmatprep.subr.bf16.mxu0 0
        %371 = vmatpush1.bf16.msra.mxu0 0
        %372 = vmatprep.subr.bf16.mxu0 0
        %373 = vmatpush1.bf16.msra.mxu0 0
        %374 = vmatprep.subr.bf16.mxu0 0
        %375 = vmatpush1.bf16.msra.mxu0 0
        %376 = vmatprep.subr.bf16.mxu0 0
        %377 = vmatpush1.bf16.msra.mxu0 0
        %378 = vmatprep.subr.bf16.mxu0 0
        %379 = vmatpush1.bf16.msra.mxu0 0
        %380 = vmatprep.subr.bf16.mxu0 0
        %381 = vmatpush1.bf16.msra.mxu0 0
        %382 = vmatprep.subr.bf16.mxu0 0
        %383 = vmatpush1.bf16.msra.mxu0 0
        %384 = vmatprep.subr.bf16.mxu0 0
        %385 = vmatpush1.bf16.msra.mxu0 0
        %386 = vmatprep.subr.bf16.mxu0 0
        %387 = vmatpush1.bf16.msra.mxu0 0
        %388 = vmatprep.subr.bf16.mxu0 0
        %389 = vmatpush1.bf16.msra.mxu0 0
        %390 = vmatprep.subr.bf16.mxu0 0
        %391 = vmatpush1.bf16.msra.mxu0 0
        %392 = vmatprep.mubr.bf16.mxu0 0
        %393 = vmatmul.mubr.bf16.gmra.mrb[0].mxu0 %v352
        %v394 = vpop.f32.mrb[0].mxu0
        %v395 = vadd.f32 %v345, %v394
        %v396 = vpop.f32.mrb[0].mxu0
        %v397 = vadd.f32 %v347, %v396
        %v398 = vpop.f32.mrb[0].mxu0
        %v399 = vpop.f32.mrb[0].mxu0
        %400 = vdwg.mxu0
        %v402 = vsel %vm299, %v240, 0
        %v405 = vsel %vm303, %v249, 0
        %v408 = vsel %vm303, %v250, 0
        %410 = vmatprep.subr.bf16.mxu0 %v408
        %411 = vmatpush1.bf16.msra.mxu0 %v405
        %412 = vmatprep.subr.bf16.mxu0 0
        %413 = vmatpush1.bf16.msra.mxu0 0
        %414 = vmatprep.subr.bf16.mxu0 0
        %415 = vmatpush1.bf16.msra.mxu0 0
        %416 = vmatprep.subr.bf16.mxu0 0
        %417 = vmatpush1.bf16.msra.mxu0 0
        %418 = vmatprep.subr.bf16.mxu0 0
        %419 = vmatpush1.bf16.msra.mxu0 0
        %420 = vmatprep.subr.bf16.mxu0 0
        %421 = vmatpush1.bf16.msra.mxu0 0
        %422 = vmatprep.subr.bf16.mxu0 0
        %423 = vmatpush1.bf16.msra.mxu0 0
        %424 = vmatprep.subr.bf16.mxu0 0
        %425 = vmatpush1.bf16.msra.mxu0 0
        %426 = vmatprep.subr.bf16.mxu0 0
        %427 = vmatpush1.bf16.msra.mxu0 0
        %428 = vmatprep.subr.bf16.mxu0 0
        %429 = vmatpush1.bf16.msra.mxu0 0
        %430 = vmatprep.subr.bf16.mxu0 0
        %431 = vmatpush1.bf16.msra.mxu0 0
        %432 = vmatprep.subr.bf16.mxu0 0
        %433 = vmatpush1.bf16.msra.mxu0 0
        %434 = vmatprep.subr.bf16.mxu0 0
        %435 = vmatpush1.bf16.msra.mxu0 0
        %436 = vmatprep.subr.bf16.mxu0 0
        %437 = vmatpush1.bf16.msra.mxu0 0
        %438 = vmatprep.subr.bf16.mxu0 0
        %439 = vmatpush1.bf16.msra.mxu0 0
        %440 = vmatprep.subr.bf16.mxu0 0
        %441 = vmatpush1.bf16.msra.mxu0 0
        %442 = vmatprep.mubr.bf16.mxu0 0
        %443 = vmatmul.mubr.bf16.gmra.mrb[0].mxu0 %v402
        %v444 = vpop.f32.mrb[0].mxu0
        %v445 = vadd.f32 0.0, %v444
        %v446 = vpop.f32.mrb[0].mxu0
        %v447 = vadd.f32 0.0, %v446
        %v448 = vpop.f32.mrb[0].mxu0
        %v449 = vpop.f32.mrb[0].mxu0
        %450 = vdwg.mxu0
        %454 = vrot.lane.b32.xlu0 %v248, 16
        %v455 = vpop.permute.xlu0 %454
        %456 = vrot.lane.b32.xlu0 %v249, 16
        %v457 = vpop.permute.xlu0 %456
        %458 = vrot.lane.b32.xlu0 %v250, 16
        %v459 = vpop.permute.xlu0 %458
        %vm460 = vcmask 130048
        %v461 = vsel %vm460, %v455, %v457
        %v462 = vsel %vm460, %v457, %v459
        %v464 = vsel %vm299, %v237, 0
        %v467 = vsel %vm303, %v461, 0
        %v470 = vsel %vm303, %v462, 0
        %472 = vmatprep.subr.bf16.mxu0 %v470
        %473 = vmatpush1.bf16.msra.mxu0 %v467
        %474 = vmatprep.subr.bf16.mxu0 0
        %475 = vmatpush1.bf16.msra.mxu0 0
        %476 = vmatprep.subr.bf16.mxu0 0
        %477 = vmatpush1.bf16.msra.mxu0 0
        %478 = vmatprep.subr.bf16.mxu0 0
        %479 = vmatpush1.bf16.msra.mxu0 0
        %480 = vmatprep.subr.bf16.mxu0 0
        %481 = vmatpush1.bf16.msra.mxu0 0
        %482 = vmatprep.subr.bf16.mxu0 0
        %483 = vmatpush1.bf16.msra.mxu0 0
        %484 = vmatprep.subr.bf16.mxu0 0
        %485 = vmatpush1.bf16.msra.mxu0 0
        %486 = vmatprep.subr.bf16.mxu0 0
        %487 = vmatpush1.bf16.msra.mxu0 0
        %488 = vmatprep.subr.bf16.mxu0 0
        %489 = vmatpush1.bf16.msra.mxu0 0
        %490 = vmatprep.subr.bf16.mxu0 0
        %491 = vmatpush1.bf16.msra.mxu0 0
        %492 = vmatprep.subr.bf16.mxu0 0
        %493 = vmatpush1.bf16.msra.mxu0 0
        %494 = vmatprep.subr.bf16.mxu0 0
        %495 = vmatpush1.bf16.msra.mxu0 0
        %496 = vmatprep.subr.bf16.mxu0 0
        %497 = vmatpush1.bf16.msra.mxu0 0
        %498 = vmatprep.subr.bf16.mxu0 0
        %499 = vmatpush1.bf16.msra.mxu0 0
        %500 = vmatprep.subr.bf16.mxu0 0
        %501 = vmatpush1.bf16.msra.mxu0 0
        %502 = vmatprep.subr.bf16.mxu0 0
        %503 = vmatpush1.bf16.msra.mxu0 0
        %504 = vmatprep.mubr.bf16.mxu0 0
        %505 = vmatmul.mubr.bf16.gmra.mrb[0].mxu0 %v464
        %v506 = vpop.f32.mrb[0].mxu0
        %v507 = vadd.f32 %v445, %v506
        %v508 = vpop.f32.mrb[0].mxu0
        %v509 = vadd.f32 %v447, %v508
        %v510 = vpop.f32.mrb[0].mxu0
        %v511 = vpop.f32.mrb[0].mxu0
        %512 = vdwg.mxu0
        %v514 = vsel %vm299, %v241, 0
        %v517 = vsel %vm303, %v297, 0
        %v520 = vsel %vm303, %v298, 0
        %522 = vmatprep.subr.bf16.mxu0 %v520
        %523 = vmatpush1.bf16.msra.mxu0 %v517
        %524 = vmatprep.subr.bf16.mxu0 0
        %525 = vmatpush1.bf16.msra.mxu0 0
        %526 = vmatprep.subr.bf16.mxu0 0
        %527 = vmatpush1.bf16.msra.mxu0 0
        %528 = vmatprep.subr.bf16.mxu0 0
        %529 = vmatpush1.bf16.msra.mxu0 0
        %530 = vmatprep.subr.bf16.mxu0 0
        %531 = vmatpush1.bf16.msra.mxu0 0
        %532 = vmatprep.subr.bf16.mxu0 0
        %533 = vmatpush1.bf16.msra.mxu0 0
        %534 = vmatprep.subr.bf16.mxu0 0
        %535 = vmatpush1.bf16.msra.mxu0 0
        %536 = vmatprep.subr.bf16.mxu0 0
        %537 = vmatpush1.bf16.msra.mxu0 0
        %538 = vmatprep.subr.bf16.mxu0 0
        %539 = vmatpush1.bf16.msra.mxu0 0
        %540 = vmatprep.subr.bf16.mxu0 0
        %541 = vmatpush1.bf16.msra.mxu0 0
        %542 = vmatprep.subr.bf16.mxu0 0
        %543 = vmatpush1.bf16.msra.mxu0 0
        %544 = vmatprep.subr.bf16.mxu0 0
        %545 = vmatpush1.bf16.msra.mxu0 0
        %546 = vmatprep.subr.bf16.mxu0 0
        %547 = vmatpush1.bf16.msra.mxu0 0
        %548 = vmatprep.subr.bf16.mxu0 0
        %549 = vmatpush1.bf16.msra.mxu0 0
        %550 = vmatprep.subr.bf16.mxu0 0
        %551 = vmatpush1.bf16.msra.mxu0 0
        %552 = vmatprep.subr.bf16.mxu0 0
        %553 = vmatpush1.bf16.msra.mxu0 0
        %554 = vmatprep.mubr.bf16.mxu0 0
        %555 = vmatmul.mubr.bf16.gmra.mrb[0].mxu0 %v514
        %v556 = vpop.f32.mrb[0].mxu0
        %v557 = vadd.f32 0.0, %v556
        %v558 = vpop.f32.mrb[0].mxu0
        %v559 = vadd.f32 0.0, %v558
        %v560 = vpop.f32.mrb[0].mxu0
        %v561 = vpop.f32.mrb[0].mxu0
        %562 = vdwg.mxu0
        %v564 = vsel %vm299, %v238, 0
        %v567 = vsel %vm303, %v281, 0
        %v570 = vsel %vm303, %v282, 0
        %572 = vmatprep.subr.bf16.mxu0 %v570
        %573 = vmatpush1.bf16.msra.mxu0 %v567
        %574 = vmatprep.subr.bf16.mxu0 0
        %575 = vmatpush1.bf16.msra.mxu0 0
        %576 = vmatprep.subr.bf16.mxu0 0
        %577 = vmatpush1.bf16.msra.mxu0 0
        %578 = vmatprep.subr.bf16.mxu0 0
        %579 = vmatpush1.bf16.msra.mxu0 0
        %580 = vmatprep.subr.bf16.mxu0 0
        %581 = vmatpush1.bf16.msra.mxu0 0
        %582 = vmatprep.subr.bf16.mxu0 0
        %583 = vmatpush1.bf16.msra.mxu0 0
        %584 = vmatprep.subr.bf16.mxu0 0
        %585 = vmatpush1.bf16.msra.mxu0 0
        %586 = vmatprep.subr.bf16.mxu0 0
        %587 = vmatpush1.bf16.msra.mxu0 0
        %588 = vmatprep.subr.bf16.mxu0 0
        %589 = vmatpush1.bf16.msra.mxu0 0
        %590 = vmatprep.subr.bf16.mxu0 0
        %591 = vmatpush1.bf16.msra.mxu0 0
        %592 = vmatprep.subr.bf16.mxu0 0
        %593 = vmatpush1.bf16.msra.mxu0 0
        %594 = vmatprep.subr.bf16.mxu0 0
        %595 = vmatpush1.bf16.msra.mxu0 0
        %596 = vmatprep.subr.bf16.mxu0 0
        %597 = vmatpush1.bf16.msra.mxu0 0
        %598 = vmatprep.subr.bf16.mxu0 0
        %599 = vmatpush1.bf16.msra.mxu0 0
        %600 = vmatprep.subr.bf16.mxu0 0
        %601 = vmatpush1.bf16.msra.mxu0 0
        %602 = vmatprep.subr.bf16.mxu0 0
        %603 = vmatpush1.bf16.msra.mxu0 0
        %604 = vmatprep.mubr.bf16.mxu0 0
        %605 = vmatmul.mubr.bf16.gmra.mrb[0].mxu0 %v564
        %v606 = vpop.f32.mrb[0].mxu0
        %v607 = vadd.f32 %v557, %v606
        %v608 = vpop.f32.mrb[0].mxu0
        %v609 = vadd.f32 %v559, %v608
        %v610 = vpop.f32.mrb[0].mxu0
        %v611 = vpop.f32.mrb[0].mxu0
        %612 = vdwg.mxu0
        %v613 = vld [vmem:[#allocation2 + $0x68] sm:$0xff]
        %v614 = vld [vmem:[#allocation2 + $0x70] sm:$0xff]
        %v615 = vld [vmem:[#allocation2 + $0x78] sm:$0xff]
        %v616 = vpack.c.bf16 %v613, %v613
        %v617 = vpack.c.bf16 %v614, %v614
        %v618 = vpack.c.bf16 %v615, %v615
        %622 = vrot.lane.b32.xlu0 %v613, 112
        %v623 = vpop.permute.xlu0 %622
        %624 = vrot.lane.b32.xlu0 %v614, 112
        %v625 = vpop.permute.xlu0 %624
        %626 = vrot.lane.b32.xlu0 %v615, 112
        %v627 = vpop.permute.xlu0 %626
        %vm628 = vcmask 916480
        %v629 = vsel %vm628, %v623, %v625
        %v630 = vsel %vm628, %v625, %v627
        %633 = vrot.lane.b32.xlu0 %v629, 1
        %v634 = vpop.permute.xlu0 %633
        %635 = vrot.lane.b32.xlu0 %v630, 1
        %v636 = vpop.permute.xlu0 %635
        %v637 = vsel %vm269, %v634, %v636
        %v638 = vsel %vm269, %v636, %v634
        %v639 = vpack.c.bf16 %v638, %v638
        %v640 = vpack.c.bf16 %v637, %v637
        %641 = vrot.lane.b32.xlu0 %v629, 127
        %v642 = vpop.permute.xlu0 %641
        %643 = vrot.lane.b32.xlu0 %v630, 127
        %v644 = vpop.permute.xlu0 %643
        %v645 = vsel %vm278, %v642, %v644
        %v646 = vsel %vm278, %v644, %v642
        %v647 = vpack.c.bf16 %v645, %v645
        %v648 = vpack.c.bf16 %v646, %v646
        %v650 = vsel %vm299, %v242, 0
        %v653 = vsel %vm303, %v639, 0
        %v656 = vsel %vm303, %v640, 0
        %658 = vmatprep.subr.bf16.mxu0 %v656
        %659 = vmatpush1.bf16.msra.mxu0 %v653
        %660 = vmatprep.subr.bf16.mxu0 0
        %661 = vmatpush1.bf16.msra.mxu0 0
        %662 = vmatprep.subr.bf16.mxu0 0
        %663 = vmatpush1.bf16.msra.mxu0 0
        %664 = vmatprep.subr.bf16.mxu0 0
        %665 = vmatpush1.bf16.msra.mxu0 0
        %666 = vmatprep.subr.bf16.mxu0 0
        %667 = vmatpush1.bf16.msra.mxu0 0
        %668 = vmatprep.subr.bf16.mxu0 0
        %669 = vmatpush1.bf16.msra.mxu0 0
        %670 = vmatprep.subr.bf16.mxu0 0
        %671 = vmatpush1.bf16.msra.mxu0 0
        %672 = vmatprep.subr.bf16.mxu0 0
        %673 = vmatpush1.bf16.msra.mxu0 0
        %674 = vmatprep.subr.bf16.mxu0 0
        %675 = vmatpush1.bf16.msra.mxu0 0
        %676 = vmatprep.subr.bf16.mxu0 0
        %677 = vmatpush1.bf16.msra.mxu0 0
        %678 = vmatprep.subr.bf16.mxu0 0
        %679 = vmatpush1.bf16.msra.mxu0 0
        %680 = vmatprep.subr.bf16.mxu0 0
        %681 = vmatpush1.bf16.msra.mxu0 0
        %682 = vmatprep.subr.bf16.mxu0 0
        %683 = vmatpush1.bf16.msra.mxu0 0
        %684 = vmatprep.subr.bf16.mxu0 0
        %685 = vmatpush1.bf16.msra.mxu0 0
        %686 = vmatprep.subr.bf16.mxu0 0
        %687 = vmatpush1.bf16.msra.mxu0 0
        %688 = vmatprep.subr.bf16.mxu0 0
        %689 = vmatpush1.bf16.msra.mxu0 0
        %690 = vmatprep.mubr.bf16.mxu0 0
        %691 = vmatmul.mubr.bf16.gmra.mrb[0].mxu0 %v650
        %v692 = vpop.f32.mrb[0].mxu0
        %v693 = vadd.f32 0.0, %v692
        %v694 = vpop.f32.mrb[0].mxu0
        %v695 = vadd.f32 0.0, %v694
        %v696 = vpop.f32.mrb[0].mxu0
        %v697 = vpop.f32.mrb[0].mxu0
        %698 = vdwg.mxu0
        %v699 = vadd.f32 %v395, %v693
        %v700 = vadd.f32 %v397, %v695
        %704 = vrot.lane.b32.xlu0 %v616, 112
        %v705 = vpop.permute.xlu0 %704
        %706 = vrot.lane.b32.xlu0 %v617, 112
        %v707 = vpop.permute.xlu0 %706
        %708 = vrot.lane.b32.xlu0 %v618, 112
        %v709 = vpop.permute.xlu0 %708
        %vm710 = vcmask 916480
        %v711 = vsel %vm710, %v705, %v707
        %v712 = vsel %vm710, %v707, %v709
        %v714 = vsel %vm299, %v243, 0
        %v717 = vsel %vm303, %v711, 0
        %v720 = vsel %vm303, %v712, 0
        %722 = vmatprep.subr.bf16.mxu0 %v720
        %723 = vmatpush1.bf16.msra.mxu0 %v717
        %724 = vmatprep.subr.bf16.mxu0 0
        %725 = vmatpush1.bf16.msra.mxu0 0
        %726 = vmatprep.subr.bf16.mxu0 0
        %727 = vmatpush1.bf16.msra.mxu0 0
        %728 = vmatprep.subr.bf16.mxu0 0
        %729 = vmatpush1.bf16.msra.mxu0 0
        %730 = vmatprep.subr.bf16.mxu0 0
        %731 = vmatpush1.bf16.msra.mxu0 0
        %732 = vmatprep.subr.bf16.mxu0 0
        %733 = vmatpush1.bf16.msra.mxu0 0
        %734 = vmatprep.subr.bf16.mxu0 0
        %735 = vmatpush1.bf16.msra.mxu0 0
        %736 = vmatprep.subr.bf16.mxu0 0
        %737 = vmatpush1.bf16.msra.mxu0 0
        %738 = vmatprep.subr.bf16.mxu0 0
        %739 = vmatpush1.bf16.msra.mxu0 0
        %740 = vmatprep.subr.bf16.mxu0 0
        %741 = vmatpush1.bf16.msra.mxu0 0
        %742 = vmatprep.subr.bf16.mxu0 0
        %743 = vmatpush1.bf16.msra.mxu0 0
        %744 = vmatprep.subr.bf16.mxu0 0
        %745 = vmatpush1.bf16.msra.mxu0 0
        %746 = vmatprep.subr.bf16.mxu0 0
        %747 = vmatpush1.bf16.msra.mxu0 0
        %748 = vmatprep.subr.bf16.mxu0 0
        %749 = vmatpush1.bf16.msra.mxu0 0
        %750 = vmatprep.subr.bf16.mxu0 0
        %751 = vmatpush1.bf16.msra.mxu0 0
        %752 = vmatprep.subr.bf16.mxu0 0
        %753 = vmatpush1.bf16.msra.mxu0 0
        %754 = vmatprep.mubr.bf16.mxu0 0
        %755 = vmatmul.mubr.bf16.gmra.mrb[0].mxu0 %v714
        %v756 = vpop.f32.mrb[0].mxu0
        %v757 = vadd.f32 0.0, %v756
        %v758 = vpop.f32.mrb[0].mxu0
        %v759 = vadd.f32 0.0, %v758
        %v760 = vpop.f32.mrb[0].mxu0
        %v761 = vpop.f32.mrb[0].mxu0
        %762 = vdwg.mxu0
        %v763 = vadd.f32 %v507, %v757
        %v764 = vadd.f32 %v509, %v759
        %v766 = vsel %vm299, %v244, 0
        %v769 = vsel %vm303, %v647, 0
        %v772 = vsel %vm303, %v648, 0
        %774 = vmatprep.subr.bf16.mxu0 %v772
        %775 = vmatpush1.bf16.msra.mxu0 %v769
        %776 = vmatprep.subr.bf16.mxu0 0
        %777 = vmatpush1.bf16.msra.mxu0 0
        %778 = vmatprep.subr.bf16.mxu0 0
        %779 = vmatpush1.bf16.msra.mxu0 0
        %780 = vmatprep.subr.bf16.mxu0 0
        %781 = vmatpush1.bf16.msra.mxu0 0
        %782 = vmatprep.subr.bf16.mxu0 0
        %783 = vmatpush1.bf16.msra.mxu0 0
        %784 = vmatprep.subr.bf16.mxu0 0
        %785 = vmatpush1.bf16.msra.mxu0 0
        %786 = vmatprep.subr.bf16.mxu0 0
        %787 = vmatpush1.bf16.msra.mxu0 0
        %788 = vmatprep.subr.bf16.mxu0 0
        %789 = vmatpush1.bf16.msra.mxu0 0
        %790 = vmatprep.subr.bf16.mxu0 0
        %791 = vmatpush1.bf16.msra.mxu0 0
        %792 = vmatprep.subr.bf16.mxu0 0
        %793 = vmatpush1.bf16.msra.mxu0 0
        %794 = vmatprep.subr.bf16.mxu0 0
        %795 = vmatpush1.bf16.msra.mxu0 0
        %796 = vmatprep.subr.bf16.mxu0 0
        %797 = vmatpush1.bf16.msra.mxu0 0
        %798 = vmatprep.subr.bf16.mxu0 0
        %799 = vmatpush1.bf16.msra.mxu0 0
        %800 = vmatprep.subr.bf16.mxu0 0
        %801 = vmatpush1.bf16.msra.mxu0 0
        %802 = vmatprep.subr.bf16.mxu0 0
        %803 = vmatpush1.bf16.msra.mxu0 0
        %804 = vmatprep.subr.bf16.mxu0 0
        %805 = vmatpush1.bf16.msra.mxu0 0
        %806 = vmatprep.mubr.bf16.mxu0 0
        %807 = vmatmul.mubr.bf16.gmra.mrb[0].mxu0 %v766
        %v808 = vpop.f32.mrb[0].mxu0
        %v809 = vadd.f32 0.0, %v808
        %v810 = vpop.f32.mrb[0].mxu0
        %v811 = vadd.f32 0.0, %v810
        %v812 = vpop.f32.mrb[0].mxu0
        %v813 = vpop.f32.mrb[0].mxu0
        %814 = vdwg.mxu0
        %v815 = vadd.f32 %v607, %v809
        %v816 = vadd.f32 %v609, %v811
        %v817 = vld [vmem:[%s2] sm:$0xff]
        %v818 = vmul.f32 %v699, %v228
        %v819 = vmul.f32 %v700, %v229
        %v820 = vadd.f32 %v763, %v818
        %v821 = vadd.f32 %v764, %v819
        %v822 = vmul.f32 %v815, %v234
        %v823 = vmul.f32 %v816, %v235
        %v824 = vadd.f32 %v820, %v822
        %v825 = vadd.f32 %v821, %v823
        %827 = vset.pattern.permute.xlu0 0
        %828 = vperm.xlu0 %827, %v817
        %v829 = vpop.permute.xlu0 %828
        %v831 = vadd.f32 %v824, %v829
        %v832 = vadd.f32 %v825, %v829
        %v833 = vadd.f32 %v831, %v832
        %834 = vadd.xlane.f32.xlu0 %v833
        %v835 = vpop.xlane.xlu0 %834
        %v836 = vrcp.pop 256.0
        %v837 = vmul.f32 %v835, %v836
        %v838 = vsub.f32 %v831, %v837
        %v839 = vsub.f32 %v832, %v837
        %v840 = vmul.f32 %v838, %v838
        %v841 = vmul.f32 %v839, %v839
        %v842 = vadd.f32 %v840, %v841
        %843 = vadd.xlane.f32.xlu0 %v842
        %v844 = vpop.xlane.xlu0 %843
        %v845 = vmul.f32 %v844, %v836
        %v846 = vadd.f32 %v845, 1e-05
        %v847 = vrsqrt.pop %v846
        %v848 = vmul.f32 %v817, %v847
        %850 = vset.pattern.permute.xlu0 1
        %851 = vperm.xlu0 %850, %v848
        %v852 = vpop.permute.xlu0 %851
        %v854 = vmul.f32 %v838, %v852
        %v855 = vmul.f32 %v839, %v852
        %856 = vset.pattern.permute.xlu0 2
        %857 = vperm.xlu0 %856, %v817
        %v858 = vpop.permute.xlu0 %857
        %v860 = vadd.f32 %v854, %v858
        %v861 = vadd.f32 %v855, %v858
        %vm862 = vcmp.ge.f32.partialorder %v860, 0.0
        %vm863 = vcmp.ge.f32.partialorder %v861, 0.0
        %864 = vset.pattern.permute.xlu0 3
        %865 = vperm.xlu0 %864, %v817
        %v866 = vpop.permute.xlu0 %865
        %v868 = vmul.f32 %v866, %v860
        %v869 = vmul.f32 %v866, %v861
        %v870 = vsel %vm862, %v860, %v868
        %v871 = vsel %vm863, %v861, %v869
        %872 = vst [vmem:[#allocation2 + $0x48] sm:$0xff] %v870
        %873 = vst [vmem:[#allocation2 + $0x50] sm:$0xff] %v871
        %s874 = scalar_lea.vmem [#allocation3], 36
        %v875 = vld [vmem:[%s874] sm:$0xf]
        %v876 = vld [vmem:[%s874 + $0x4] sm:$0xf]
        %v877 = vld [vmem:[%s874 + $0x8] sm:$0xf]
        %v878 = vld [vmem:[%s874 + $0xc] sm:$0xf]
        %v879 = vld [vmem:[%s874 + $0x10] sm:$0xf]
        %v880 = vld [vmem:[%s874 + $0x14] sm:$0xf]
        %v881 = vld [vmem:[%s874 + $0x18] sm:$0xf]
        %v882 = vld [vmem:[%s874 + $0x1c] sm:$0xf]
        %v883 = vld [vmem:[%s874 + $0x20] sm:$0xf]
        %v884 = vld [vmem:[#allocation2 + $0x40] sm:$0xff]
        %v885 = vld [vmem:[#allocation2 + $0x48] sm:$0xff]
        %v886 = vld [vmem:[#allocation2 + $0x50] sm:$0xff]
        %v887 = vld [vmem:[#allocation2 + $0x60] sm:$0xff]
        %v888 = vld [vmem:[#allocation2 + $0x68] sm:$0xff]
        %v889 = vld [vmem:[#allocation2 + $0x70] sm:$0xff]
        %v890 = vpack.c.bf16 %v887, %v884
        %v891 = vpack.c.bf16 %v888, %v885
        %v892 = vpack.c.bf16 %v889, %v886
        %899 = vrot.lane.b32.xlu0 %v884, 32
        %v900 = vpop.permute.xlu0 %899
        %901 = vrot.lane.b32.xlu0 %v885, 32
        %v902 = vpop.permute.xlu0 %901
        %903 = vrot.lane.b32.xlu0 %v886, 32
        %v904 = vpop.permute.xlu0 %903
        %905 = vrot.lane.b32.xlu0 %v887, 32
        %v906 = vpop.permute.xlu0 %905
        %907 = vrot.lane.b32.xlu0 %v888, 32
        %v908 = vpop.permute.xlu0 %907
        %909 = vrot.lane.b32.xlu0 %v889, 32
        %v910 = vpop.permute.xlu0 %909
        %vm911 = vcmask 261120
        %v912 = vsel %vm911, %v900, %v902
        %v913 = vsel %vm911, %v902, %v904
        %v914 = vsel %vm911, %v906, %v908
        %v915 = vsel %vm911, %v908, %v910
        %920 = vrot.lane.b32.xlu0 %v912, 1
        %v921 = vpop.permute.xlu0 %920
        %922 = vrot.lane.b32.xlu0 %v914, 1
        %v923 = vpop.permute.xlu0 %922
        %924 = vrot.lane.b32.xlu0 %v913, 1
        %v925 = vpop.permute.xlu0 %924
        %926 = vrot.lane.b32.xlu0 %v915, 1
        %v927 = vpop.permute.xlu0 %926
        %v928 = vsel %vm269, %v921, %v925
        %v929 = vsel %vm269, %v923, %v927
        %v930 = vsel %vm269, %v925, %v921
        %v931 = vsel %vm269, %v927, %v923
        %v932 = vpack.c.bf16 %v931, %v930
        %v933 = vpack.c.bf16 %v929, %v928
        %934 = vrot.lane.b32.xlu0 %v912, 127
        %v935 = vpop.permute.xlu0 %934
        %936 = vrot.lane.b32.xlu0 %v914, 127
        %v937 = vpop.permute.xlu0 %936
        %938 = vrot.lane.b32.xlu0 %v913, 127
        %v939 = vpop.permute.xlu0 %938
        %940 = vrot.lane.b32.xlu0 %v915, 127
        %v941 = vpop.permute.xlu0 %940
        %v942 = vsel %vm278, %v935, %v939
        %v943 = vsel %vm278, %v937, %v941
        %v944 = vsel %vm278, %v939, %v935
        %v945 = vsel %vm278, %v941, %v937
        %v946 = vpack.c.bf16 %v943, %v942
        %v947 = vpack.c.bf16 %v945, %v944
        %948 = vrot.lane.b32.xlu0 %v885, 1
        %v949 = vpop.permute.xlu0 %948
        %950 = vrot.lane.b32.xlu0 %v888, 1
        %v951 = vpop.permute.xlu0 %950
        %952 = vrot.lane.b32.xlu0 %v886, 1
        %v953 = vpop.permute.xlu0 %952
        %954 = vrot.lane.b32.xlu0 %v889, 1
        %v955 = vpop.permute.xlu0 %954
        %v956 = vsel %vm269, %v949, %v953
        %v957 = vsel %vm269, %v951, %v955
        %v958 = vsel %vm269, %v953, %v949
        %v959 = vsel %vm269, %v955, %v951
        %v960 = vpack.c.bf16 %v959, %v958
        %v961 = vpack.c.bf16 %v957, %v956
        %962 = vrot.lane.b32.xlu0 %v885, 127
        %v963 = vpop.permute.xlu0 %962
        %964 = vrot.lane.b32.xlu0 %v888, 127
        %v965 = vpop.permute.xlu0 %964
        %966 = vrot.lane.b32.xlu0 %v886, 127
        %v967 = vpop.permute.xlu0 %966
        %968 = vrot.lane.b32.xlu0 %v889, 127
        %v969 = vpop.permute.xlu0 %968
        %v970 = vsel %vm278, %v963, %v967
        %v971 = vsel %vm278, %v965, %v969
        %v972 = vsel %vm278, %v967, %v963
        %v973 = vsel %vm278, %v969, %v965
        %v974 = vpack.c.bf16 %v971, %v970
        %v975 = vpack.c.bf16 %v973, %v972
        %v977 = vsel %vm260, %v878, 0
        %979 = vmatprep.subr.bf16.mxu0 %v961
        %980 = vmatpush1.bf16.msra.mxu0 %v960
        %981 = vmatprep.subr.bf16.mxu0 0
        %982 = vmatpush1.bf16.msra.mxu0 0
        %983 = vmatprep.subr.bf16.mxu0 0
        %984 = vmatpush1.bf16.msra.mxu0 0
        %985 = vmatprep.subr.bf16.mxu0 0
        %986 = vmatpush1.bf16.msra.mxu0 0
        %987 = vmatprep.subr.bf16.mxu0 0
        %988 = vmatpush1.bf16.msra.mxu0 0
        %989 = vmatprep.subr.bf16.mxu0 0
        %990 = vmatpush1.bf16.msra.mxu0 0
        %991 = vmatprep.subr.bf16.mxu0 0
        %992 = vmatpush1.bf16.msra.mxu0 0
        %993 = vmatprep.subr.bf16.mxu0 0
        %994 = vmatpush1.bf16.msra.mxu0 0
        %995 = vmatprep.subr.bf16.mxu0 0
        %996 = vmatpush1.bf16.msra.mxu0 0
        %997 = vmatprep.subr.bf16.mxu0 0
        %998 = vmatpush1.bf16.msra.mxu0 0
        %999 = vmatprep.subr.bf16.mxu0 0
        %1000 = vmatpush1.bf16.msra.mxu0 0
        %1001 = vmatprep.subr.bf16.mxu0 0
        %1002 = vmatpush1.bf16.msra.mxu0 0
        %1003 = vmatprep.subr.bf16.mxu0 0
        %1004 = vmatpush1.bf16.msra.mxu0 0
        %1005 = vmatprep.subr.bf16.mxu0 0
        %1006 = vmatpush1.bf16.msra.mxu0 0
        %1007 = vmatprep.subr.bf16.mxu0 0
        %1008 = vmatpush1.bf16.msra.mxu0 0
        %1009 = vmatprep.subr.bf16.mxu0 0
        %1010 = vmatpush1.bf16.msra.mxu0 0
        %1011 = vmatprep.mubr.bf16.mxu0 0
        %1012 = vmatmul.mubr.bf16.gmra.mrb[0].mxu0 %v977
        %v1013 = vpop.f32.mrb[0].mxu0
        %v1014 = vadd.f32 0.0, %v1013
        %v1015 = vpop.f32.mrb[0].mxu0
        %v1016 = vadd.f32 0.0, %v1015
        %v1017 = vpop.f32.mrb[0].mxu0
        %v1018 = vpop.f32.mrb[0].mxu0
        %1019 = vdwg.mxu0
        %v1021 = vsel %vm260, %v875, 0
        %1023 = vmatprep.subr.bf16.mxu0 %v933
        %1024 = vmatpush1.bf16.msra.mxu0 %v932
        %1025 = vmatprep.subr.bf16.mxu0 0
        %1026 = vmatpush1.bf16.msra.mxu0 0
        %1027 = vmatprep.subr.bf16.mxu0 0
        %1028 = vmatpush1.bf16.msra.mxu0 0
        %1029 = vmatprep.subr.bf16.mxu0 0
        %1030 = vmatpush1.bf16.msra.mxu0 0
        %1031 = vmatprep.subr.bf16.mxu0 0
        %1032 = vmatpush1.bf16.msra.mxu0 0
        %1033 = vmatprep.subr.bf16.mxu0 0
        %1034 = vmatpush1.bf16.msra.mxu0 0
        %1035 = vmatprep.subr.bf16.mxu0 0
        %1036 = vmatpush1.bf16.msra.mxu0 0
        %1037 = vmatprep.subr.bf16.mxu0 0
        %1038 = vmatpush1.bf16.msra.mxu0 0
        %1039 = vmatprep.subr.bf16.mxu0 0
        %1040 = vmatpush1.bf16.msra.mxu0 0
        %1041 = vmatprep.subr.bf16.mxu0 0
        %1042 = vmatpush1.bf16.msra.mxu0 0
        %1043 = vmatprep.subr.bf16.mxu0 0
        %1044 = vmatpush1.bf16.msra.mxu0 0
        %1045 = vmatprep.subr.bf16.mxu0 0
        %1046 = vmatpush1.bf16.msra.mxu0 0
        %1047 = vmatprep.subr.bf16.mxu0 0
        %1048 = vmatpush1.bf16.msra.mxu0 0
        %1049 = vmatprep.subr.bf16.mxu0 0
        %1050 = vmatpush1.bf16.msra.mxu0 0
        %1051 = vmatprep.subr.bf16.mxu0 0
        %1052 = vmatpush1.bf16.msra.mxu0 0
        %1053 = vmatprep.subr.bf16.mxu0 0
        %1054 = vmatpush1.bf16.msra.mxu0 0
        %1055 = vmatprep.mubr.bf16.mxu0 0
        %1056 = vmatmul.mubr.bf16.gmra.mrb[0].mxu0 %v1021
        %v1057 = vpop.f32.mrb[0].mxu0
        %v1058 = vadd.f32 %v1014, %v1057
        %v1059 = vpop.f32.mrb[0].mxu0
        %v1060 = vadd.f32 %v1016, %v1059
        %v1061 = vpop.f32.mrb[0].mxu0
        %v1062 = vpop.f32.mrb[0].mxu0
        %1063 = vdwg.mxu0
        %v1065 = vsel %vm260, %v879, 0
        %1067 = vmatprep.subr.bf16.mxu0 %v892
        %1068 = vmatpush1.bf16.msra.mxu0 %v891
        %1069 = vmatprep.subr.bf16.mxu0 0
        %1070 = vmatpush1.bf16.msra.mxu0 0
        %1071 = vmatprep.subr.bf16.mxu0 0
        %1072 = vmatpush1.bf16.msra.mxu0 0
        %1073 = vmatprep.subr.bf16.mxu0 0
        %1074 = vmatpush1.bf16.msra.mxu0 0
        %1075 = vmatprep.subr.bf16.mxu0 0
        %1076 = vmatpush1.bf16.msra.mxu0 0
        %1077 = vmatprep.subr.bf16.mxu0 0
        %1078 = vmatpush1.bf16.msra.mxu0 0
        %1079 = vmatprep.subr.bf16.mxu0 0
        %1080 = vmatpush1.bf16.msra.mxu0 0
        %1081 = vmatprep.subr.bf16.mxu0 0
        %1082 = vmatpush1.bf16.msra.mxu0 0
        %1083 = vmatprep.subr.bf16.mxu0 0
        %1084 = vmatpush1.bf16.msra.mxu0 0
        %1085 = vmatprep.subr.bf16.mxu0 0
        %1086 = vmatpush1.bf16.msra.mxu0 0
        %1087 = vmatprep.subr.bf16.mxu0 0
        %1088 = vmatpush1.bf16.msra.mxu0 0
        %1089 = vmatprep.subr.bf16.mxu0 0
        %1090 = vmatpush1.bf16.msra.mxu0 0
        %1091 = vmatprep.subr.bf16.mxu0 0
        %1092 = vmatpush1.bf16.msra.mxu0 0
        %1093 = vmatprep.subr.bf16.mxu0 0
        %1094 = vmatpush1.bf16.msra.mxu0 0
        %1095 = vmatprep.subr.bf16.mxu0 0
        %1096 = vmatpush1.bf16.msra.mxu0 0
        %1097 = vmatprep.subr.bf16.mxu0 0
        %1098 = vmatpush1.bf16.msra.mxu0 0
        %1099 = vmatprep.mubr.bf16.mxu0 0
        %1100 = vmatmul.mubr.bf16.gmra.mrb[0].mxu0 %v1065
        %v1101 = vpop.f32.mrb[0].mxu0
        %v1102 = vadd.f32 0.0, %v1101
        %v1103 = vpop.f32.mrb[0].mxu0
        %v1104 = vadd.f32 0.0, %v1103
        %v1105 = vpop.f32.mrb[0].mxu0
        %v1106 = vpop.f32.mrb[0].mxu0
        %1107 = vdwg.mxu0
        %1111 = vrot.lane.b32.xlu0 %v890, 32
        %v1112 = vpop.permute.xlu0 %1111
        %1113 = vrot.lane.b32.xlu0 %v891, 32
        %v1114 = vpop.permute.xlu0 %1113
        %1115 = vrot.lane.b32.xlu0 %v892, 32
        %v1116 = vpop.permute.xlu0 %1115
        %vm1117 = vcmask 261120
        %v1118 = vsel %vm1117, %v1112, %v1114
        %v1119 = vsel %vm1117, %v1114, %v1116
        %v1123 = vsel %vm260, %v876, 0
        %1125 = vmatprep.subr.bf16.mxu0 %v1119
        %1126 = vmatpush1.bf16.msra.mxu0 %v1118
        %1127 = vmatprep.subr.bf16.mxu0 0
        %1128 = vmatpush1.bf16.msra.mxu0 0
        %1129 = vmatprep.subr.bf16.mxu0 0
        %1130 = vmatpush1.bf16.msra.mxu0 0
        %1131 = vmatprep.subr.bf16.mxu0 0
        %1132 = vmatpush1.bf16.msra.mxu0 0
        %1133 = vmatprep.subr.bf16.mxu0 0
        %1134 = vmatpush1.bf16.msra.mxu0 0
        %1135 = vmatprep.subr.bf16.mxu0 0
        %1136 = vmatpush1.bf16.msra.mxu0 0
        %1137 = vmatprep.subr.bf16.mxu0 0
        %1138 = vmatpush1.bf16.msra.mxu0 0
        %1139 = vmatprep.subr.bf16.mxu0 0
        %1140 = vmatpush1.bf16.msra.mxu0 0
        %1141 = vmatprep.subr.bf16.mxu0 0
        %1142 = vmatpush1.bf16.msra.mxu0 0
        %1143 = vmatprep.subr.bf16.mxu0 0
        %1144 = vmatpush1.bf16.msra.mxu0 0
        %1145 = vmatprep.subr.bf16.mxu0 0
        %1146 = vmatpush1.bf16.msra.mxu0 0
        %1147 = vmatprep.subr.bf16.mxu0 0
        %1148 = vmatpush1.bf16.msra.mxu0 0
        %1149 = vmatprep.subr.bf16.mxu0 0
        %1150 = vmatpush1.bf16.msra.mxu0 0
        %1151 = vmatprep.subr.bf16.mxu0 0
        %1152 = vmatpush1.bf16.msra.mxu0 0
        %1153 = vmatprep.subr.bf16.mxu0 0
        %1154 = vmatpush1.bf16.msra.mxu0 0
        %1155 = vmatprep.subr.bf16.mxu0 0
        %1156 = vmatpush1.bf16.msra.mxu0 0
        %1157 = vmatprep.mubr.bf16.mxu0 0
        %1158 = vmatmul.mubr.bf16.gmra.mrb[0].mxu0 %v1123
        %v1159 = vpop.f32.mrb[0].mxu0
        %v1160 = vadd.f32 %v1102, %v1159
        %v1161 = vpop.f32.mrb[0].mxu0
        %v1162 = vadd.f32 %v1104, %v1161
        %v1163 = vpop.f32.mrb[0].mxu0
        %v1164 = vpop.f32.mrb[0].mxu0
        %1165 = vdwg.mxu0
        %v1167 = vsel %vm260, %v880, 0
        %1169 = vmatprep.subr.bf16.mxu0 %v975
        %1170 = vmatpush1.bf16.msra.mxu0 %v974
        %1171 = vmatprep.subr.bf16.mxu0 0
        %1172 = vmatpush1.bf16.msra.mxu0 0
        %1173 = vmatprep.subr.bf16.mxu0 0
        %1174 = vmatpush1.bf16.msra.mxu0 0
        %1175 = vmatprep.subr.bf16.mxu0 0
        %1176 = vmatpush1.bf16.msra.mxu0 0
        %1177 = vmatprep.subr.bf16.mxu0 0
        %1178 = vmatpush1.bf16.msra.mxu0 0
        %1179 = vmatprep.subr.bf16.mxu0 0
        %1180 = vmatpush1.bf16.msra.mxu0 0
        %1181 = vmatprep.subr.bf16.mxu0 0
        %1182 = vmatpush1.bf16.msra.mxu0 0
        %1183 = vmatprep.subr.bf16.mxu0 0
        %1184 = vmatpush1.bf16.msra.mxu0 0
        %1185 = vmatprep.subr.bf16.mxu0 0
        %1186 = vmatpush1.bf16.msra.mxu0 0
        %1187 = vmatprep.subr.bf16.mxu0 0
        %1188 = vmatpush1.bf16.msra.mxu0 0
        %1189 = vmatprep.subr.bf16.mxu0 0
        %1190 = vmatpush1.bf16.msra.mxu0 0
        %1191 = vmatprep.subr.bf16.mxu0 0
        %1192 = vmatpush1.bf16.msra.mxu0 0
        %1193 = vmatprep.subr.bf16.mxu0 0
        %1194 = vmatpush1.bf16.msra.mxu0 0
        %1195 = vmatprep.subr.bf16.mxu0 0
        %1196 = vmatpush1.bf16.msra.mxu0 0
        %1197 = vmatprep.subr.bf16.mxu0 0
        %1198 = vmatpush1.bf16.msra.mxu0 0
        %1199 = vmatprep.subr.bf16.mxu0 0
        %1200 = vmatpush1.bf16.msra.mxu0 0
        %1201 = vmatprep.mubr.bf16.mxu0 0
        %1202 = vmatmul.mubr.bf16.gmra.mrb[0].mxu0 %v1167
        %v1203 = vpop.f32.mrb[0].mxu0
        %v1204 = vadd.f32 0.0, %v1203
        %v1205 = vpop.f32.mrb[0].mxu0
        %v1206 = vadd.f32 0.0, %v1205
        %v1207 = vpop.f32.mrb[0].mxu0
        %v1208 = vpop.f32.mrb[0].mxu0
        %1209 = vdwg.mxu0
        %v1211 = vsel %vm260, %v877, 0
        %1213 = vmatprep.subr.bf16.mxu0 %v947
        %1214 = vmatpush1.bf16.msra.mxu0 %v946
        %1215 = vmatprep.subr.bf16.mxu0 0
        %1216 = vmatpush1.bf16.msra.mxu0 0
        %1217 = vmatprep.subr.bf16.mxu0 0
        %1218 = vmatpush1.bf16.msra.mxu0 0
        %1219 = vmatprep.subr.bf16.mxu0 0
        %1220 = vmatpush1.bf16.msra.mxu0 0
        %1221 = vmatprep.subr.bf16.mxu0 0
        %1222 = vmatpush1.bf16.msra.mxu0 0
        %1223 = vmatprep.subr.bf16.mxu0 0
        %1224 = vmatpush1.bf16.msra.mxu0 0
        %1225 = vmatprep.subr.bf16.mxu0 0
        %1226 = vmatpush1.bf16.msra.mxu0 0
        %1227 = vmatprep.subr.bf16.mxu0 0
        %1228 = vmatpush1.bf16.msra.mxu0 0
        %1229 = vmatprep.subr.bf16.mxu0 0
        %1230 = vmatpush1.bf16.msra.mxu0 0
        %1231 = vmatprep.subr.bf16.mxu0 0
        %1232 = vmatpush1.bf16.msra.mxu0 0
        %1233 = vmatprep.subr.bf16.mxu0 0
        %1234 = vmatpush1.bf16.msra.mxu0 0
        %1235 = vmatprep.subr.bf16.mxu0 0
        %1236 = vmatpush1.bf16.msra.mxu0 0
        %1237 = vmatprep.subr.bf16.mxu0 0
        %1238 = vmatpush1.bf16.msra.mxu0 0
        %1239 = vmatprep.subr.bf16.mxu0 0
        %1240 = vmatpush1.bf16.msra.mxu0 0
        %1241 = vmatprep.subr.bf16.mxu0 0
        %1242 = vmatpush1.bf16.msra.mxu0 0
        %1243 = vmatprep.subr.bf16.mxu0 0
        %1244 = vmatpush1.bf16.msra.mxu0 0
        %1245 = vmatprep.mubr.bf16.mxu0 0
        %1246 = vmatmul.mubr.bf16.gmra.mrb[0].mxu0 %v1211
        %v1247 = vpop.f32.mrb[0].mxu0
        %v1248 = vadd.f32 %v1204, %v1247
        %v1249 = vpop.f32.mrb[0].mxu0
        %v1250 = vadd.f32 %v1206, %v1249
        %v1251 = vpop.f32.mrb[0].mxu0
        %v1252 = vpop.f32.mrb[0].mxu0
        %1253 = vdwg.mxu0
        %v1254 = vld [vmem:[#allocation2 + $0x48] sm:$0xff]
        %v1255 = vld [vmem:[#allocation2 + $0x50] sm:$0xff]
        %v1256 = vld [vmem:[#allocation2 + $0x58] sm:$0xff]
        %v1257 = vld [vmem:[#allocation2 + $0x68] sm:$0xff]
        %v1258 = vld [vmem:[#allocation2 + $0x70] sm:$0xff]
        %v1259 = vld [vmem:[#allocation2 + $0x78] sm:$0xff]
        %v1260 = vpack.c.bf16 %v1257, %v1254
        %v1261 = vpack.c.bf16 %v1258, %v1255
        %v1262 = vpack.c.bf16 %v1259, %v1256
        %1269 = vrot.lane.b32.xlu0 %v1254, 96
        %v1270 = vpop.permute.xlu0 %1269
        %1271 = vrot.lane.b32.xlu0 %v1255, 96
        %v1272 = vpop.permute.xlu0 %1271
        %1273 = vrot.lane.b32.xlu0 %v1256, 96
        %v1274 = vpop.permute.xlu0 %1273
        %1275 = vrot.lane.b32.xlu0 %v1257, 96
        %v1276 = vpop.permute.xlu0 %1275
        %1277 = vrot.lane.b32.xlu0 %v1258, 96
        %v1278 = vpop.permute.xlu0 %1277
        %1279 = vrot.lane.b32.xlu0 %v1259, 96
        %v1280 = vpop.permute.xlu0 %1279
        %vm1281 = vcmask 785408
        %v1282 = vsel %vm1281, %v1270, %v1272
        %v1283 = vsel %vm1281, %v1272, %v1274
        %v1284 = vsel %vm1281, %v1276, %v1278
        %v1285 = vsel %vm1281, %v1278, %v1280
        %1290 = vrot.lane.b32.xlu0 %v1282, 1
        %v1291 = vpop.permute.xlu0 %1290
        %1292 = vrot.lane.b32.xlu0 %v1284, 1
        %v1293 = vpop.permute.xlu0 %1292
        %1294 = vrot.lane.b32.xlu0 %v1283, 1
        %v1295 = vpop.permute.xlu0 %1294
        %1296 = vrot.lane.b32.xlu0 %v1285, 1
        %v1297 = vpop.permute.xlu0 %1296
        %v1298 = vsel %vm269, %v1291, %v1295
        %v1299 = vsel %vm269, %v1293, %v1297
        %v1300 = vsel %vm269, %v1295, %v1291
        %v1301 = vsel %vm269, %v1297, %v1293
        %v1302 = vpack.c.bf16 %v1301, %v1300
        %v1303 = vpack.c.bf16 %v1299, %v1298
        %1304 = vrot.lane.b32.xlu0 %v1282, 127
        %v1305 = vpop.permute.xlu0 %1304
        %1306 = vrot.lane.b32.xlu0 %v1284, 127
        %v1307 = vpop.permute.xlu0 %1306
        %1308 = vrot.lane.b32.xlu0 %v1283, 127
        %v1309 = vpop.permute.xlu0 %1308
        %1310 = vrot.lane.b32.xlu0 %v1285, 127
        %v1311 = vpop.permute.xlu0 %1310
        %v1312 = vsel %vm278, %v1305, %v1309
        %v1313 = vsel %vm278, %v1307, %v1311
        %v1314 = vsel %vm278, %v1309, %v1305
        %v1315 = vsel %vm278, %v1311, %v1307
        %v1316 = vpack.c.bf16 %v1313, %v1312
        %v1317 = vpack.c.bf16 %v1315, %v1314
        %v1319 = vsel %vm260, %v881, 0
        %1321 = vmatprep.subr.bf16.mxu0 %v1303
        %1322 = vmatpush1.bf16.msra.mxu0 %v1302
        %1323 = vmatprep.subr.bf16.mxu0 0
        %1324 = vmatpush1.bf16.msra.mxu0 0
        %1325 = vmatprep.subr.bf16.mxu0 0
        %1326 = vmatpush1.bf16.msra.mxu0 0
        %1327 = vmatprep.subr.bf16.mxu0 0
        %1328 = vmatpush1.bf16.msra.mxu0 0
        %1329 = vmatprep.subr.bf16.mxu0 0
        %1330 = vmatpush1.bf16.msra.mxu0 0
        %1331 = vmatprep.subr.bf16.mxu0 0
        %1332 = vmatpush1.bf16.msra.mxu0 0
        %1333 = vmatprep.subr.bf16.mxu0 0
        %1334 = vmatpush1.bf16.msra.mxu0 0
        %1335 = vmatprep.subr.bf16.mxu0 0
        %1336 = vmatpush1.bf16.msra.mxu0 0
        %1337 = vmatprep.subr.bf16.mxu0 0
        %1338 = vmatpush1.bf16.msra.mxu0 0
        %1339 = vmatprep.subr.bf16.mxu0 0
        %1340 = vmatpush1.bf16.msra.mxu0 0
        %1341 = vmatprep.subr.bf16.mxu0 0
        %1342 = vmatpush1.bf16.msra.mxu0 0
        %1343 = vmatprep.subr.bf16.mxu0 0
        %1344 = vmatpush1.bf16.msra.mxu0 0
        %1345 = vmatprep.subr.bf16.mxu0 0
        %1346 = vmatpush1.bf16.msra.mxu0 0
        %1347 = vmatprep.subr.bf16.mxu0 0
        %1348 = vmatpush1.bf16.msra.mxu0 0
        %1349 = vmatprep.subr.bf16.mxu0 0
        %1350 = vmatpush1.bf16.msra.mxu0 0
        %1351 = vmatprep.subr.bf16.mxu0 0
        %1352 = vmatpush1.bf16.msra.mxu0 0
        %1353 = vmatprep.mubr.bf16.mxu0 0
        %1354 = vmatmul.mubr.bf16.gmra.mrb[0].mxu0 %v1319
        %v1355 = vpop.f32.mrb[0].mxu0
        %v1356 = vadd.f32 0.0, %v1355
        %v1357 = vpop.f32.mrb[0].mxu0
        %v1358 = vadd.f32 0.0, %v1357
        %v1359 = vpop.f32.mrb[0].mxu0
        %v1360 = vpop.f32.mrb[0].mxu0
        %1361 = vdwg.mxu0
        %v1362 = vadd.f32 %v1058, %v1356
        %v1363 = vadd.f32 %v1060, %v1358
        %1367 = vrot.lane.b32.xlu0 %v1260, 96
        %v1368 = vpop.permute.xlu0 %1367
        %1369 = vrot.lane.b32.xlu0 %v1261, 96
        %v1370 = vpop.permute.xlu0 %1369
        %1371 = vrot.lane.b32.xlu0 %v1262, 96
        %v1372 = vpop.permute.xlu0 %1371
        %vm1373 = vcmask 785408
        %v1374 = vsel %vm1373, %v1368, %v1370
        %v1375 = vsel %vm1373, %v1370, %v1372
        %v1379 = vsel %vm260, %v882, 0
        %1381 = vmatprep.subr.bf16.mxu0 %v1375
        %1382 = vmatpush1.bf16.msra.mxu0 %v1374
        %1383 = vmatprep.subr.bf16.mxu0 0
        %1384 = vmatpush1.bf16.msra.mxu0 0
        %1385 = vmatprep.subr.bf16.mxu0 0
        %1386 = vmatpush1.bf16.msra.mxu0 0
        %1387 = vmatprep.subr.bf16.mxu0 0
        %1388 = vmatpush1.bf16.msra.mxu0 0
        %1389 = vmatprep.subr.bf16.mxu0 0
        %1390 = vmatpush1.bf16.msra.mxu0 0
        %1391 = vmatprep.subr.bf16.mxu0 0
        %1392 = vmatpush1.bf16.msra.mxu0 0
        %1393 = vmatprep.subr.bf16.mxu0 0
        %1394 = vmatpush1.bf16.msra.mxu0 0
        %1395 = vmatprep.subr.bf16.mxu0 0
        %1396 = vmatpush1.bf16.msra.mxu0 0
        %1397 = vmatprep.subr.bf16.mxu0 0
        %1398 = vmatpush1.bf16.msra.mxu0 0
        %1399 = vmatprep.subr.bf16.mxu0 0
        %1400 = vmatpush1.bf16.msra.mxu0 0
        %1401 = vmatprep.subr.bf16.mxu0 0
        %1402 = vmatpush1.bf16.msra.mxu0 0
        %1403 = vmatprep.subr.bf16.mxu0 0
        %1404 = vmatpush1.bf16.msra.mxu0 0
        %1405 = vmatprep.subr.bf16.mxu0 0
        %1406 = vmatpush1.bf16.msra.mxu0 0
        %1407 = vmatprep.subr.bf16.mxu0 0
        %1408 = vmatpush1.bf16.msra.mxu0 0
        %1409 = vmatprep.subr.bf16.mxu0 0
        %1410 = vmatpush1.bf16.msra.mxu0 0
        %1411 = vmatprep.subr.bf16.mxu0 0
        %1412 = vmatpush1.bf16.msra.mxu0 0
        %1413 = vmatprep.mubr.bf16.mxu0 0
        %1414 = vmatmul.mubr.bf16.gmra.mrb[0].mxu0 %v1379
        %v1415 = vpop.f32.mrb[0].mxu0
        %v1416 = vadd.f32 0.0, %v1415
        %v1417 = vpop.f32.mrb[0].mxu0
        %v1418 = vadd.f32 0.0, %v1417
        %v1419 = vpop.f32.mrb[0].mxu0
        %v1420 = vpop.f32.mrb[0].mxu0
        %1421 = vdwg.mxu0
        %v1422 = vadd.f32 %v1160, %v1416
        %v1423 = vadd.f32 %v1162, %v1418
        %v1425 = vsel %vm260, %v883, 0
        %1427 = vmatprep.subr.bf16.mxu0 %v1317
        %1428 = vmatpush1.bf16.msra.mxu0 %v1316
        %1429 = vmatprep.subr.bf16.mxu0 0
        %1430 = vmatpush1.bf16.msra.mxu0 0
        %1431 = vmatprep.subr.bf16.mxu0 0
        %1432 = vmatpush1.bf16.msra.mxu0 0
        %1433 = vmatprep.subr.bf16.mxu0 0
        %1434 = vmatpush1.bf16.msra.mxu0 0
        %1435 = vmatprep.subr.bf16.mxu0 0
        %1436 = vmatpush1.bf16.msra.mxu0 0
        %1437 = vmatprep.subr.bf16.mxu0 0
        %1438 = vmatpush1.bf16.msra.mxu0 0
        %1439 = vmatprep.subr.bf16.mxu0 0
        %1440 = vmatpush1.bf16.msra.mxu0 0
        %1441 = vmatprep.subr.bf16.mxu0 0
        %1442 = vmatpush1.bf16.msra.mxu0 0
        %1443 = vmatprep.subr.bf16.mxu0 0
        %1444 = vmatpush1.bf16.msra.mxu0 0
        %1445 = vmatprep.subr.bf16.mxu0 0
        %1446 = vmatpush1.bf16.msra.mxu0 0
        %1447 = vmatprep.subr.bf16.mxu0 0
        %1448 = vmatpush1.bf16.msra.mxu0 0
        %1449 = vmatprep.subr.bf16.mxu0 0
        %1450 = vmatpush1.bf16.msra.mxu0 0
        %1451 = vmatprep.subr.bf16.mxu0 0
        %1452 = vmatpush1.bf16.msra.mxu0 0
        %1453 = vmatprep.subr.bf16.mxu0 0
        %1454 = vmatpush1.bf16.msra.mxu0 0
        %1455 = vmatprep.subr.bf16.mxu0 0
        %1456 = vmatpush1.bf16.msra.mxu0 0
        %1457 = vmatprep.subr.bf16.mxu0 0
        %1458 = vmatpush1.bf16.msra.mxu0 0
        %1459 = vmatprep.mubr.bf16.mxu0 0
        %1460 = vmatmul.mubr.bf16.gmra.mrb[0].mxu0 %v1425
        %v1461 = vpop.f32.mrb[0].mxu0
        %v1462 = vadd.f32 0.0, %v1461
        %v1463 = vpop.f32.mrb[0].mxu0
        %v1464 = vadd.f32 0.0, %v1463
        %v1465 = vpop.f32.mrb[0].mxu0
        %v1466 = vpop.f32.mrb[0].mxu0
        %1467 = vdwg.mxu0
        %v1468 = vadd.f32 %v1248, %v1462
        %v1469 = vadd.f32 %v1250, %v1464
        %s1470 = scalar_lea.vmem %s2, 8
        %v1471 = vld [vmem:[%s1470] sm:$0xff]
        %v1472 = vmul.f32 %v1362, %v228
        %v1473 = vmul.f32 %v1363, %v229
        %v1474 = vadd.f32 %v1422, %v1472
        %v1475 = vadd.f32 %v1423, %v1473
        %v1476 = vmul.f32 %v1468, %v234
        %v1477 = vmul.f32 %v1469, %v235
        %v1478 = vadd.f32 %v1474, %v1476
        %v1479 = vadd.f32 %v1475, %v1477
        %1481 = vset.pattern.permute.xlu0 0
        %1482 = vperm.xlu0 %1481, %v1471
        %v1483 = vpop.permute.xlu0 %1482
        %v1485 = vadd.f32 %v1478, %v1483
        %v1486 = vadd.f32 %v1479, %v1483
        %v1487 = vadd.f32 %v1485, %v1486
        %1488 = vadd.xlane.f32.xlu0 %v1487
        %v1489 = vpop.xlane.xlu0 %1488
        %v1490 = vmul.f32 %v1489, %v836
        %v1491 = vsub.f32 %v1485, %v1490
        %v1492 = vsub.f32 %v1486, %v1490
        %v1493 = vmul.f32 %v1491, %v1491
        %v1494 = vmul.f32 %v1492, %v1492
        %v1495 = vadd.f32 %v1493, %v1494
        %1496 = vadd.xlane.f32.xlu0 %v1495
        %v1497 = vpop.xlane.xlu0 %1496
        %v1498 = vmul.f32 %v1497, %v836
        %v1499 = vadd.f32 %v1498, 1e-05
        %v1500 = vrsqrt.pop %v1499
        %v1501 = vmul.f32 %v1471, %v1500
        %1503 = vset.pattern.permute.xlu0 1
        %1504 = vperm.xlu0 %1503, %v1501
        %v1505 = vpop.permute.xlu0 %1504
        %v1507 = vmul.f32 %v1491, %v1505
        %v1508 = vmul.f32 %v1492, %v1505
        %1509 = vset.pattern.permute.xlu0 2
        %1510 = vperm.xlu0 %1509, %v1471
        %v1511 = vpop.permute.xlu0 %1510
        %v1513 = vadd.f32 %v1507, %v1511
        %v1514 = vadd.f32 %v1508, %v1511
        %vm1515 = vcmp.ge.f32.partialorder %v1513, 0.0
        %vm1516 = vcmp.ge.f32.partialorder %v1514, 0.0
        %1517 = vset.pattern.permute.xlu0 3
        %1518 = vperm.xlu0 %1517, %v1471
        %v1519 = vpop.permute.xlu0 %1518
        %v1521 = vmul.f32 %v1519, %v1513
        %v1522 = vmul.f32 %v1519, %v1514
        %v1523 = vsel %vm1515, %v1513, %v1521
        %v1524 = vsel %vm1516, %v1514, %v1522
        %1525 = vst [vmem:[#allocation2 + $0x28] sm:$0xff] %v1523
        %1526 = vst [vmem:[#allocation2 + $0x30] sm:$0xff] %v1524
        %s1527 = scalar_lea.vmem [#allocation3], 72
        %v1528 = vld [vmem:[%s1527] sm:$0xf]
        %v1529 = vld [vmem:[%s1527 + $0x4] sm:$0xf]
        %v1530 = vld [vmem:[%s1527 + $0x8] sm:$0xf]
        %v1531 = vld [vmem:[%s1527 + $0xc] sm:$0xf]
        %v1532 = vld [vmem:[%s1527 + $0x10] sm:$0xf]
        %v1533 = vld [vmem:[%s1527 + $0x14] sm:$0xf]
        %v1534 = vld [vmem:[%s1527 + $0x18] sm:$0xf]
        %v1535 = vld [vmem:[%s1527 + $0x1c] sm:$0xf]
        %v1536 = vld [vmem:[%s1527 + $0x20] sm:$0xf]
        %v1537 = vld [vmem:[#allocation2 + $0x20] sm:$0xff]
        %v1538 = vld [vmem:[#allocation2 + $0x28] sm:$0xff]
        %v1539 = vld [vmem:[#allocation2 + $0x30] sm:$0xff]
        %v1540 = vld [vmem:[#allocation2 + $0x40] sm:$0xff]
        %v1541 = vld [vmem:[#allocation2 + $0x48] sm:$0xff]
        %v1542 = vld [vmem:[#allocation2 + $0x50] sm:$0xff]
        %v1543 = vld [vmem:[#allocation2 + $0x60] sm:$0xff]
        %v1544 = vld [vmem:[#allocation2 + $0x68] sm:$0xff]
        %v1545 = vld [vmem:[#allocation2 + $0x70] sm:$0xff]
        %v1546 = vpack.c.bf16 %v1540, %v1537
        %v1547 = vpack.c.bf16 %v1541, %v1538
        %v1548 = vpack.c.bf16 %v1542, %v1539
        %v1549 = vpack.c.bf16 %v1543, %v1543
        %v1550 = vpack.c.bf16 %v1544, %v1544
        %v1551 = vpack.c.bf16 %v1545, %v1545
        %1561 = vrot.lane.b32.xlu0 %v1537, 64
        %v1562 = vpop.permute.xlu0 %1561
        %1563 = vrot.lane.b32.xlu0 %v1538, 64
        %v1564 = vpop.permute.xlu0 %1563
        %1565 = vrot.lane.b32.xlu0 %v1539, 64
        %v1566 = vpop.permute.xlu0 %1565
        %1567 = vrot.lane.b32.xlu0 %v1540, 64
        %v1568 = vpop.permute.xlu0 %1567
        %1569 = vrot.lane.b32.xlu0 %v1541, 64
        %v1570 = vpop.permute.xlu0 %1569
        %1571 = vrot.lane.b32.xlu0 %v1542, 64
        %v1572 = vpop.permute.xlu0 %1571
        %1573 = vrot.lane.b32.xlu0 %v1543, 64
        %v1574 = vpop.permute.xlu0 %1573
        %1575 = vrot.lane.b32.xlu0 %v1544, 64
        %v1576 = vpop.permute.xlu0 %1575
        %1577 = vrot.lane.b32.xlu0 %v1545, 64
        %v1578 = vpop.permute.xlu0 %1577
        %vm1579 = vcmask 523264
        %v1580 = vsel %vm1579, %v1562, %v1564
        %v1581 = vsel %vm1579, %v1564, %v1566
        %v1582 = vsel %vm1579, %v1568, %v1570
        %v1583 = vsel %vm1579, %v1570, %v1572
        %v1584 = vsel %vm1579, %v1574, %v1576
        %v1585 = vsel %vm1579, %v1576, %v1578
        %1592 = vrot.lane.b32.xlu0 %v1580, 1
        %v1593 = vpop.permute.xlu0 %1592
        %1594 = vrot.lane.b32.xlu0 %v1582, 1
        %v1595 = vpop.permute.xlu0 %1594
        %1596 = vrot.lane.b32.xlu0 %v1584, 1
        %v1597 = vpop.permute.xlu0 %1596
        %1598 = vrot.lane.b32.xlu0 %v1581, 1
        %v1599 = vpop.permute.xlu0 %1598
        %1600 = vrot.lane.b32.xlu0 %v1583, 1
        %v1601 = vpop.permute.xlu0 %1600
        %1602 = vrot.lane.b32.xlu0 %v1585, 1
        %v1603 = vpop.permute.xlu0 %1602
        %v1604 = vsel %vm269, %v1593, %v1599
        %v1605 = vsel %vm269, %v1595, %v1601
        %v1606 = vsel %vm269, %v1597, %v1603
        %v1607 = vsel %vm269, %v1599, %v1593
        %v1608 = vsel %vm269, %v1601, %v1595
        %v1609 = vsel %vm269, %v1603, %v1597
        %v1610 = vpack.c.bf16 %v1608, %v1607
        %v1611 = vpack.c.bf16 %v1605, %v1604
        %v1612 = vpack.c.bf16 %v1609, %v1609
        %v1613 = vpack.c.bf16 %v1606, %v1606
        %1614 = vrot.lane.b32.xlu0 %v1580, 127
        %v1615 = vpop.permute.xlu0 %1614
        %1616 = vrot.lane.b32.xlu0 %v1582, 127
        %v1617 = vpop.permute.xlu0 %1616
        %1618 = vrot.lane.b32.xlu0 %v1584, 127
        %v1619 = vpop.permute.xlu0 %1618
        %1620 = vrot.lane.b32.xlu0 %v1581, 127
        %v1621 = vpop.permute.xlu0 %1620
        %1622 = vrot.lane.b32.xlu0 %v1583, 127
        %v1623 = vpop.permute.xlu0 %1622
        %1624 = vrot.lane.b32.xlu0 %v1585, 127
        %v1625 = vpop.permute.xlu0 %1624
        %v1626 = vsel %vm278, %v1615, %v1621
        %v1627 = vsel %vm278, %v1617, %v1623
        %v1628 = vsel %vm278, %v1619, %v1625
        %v1629 = vsel %vm278, %v1621, %v1615
        %v1630 = vsel %vm278, %v1623, %v1617
        %v1631 = vsel %vm278, %v1625, %v1619
        %v1632 = vpack.c.bf16 %v1627, %v1626
        %v1633 = vpack.c.bf16 %v1630, %v1629
        %v1634 = vpack.c.bf16 %v1628, %v1628
        %v1635 = vpack.c.bf16 %v1631, %v1631
        %1636 = vrot.lane.b32.xlu0 %v1538, 1
        %v1637 = vpop.permute.xlu0 %1636
        %1638 = vrot.lane.b32.xlu0 %v1541, 1
        %v1639 = vpop.permute.xlu0 %1638
        %1640 = vrot.lane.b32.xlu0 %v1544, 1
        %v1641 = vpop.permute.xlu0 %1640
        %1642 = vrot.lane.b32.xlu0 %v1539, 1
        %v1643 = vpop.permute.xlu0 %1642
        %1644 = vrot.lane.b32.xlu0 %v1542, 1
        %v1645 = vpop.permute.xlu0 %1644
        %1646 = vrot.lane.b32.xlu0 %v1545, 1
        %v1647 = vpop.permute.xlu0 %1646
        %v1648 = vsel %vm269, %v1637, %v1643
        %v1649 = vsel %vm269, %v1639, %v1645
        %v1650 = vsel %vm269, %v1641, %v1647
        %v1651 = vsel %vm269, %v1643, %v1637
        %v1652 = vsel %vm269, %v1645, %v1639
        %v1653 = vsel %vm269, %v1647, %v1641
        %v1654 = vpack.c.bf16 %v1652, %v1651
        %v1655 = vpack.c.bf16 %v1649, %v1648
        %v1656 = vpack.c.bf16 %v1653, %v1653
        %v1657 = vpack.c.bf16 %v1650, %v1650
        %1658 = vrot.lane.b32.xlu0 %v1538, 127
        %v1659 = vpop.permute.xlu0 %1658
        %1660 = vrot.lane.b32.xlu0 %v1541, 127
        %v1661 = vpop.permute.xlu0 %1660
        %1662 = vrot.lane.b32.xlu0 %v1544, 127
        %v1663 = vpop.permute.xlu0 %1662
        %1664 = vrot.lane.b32.xlu0 %v1539, 127
        %v1665 = vpop.permute.xlu0 %1664
        %1666 = vrot.lane.b32.xlu0 %v1542, 127
        %v1667 = vpop.permute.xlu0 %1666
        %1668 = vrot.lane.b32.xlu0 %v1545, 127
        %v1669 = vpop.permute.xlu0 %1668
        %v1670 = vsel %vm278, %v1659, %v1665
        %v1671 = vsel %vm278, %v1661, %v1667
        %v1672 = vsel %vm278, %v1663, %v1669
        %v1673 = vsel %vm278, %v1665, %v1659
        %v1674 = vsel %vm278, %v1667, %v1661
        %v1675 = vsel %vm278, %v1669, %v1663
        %v1676 = vpack.c.bf16 %v1671, %v1670
        %v1677 = vpack.c.bf16 %v1674, %v1673
        %v1678 = vpack.c.bf16 %v1672, %v1672
        %v1679 = vpack.c.bf16 %v1675, %v1675
        %vm1680 = vcmask 195584
        %v1682 = vsel %vm1680, %v1531, 0
        %v1685 = vsel %vm303, %v1656, 0
        %v1688 = vsel %vm303, %v1657, 0
        %1690 = vmatprep.subr.bf16.mxu0 %v1655
        %1691 = vmatpush1.bf16.msra.mxu0 %v1654
        %1692 = vmatprep.subr.bf16.mxu0 %v1688
        %1693 = vmatpush1.bf16.msra.mxu0 %v1685
        %1694 = vmatprep.subr.bf16.mxu0 0
        %1695 = vmatpush1.bf16.msra.mxu0 0
        %1696 = vmatprep.subr.bf16.mxu0 0
        %1697 = vmatpush1.bf16.msra.mxu0 0
        %1698 = vmatprep.subr.bf16.mxu0 0
        %1699 = vmatpush1.bf16.msra.mxu0 0
        %1700 = vmatprep.subr.bf16.mxu0 0
        %1701 = vmatpush1.bf16.msra.mxu0 0
        %1702 = vmatprep.subr.bf16.mxu0 0
        %1703 = vmatpush1.bf16.msra.mxu0 0
        %1704 = vmatprep.subr.bf16.mxu0 0
        %1705 = vmatpush1.bf16.msra.mxu0 0
        %1706 = vmatprep.subr.bf16.mxu0 0
        %1707 = vmatpush1.bf16.msra.mxu0 0
        %1708 = vmatprep.subr.bf16.mxu0 0
        %1709 = vmatpush1.bf16.msra.mxu0 0
        %1710 = vmatprep.subr.bf16.mxu0 0
        %1711 = vmatpush1.bf16.msra.mxu0 0
        %1712 = vmatprep.subr.bf16.mxu0 0
        %1713 = vmatpush1.bf16.msra.mxu0 0
        %1714 = vmatprep.subr.bf16.mxu0 0
        %1715 = vmatpush1.bf16.msra.mxu0 0
        %1716 = vmatprep.subr.bf16.mxu0 0
        %1717 = vmatpush1.bf16.msra.mxu0 0
        %1718 = vmatprep.subr.bf16.mxu0 0
        %1719 = vmatpush1.bf16.msra.mxu0 0
        %1720 = vmatprep.subr.bf16.mxu0 0
        %1721 = vmatpush1.bf16.msra.mxu0 0
        %1722 = vmatprep.mubr.bf16.mxu0 0
        %1723 = vmatmul.mubr.bf16.gmra.mrb[0].mxu0 %v1682
        %v1724 = vpop.f32.mrb[0].mxu0
        %v1725 = vadd.f32 0.0, %v1724
        %v1726 = vpop.f32.mrb[0].mxu0
        %v1727 = vadd.f32 0.0, %v1726
        %v1728 = vpop.f32.mrb[0].mxu0
        %v1729 = vpop.f32.mrb[0].mxu0
        %1730 = vdwg.mxu0
        %v1732 = vsel %vm1680, %v1528, 0
        %v1735 = vsel %vm303, %v1612, 0
        %v1738 = vsel %vm303, %v1613, 0
        %1740 = vmatprep.subr.bf16.mxu0 %v1611
        %1741 = vmatpush1.bf16.msra.mxu0 %v1610
        %1742 = vmatprep.subr.bf16.mxu0 %v1738
        %1743 = vmatpush1.bf16.msra.mxu0 %v1735
        %1744 = vmatprep.subr.bf16.mxu0 0
        %1745 = vmatpush1.bf16.msra.mxu0 0
        %1746 = vmatprep.subr.bf16.mxu0 0
        %1747 = vmatpush1.bf16.msra.mxu0 0
        %1748 = vmatprep.subr.bf16.mxu0 0
        %1749 = vmatpush1.bf16.msra.mxu0 0
        %1750 = vmatprep.subr.bf16.mxu0 0
        %1751 = vmatpush1.bf16.msra.mxu0 0
        %1752 = vmatprep.subr.bf16.mxu0 0
        %1753 = vmatpush1.bf16.msra.mxu0 0
        %1754 = vmatprep.subr.bf16.mxu0 0
        %1755 = vmatpush1.bf16.msra.mxu0 0
        %1756 = vmatprep.subr.bf16.mxu0 0
        %1757 = vmatpush1.bf16.msra.mxu0 0
        %1758 = vmatprep.subr.bf16.mxu0 0
        %1759 = vmatpush1.bf16.msra.mxu0 0
        %1760 = vmatprep.subr.bf16.mxu0 0
        %1761 = vmatpush1.bf16.msra.mxu0 0
        %1762 = vmatprep.subr.bf16.mxu0 0
        %1763 = vmatpush1.bf16.msra.mxu0 0
        %1764 = vmatprep.subr.bf16.mxu0 0
        %1765 = vmatpush1.bf16.msra.mxu0 0
        %1766 = vmatprep.subr.bf16.mxu0 0
        %1767 = vmatpush1.bf16.msra.mxu0 0
        %1768 = vmatprep.subr.bf16.mxu0 0
        %1769 = vmatpush1.bf16.msra.mxu0 0
        %1770 = vmatprep.subr.bf16.mxu0 0
        %1771 = vmatpush1.bf16.msra.mxu0 0
        %1772 = vmatprep.mubr.bf16.mxu0 0
        %1773 = vmatmul.mubr.bf16.gmra.mrb[0].mxu0 %v1732
        %v1774 = vpop.f32.mrb[0].mxu0
        %v1775 = vadd.f32 %v1725, %v1774
        %v1776 = vpop.f32.mrb[0].mxu0
        %v1777 = vadd.f32 %v1727, %v1776
        %v1778 = vpop.f32.mrb[0].mxu0
        %v1779 = vpop.f32.mrb[0].mxu0
        %1780 = vdwg.mxu0
        %v1782 = vsel %vm1680, %v1532, 0
        %v1785 = vsel %vm303, %v1550, 0
        %v1788 = vsel %vm303, %v1551, 0
        %1790 = vmatprep.subr.bf16.mxu0 %v1548
        %1791 = vmatpush1.bf16.msra.mxu0 %v1547
        %1792 = vmatprep.subr.bf16.mxu0 %v1788
        %1793 = vmatpush1.bf16.msra.mxu0 %v1785
        %1794 = vmatprep.subr.bf16.mxu0 0
        %1795 = vmatpush1.bf16.msra.mxu0 0
        %1796 = vmatprep.subr.bf16.mxu0 0
        %1797 = vmatpush1.bf16.msra.mxu0 0
        %1798 = vmatprep.subr.bf16.mxu0 0
        %1799 = vmatpush1.bf16.msra.mxu0 0
        %1800 = vmatprep.subr.bf16.mxu0 0
        %1801 = vmatpush1.bf16.msra.mxu0 0
        %1802 = vmatprep.subr.bf16.mxu0 0
        %1803 = vmatpush1.bf16.msra.mxu0 0
        %1804 = vmatprep.subr.bf16.mxu0 0
        %1805 = vmatpush1.bf16.msra.mxu0 0
        %1806 = vmatprep.subr.bf16.mxu0 0
        %1807 = vmatpush1.bf16.msra.mxu0 0
        %1808 = vmatprep.subr.bf16.mxu0 0
        %1809 = vmatpush1.bf16.msra.mxu0 0
        %1810 = vmatprep.subr.bf16.mxu0 0
        %1811 = vmatpush1.bf16.msra.mxu0 0
        %1812 = vmatprep.subr.bf16.mxu0 0
        %1813 = vmatpush1.bf16.msra.mxu0 0
        %1814 = vmatprep.subr.bf16.mxu0 0
        %1815 = vmatpush1.bf16.msra.mxu0 0
        %1816 = vmatprep.subr.bf16.mxu0 0
        %1817 = vmatpush1.bf16.msra.mxu0 0
        %1818 = vmatprep.subr.bf16.mxu0 0
        %1819 = vmatpush1.bf16.msra.mxu0 0
        %1820 = vmatprep.subr.bf16.mxu0 0
        %1821 = vmatpush1.bf16.msra.mxu0 0
        %1822 = vmatprep.mubr.bf16.mxu0 0
        %1823 = vmatmul.mubr.bf16.gmra.mrb[0].mxu0 %v1782
        %v1824 = vpop.f32.mrb[0].mxu0
        %v1825 = vadd.f32 0.0, %v1824
        %v1826 = vpop.f32.mrb[0].mxu0
        %v1827 = vadd.f32 0.0, %v1826
        %v1828 = vpop.f32.mrb[0].mxu0
        %v1829 = vpop.f32.mrb[0].mxu0
        %1830 = vdwg.mxu0
        %1837 = vrot.lane.b32.xlu0 %v1546, 64
        %v1838 = vpop.permute.xlu0 %1837
        %1839 = vrot.lane.b32.xlu0 %v1547, 64
        %v1840 = vpop.permute.xlu0 %1839
        %1841 = vrot.lane.b32.xlu0 %v1548, 64
        %v1842 = vpop.permute.xlu0 %1841
        %1843 = vrot.lane.b32.xlu0 %v1549, 64
        %v1844 = vpop.permute.xlu0 %1843
        %1845 = vrot.lane.b32.xlu0 %v1550, 64
        %v1846 = vpop.permute.xlu0 %1845
        %1847 = vrot.lane.b32.xlu0 %v1551, 64
        %v1848 = vpop.permute.xlu0 %1847
        %vm1849 = vcmask 523264
        %v1850 = vsel %vm1849, %v1838, %v1840
        %v1851 = vsel %vm1849, %v1840, %v1842
        %v1852 = vsel %vm1849, %v1844, %v1846
        %v1853 = vsel %vm1849, %v1846, %v1848
        %v1857 = vsel %vm1680, %v1529, 0
        %v1860 = vsel %vm303, %v1852, 0
        %v1863 = vsel %vm303, %v1853, 0
        %1865 = vmatprep.subr.bf16.mxu0 %v1851
        %1866 = vmatpush1.bf16.msra.mxu0 %v1850
        %1867 = vmatprep.subr.bf16.mxu0 %v1863
        %1868 = vmatpush1.bf16.msra.mxu0 %v1860
        %1869 = vmatprep.subr.bf16.mxu0 0
        %1870 = vmatpush1.bf16.msra.mxu0 0
        %1871 = vmatprep.subr.bf16.mxu0 0
        %1872 = vmatpush1.bf16.msra.mxu0 0
        %1873 = vmatprep.subr.bf16.mxu0 0
        %1874 = vmatpush1.bf16.msra.mxu0 0
        %1875 = vmatprep.subr.bf16.mxu0 0
        %1876 = vmatpush1.bf16.msra.mxu0 0
        %1877 = vmatprep.subr.bf16.mxu0 0
        %1878 = vmatpush1.bf16.msra.mxu0 0
        %1879 = vmatprep.subr.bf16.mxu0 0
        %1880 = vmatpush1.bf16.msra.mxu0 0
        %1881 = vmatprep.subr.bf16.mxu0 0
        %1882 = vmatpush1.bf16.msra.mxu0 0
        %1883 = vmatprep.subr.bf16.mxu0 0
        %1884 = vmatpush1.bf16.msra.mxu0 0
        %1885 = vmatprep.subr.bf16.mxu0 0
        %1886 = vmatpush1.bf16.msra.mxu0 0
        %1887 = vmatprep.subr.bf16.mxu0 0
        %1888 = vmatpush1.bf16.msra.mxu0 0
        %1889 = vmatprep.subr.bf16.mxu0 0
        %1890 = vmatpush1.bf16.msra.mxu0 0
        %1891 = vmatprep.subr.bf16.mxu0 0
        %1892 = vmatpush1.bf16.msra.mxu0 0
        %1893 = vmatprep.subr.bf16.mxu0 0
        %1894 = vmatpush1.bf16.msra.mxu0 0
        %1895 = vmatprep.subr.bf16.mxu0 0
        %1896 = vmatpush1.bf16.msra.mxu0 0
        %1897 = vmatprep.mubr.bf16.mxu0 0
        %1898 = vmatmul.mubr.bf16.gmra.mrb[0].mxu0 %v1857
        %v1899 = vpop.f32.mrb[0].mxu0
        %v1900 = vadd.f32 %v1825, %v1899
        %v1901 = vpop.f32.mrb[0].mxu0
        %v1902 = vadd.f32 %v1827, %v1901
        %v1903 = vpop.f32.mrb[0].mxu0
        %v1904 = vpop.f32.mrb[0].mxu0
        %1905 = vdwg.mxu0
        %v1907 = vsel %vm1680, %v1533, 0
        %v1910 = vsel %vm303, %v1678, 0
        %v1913 = vsel %vm303, %v1679, 0
        %1915 = vmatprep.subr.bf16.mxu0 %v1677
        %1916 = vmatpush1.bf16.msra.mxu0 %v1676
        %1917 = vmatprep.subr.bf16.mxu0 %v1913
        %1918 = vmatpush1.bf16.msra.mxu0 %v1910
        %1919 = vmatprep.subr.bf16.mxu0 0
        %1920 = vmatpush1.bf16.msra.mxu0 0
        %1921 = vmatprep.subr.bf16.mxu0 0
        %1922 = vmatpush1.bf16.msra.mxu0 0
        %1923 = vmatprep.subr.bf16.mxu0 0
        %1924 = vmatpush1.bf16.msra.mxu0 0
        %1925 = vmatprep.subr.bf16.mxu0 0
        %1926 = vmatpush1.bf16.msra.mxu0 0
        %1927 = vmatprep.subr.bf16.mxu0 0
        %1928 = vmatpush1.bf16.msra.mxu0 0
        %1929 = vmatprep.subr.bf16.mxu0 0
        %1930 = vmatpush1.bf16.msra.mxu0 0
        %1931 = vmatprep.subr.bf16.mxu0 0
        %1932 = vmatpush1.bf16.msra.mxu0 0
        %1933 = vmatprep.subr.bf16.mxu0 0
        %1934 = vmatpush1.bf16.msra.mxu0 0
        %1935 = vmatprep.subr.bf16.mxu0 0
        %1936 = vmatpush1.bf16.msra.mxu0 0
        %1937 = vmatprep.subr.bf16.mxu0 0
        %1938 = vmatpush1.bf16.msra.mxu0 0
        %1939 = vmatprep.subr.bf16.mxu0 0
        %1940 = vmatpush1.bf16.msra.mxu0 0
        %1941 = vmatprep.subr.bf16.mxu0 0
        %1942 = vmatpush1.bf16.msra.mxu0 0
        %1943 = vmatprep.subr.bf16.mxu0 0
        %1944 = vmatpush1.bf16.msra.mxu0 0
        %1945 = vmatprep.subr.bf16.mxu0 0
        %1946 = vmatpush1.bf16.msra.mxu0 0
        %1947 = vmatprep.mubr.bf16.mxu0 0
        %1948 = vmatmul.mubr.bf16.gmra.mrb[0].mxu0 %v1907
        %v1949 = vpop.f32.mrb[0].mxu0
        %v1950 = vadd.f32 0.0, %v1949
        %v1951 = vpop.f32.mrb[0].mxu0
        %v1952 = vadd.f32 0.0, %v1951
        %v1953 = vpop.f32.mrb[0].mxu0
        %v1954 = vpop.f32.mrb[0].mxu0
        %1955 = vdwg.mxu0
        %v1957 = vsel %vm1680, %v1530, 0
        %v1960 = vsel %vm303, %v1634, 0
        %v1963 = vsel %vm303, %v1635, 0
        %1965 = vmatprep.subr.bf16.mxu0 %v1633
        %1966 = vmatpush1.bf16.msra.mxu0 %v1632
        %1967 = vmatprep.subr.bf16.mxu0 %v1963
        %1968 = vmatpush1.bf16.msra.mxu0 %v1960
        %1969 = vmatprep.subr.bf16.mxu0 0
        %1970 = vmatpush1.bf16.msra.mxu0 0
        %1971 = vmatprep.subr.bf16.mxu0 0
        %1972 = vmatpush1.bf16.msra.mxu0 0
        %1973 = vmatprep.subr.bf16.mxu0 0
        %1974 = vmatpush1.bf16.msra.mxu0 0
        %1975 = vmatprep.subr.bf16.mxu0 0
        %1976 = vmatpush1.bf16.msra.mxu0 0
        %1977 = vmatprep.subr.bf16.mxu0 0
        %1978 = vmatpush1.bf16.msra.mxu0 0
        %1979 = vmatprep.subr.bf16.mxu0 0
        %1980 = vmatpush1.bf16.msra.mxu0 0
        %1981 = vmatprep.subr.bf16.mxu0 0
        %1982 = vmatpush1.bf16.msra.mxu0 0
        %1983 = vmatprep.subr.bf16.mxu0 0
        %1984 = vmatpush1.bf16.msra.mxu0 0
        %1985 = vmatprep.subr.bf16.mxu0 0
        %1986 = vmatpush1.bf16.msra.mxu0 0
        %1987 = vmatprep.subr.bf16.mxu0 0
        %1988 = vmatpush1.bf16.msra.mxu0 0
        %1989 = vmatprep.subr.bf16.mxu0 0
        %1990 = vmatpush1.bf16.msra.mxu0 0
        %1991 = vmatprep.subr.bf16.mxu0 0
        %1992 = vmatpush1.bf16.msra.mxu0 0
        %1993 = vmatprep.subr.bf16.mxu0 0
        %1994 = vmatpush1.bf16.msra.mxu0 0
        %1995 = vmatprep.subr.bf16.mxu0 0
        %1996 = vmatpush1.bf16.msra.mxu0 0
        %1997 = vmatprep.mubr.bf16.mxu0 0
        %1998 = vmatmul.mubr.bf16.gmra.mrb[0].mxu0 %v1957
        %v1999 = vpop.f32.mrb[0].mxu0
        %v2000 = vadd.f32 %v1950, %v1999
        %v2001 = vpop.f32.mrb[0].mxu0
        %v2002 = vadd.f32 %v1952, %v2001
        %v2003 = vpop.f32.mrb[0].mxu0
        %v2004 = vpop.f32.mrb[0].mxu0
        %2005 = vdwg.mxu0
        %v2006 = vld [vmem:[#allocation2 + $0x28] sm:$0xff]
        %v2007 = vld [vmem:[#allocation2 + $0x30] sm:$0xff]
        %v2008 = vld [vmem:[#allocation2 + $0x38] sm:$0xff]
        %v2009 = vld [vmem:[#allocation2 + $0x48] sm:$0xff]
        %v2010 = vld [vmem:[#allocation2 + $0x50] sm:$0xff]
        %v2011 = vld [vmem:[#allocation2 + $0x58] sm:$0xff]
        %v2012 = vld [vmem:[#allocation2 + $0x68] sm:$0xff]
        %v2013 = vld [vmem:[#allocation2 + $0x70] sm:$0xff]
        %v2014 = vld [vmem:[#allocation2 + $0x78] sm:$0xff]
        %v2015 = vpack.c.bf16 %v2009, %v2006
        %v2016 = vpack.c.bf16 %v2010, %v2007
        %v2017 = vpack.c.bf16 %v2011, %v2008
        %v2018 = vpack.c.bf16 %v2012, %v2012
        %v2019 = vpack.c.bf16 %v2013, %v2013
        %v2020 = vpack.c.bf16 %v2014, %v2014
        %2030 = vrot.lane.b32.xlu0 %v2006, 64
        %v2031 = vpop.permute.xlu0 %2030
        %2032 = vrot.lane.b32.xlu0 %v2007, 64
        %v2033 = vpop.permute.xlu0 %2032
        %2034 = vrot.lane.b32.xlu0 %v2008, 64
        %v2035 = vpop.permute.xlu0 %2034
        %2036 = vrot.lane.b32.xlu0 %v2009, 64
        %v2037 = vpop.permute.xlu0 %2036
        %2038 = vrot.lane.b32.xlu0 %v2010, 64
        %v2039 = vpop.permute.xlu0 %2038
        %2040 = vrot.lane.b32.xlu0 %v2011, 64
        %v2041 = vpop.permute.xlu0 %2040
        %2042 = vrot.lane.b32.xlu0 %v2012, 64
        %v2043 = vpop.permute.xlu0 %2042
        %2044 = vrot.lane.b32.xlu0 %v2013, 64
        %v2045 = vpop.permute.xlu0 %2044
        %2046 = vrot.lane.b32.xlu0 %v2014, 64
        %v2047 = vpop.permute.xlu0 %2046
        %v2048 = vsel %vm1579, %v2031, %v2033
        %v2049 = vsel %vm1579, %v2033, %v2035
        %v2050 = vsel %vm1579, %v2037, %v2039
        %v2051 = vsel %vm1579, %v2039, %v2041
        %v2052 = vsel %vm1579, %v2043, %v2045
        %v2053 = vsel %vm1579, %v2045, %v2047
        %2060 = vrot.lane.b32.xlu0 %v2048, 1
        %v2061 = vpop.permute.xlu0 %2060
        %2062 = vrot.lane.b32.xlu0 %v2050, 1
        %v2063 = vpop.permute.xlu0 %2062
        %2064 = vrot.lane.b32.xlu0 %v2052, 1
        %v2065 = vpop.permute.xlu0 %2064
        %2066 = vrot.lane.b32.xlu0 %v2049, 1
        %v2067 = vpop.permute.xlu0 %2066
        %2068 = vrot.lane.b32.xlu0 %v2051, 1
        %v2069 = vpop.permute.xlu0 %2068
        %2070 = vrot.lane.b32.xlu0 %v2053, 1
        %v2071 = vpop.permute.xlu0 %2070
        %v2072 = vsel %vm269, %v2061, %v2067
        %v2073 = vsel %vm269, %v2063, %v2069
        %v2074 = vsel %vm269, %v2065, %v2071
        %v2075 = vsel %vm269, %v2067, %v2061
        %v2076 = vsel %vm269, %v2069, %v2063
        %v2077 = vsel %vm269, %v2071, %v2065
        %v2078 = vpack.c.bf16 %v2076, %v2075
        %v2079 = vpack.c.bf16 %v2073, %v2072
        %v2080 = vpack.c.bf16 %v2077, %v2077
        %v2081 = vpack.c.bf16 %v2074, %v2074
        %2082 = vrot.lane.b32.xlu0 %v2048, 127
        %v2083 = vpop.permute.xlu0 %2082
        %2084 = vrot.lane.b32.xlu0 %v2050, 127
        %v2085 = vpop.permute.xlu0 %2084
        %2086 = vrot.lane.b32.xlu0 %v2052, 127
        %v2087 = vpop.permute.xlu0 %2086
        %2088 = vrot.lane.b32.xlu0 %v2049, 127
        %v2089 = vpop.permute.xlu0 %2088
        %2090 = vrot.lane.b32.xlu0 %v2051, 127
        %v2091 = vpop.permute.xlu0 %2090
        %2092 = vrot.lane.b32.xlu0 %v2053, 127
        %v2093 = vpop.permute.xlu0 %2092
        %v2094 = vsel %vm278, %v2083, %v2089
        %v2095 = vsel %vm278, %v2085, %v2091
        %v2096 = vsel %vm278, %v2087, %v2093
        %v2097 = vsel %vm278, %v2089, %v2083
        %v2098 = vsel %vm278, %v2091, %v2085
        %v2099 = vsel %vm278, %v2093, %v2087
        %v2100 = vpack.c.bf16 %v2095, %v2094
        %v2101 = vpack.c.bf16 %v2098, %v2097
        %v2102 = vpack.c.bf16 %v2096, %v2096
        %v2103 = vpack.c.bf16 %v2099, %v2099
        %v2105 = vsel %vm1680, %v1534, 0
        %v2108 = vsel %vm303, %v2080, 0
        %v2111 = vsel %vm303, %v2081, 0
        %2113 = vmatprep.subr.bf16.mxu0 %v2079
        %2114 = vmatpush1.bf16.msra.mxu0 %v2078
        %2115 = vmatprep.subr.bf16.mxu0 %v2111
        %2116 = vmatpush1.bf16.msra.mxu0 %v2108
        %2117 = vmatprep.subr.bf16.mxu0 0
        %2118 = vmatpush1.bf16.msra.mxu0 0
        %2119 = vmatprep.subr.bf16.mxu0 0
        %2120 = vmatpush1.bf16.msra.mxu0 0
        %2121 = vmatprep.subr.bf16.mxu0 0
        %2122 = vmatpush1.bf16.msra.mxu0 0
        %2123 = vmatprep.subr.bf16.mxu0 0
        %2124 = vmatpush1.bf16.msra.mxu0 0
        %2125 = vmatprep.subr.bf16.mxu0 0
        %2126 = vmatpush1.bf16.msra.mxu0 0
        %2127 = vmatprep.subr.bf16.mxu0 0
        %2128 = vmatpush1.bf16.msra.mxu0 0
        %2129 = vmatprep.subr.bf16.mxu0 0
        %2130 = vmatpush1.bf16.msra.mxu0 0
        %2131 = vmatprep.subr.bf16.mxu0 0
        %2132 = vmatpush1.bf16.msra.mxu0 0
        %2133 = vmatprep.subr.bf16.mxu0 0
        %2134 = vmatpush1.bf16.msra.mxu0 0
        %2135 = vmatprep.subr.bf16.mxu0 0
        %2136 = vmatpush1.bf16.msra.mxu0 0
        %2137 = vmatprep.subr.bf16.mxu0 0
        %2138 = vmatpush1.bf16.msra.mxu0 0
        %2139 = vmatprep.subr.bf16.mxu0 0
        %2140 = vmatpush1.bf16.msra.mxu0 0
        %2141 = vmatprep.subr.bf16.mxu0 0
        %2142 = vmatpush1.bf16.msra.mxu0 0
        %2143 = vmatprep.subr.bf16.mxu0 0
        %2144 = vmatpush1.bf16.msra.mxu0 0
        %2145 = vmatprep.mubr.bf16.mxu0 0
        %2146 = vmatmul.mubr.bf16.gmra.mrb[0].mxu0 %v2105
        %v2147 = vpop.f32.mrb[0].mxu0
        %v2148 = vadd.f32 0.0, %v2147
        %v2149 = vpop.f32.mrb[0].mxu0
        %v2150 = vadd.f32 0.0, %v2149
        %v2151 = vpop.f32.mrb[0].mxu0
        %v2152 = vpop.f32.mrb[0].mxu0
        %2153 = vdwg.mxu0
        %v2154 = vadd.f32 %v1775, %v2148
        %v2155 = vadd.f32 %v1777, %v2150
        %2162 = vrot.lane.b32.xlu0 %v2015, 64
        %v2163 = vpop.permute.xlu0 %2162
        %2164 = vrot.lane.b32.xlu0 %v2016, 64
        %v2165 = vpop.permute.xlu0 %2164
        %2166 = vrot.lane.b32.xlu0 %v2017, 64
        %v2167 = vpop.permute.xlu0 %2166
        %2168 = vrot.lane.b32.xlu0 %v2018, 64
        %v2169 = vpop.permute.xlu0 %2168
        %2170 = vrot.lane.b32.xlu0 %v2019, 64
        %v2171 = vpop.permute.xlu0 %2170
        %2172 = vrot.lane.b32.xlu0 %v2020, 64
        %v2173 = vpop.permute.xlu0 %2172
        %v2174 = vsel %vm1849, %v2163, %v2165
        %v2175 = vsel %vm1849, %v2165, %v2167
        %v2176 = vsel %vm1849, %v2169, %v2171
        %v2177 = vsel %vm1849, %v2171, %v2173
        %v2181 = vsel %vm1680, %v1535, 0
        %v2184 = vsel %vm303, %v2176, 0
        %v2187 = vsel %vm303, %v2177, 0
        %2189 = vmatprep.subr.bf16.mxu0 %v2175
        %2190 = vmatpush1.bf16.msra.mxu0 %v2174
        %2191 = vmatprep.subr.bf16.mxu0 %v2187
        %2192 = vmatpush1.bf16.msra.mxu0 %v2184
        %2193 = vmatprep.subr.bf16.mxu0 0
        %2194 = vmatpush1.bf16.msra.mxu0 0
        %2195 = vmatprep.subr.bf16.mxu0 0
        %2196 = vmatpush1.bf16.msra.mxu0 0
        %2197 = vmatprep.subr.bf16.mxu0 0
        %2198 = vmatpush1.bf16.msra.mxu0 0
        %2199 = vmatprep.subr.bf16.mxu0 0
        %2200 = vmatpush1.bf16.msra.mxu0 0
        %2201 = vmatprep.subr.bf16.mxu0 0
        %2202 = vmatpush1.bf16.msra.mxu0 0
        %2203 = vmatprep.subr.bf16.mxu0 0
        %2204 = vmatpush1.bf16.msra.mxu0 0
        %2205 = vmatprep.subr.bf16.mxu0 0
        %2206 = vmatpush1.bf16.msra.mxu0 0
        %2207 = vmatprep.subr.bf16.mxu0 0
        %2208 = vmatpush1.bf16.msra.mxu0 0
        %2209 = vmatprep.subr.bf16.mxu0 0
        %2210 = vmatpush1.bf16.msra.mxu0 0
        %2211 = vmatprep.subr.bf16.mxu0 0
        %2212 = vmatpush1.bf16.msra.mxu0 0
        %2213 = vmatprep.subr.bf16.mxu0 0
        %2214 = vmatpush1.bf16.msra.mxu0 0
        %2215 = vmatprep.subr.bf16.mxu0 0
        %2216 = vmatpush1.bf16.msra.mxu0 0
        %2217 = vmatprep.subr.bf16.mxu0 0
        %2218 = vmatpush1.bf16.msra.mxu0 0
        %2219 = vmatprep.subr.bf16.mxu0 0
        %2220 = vmatpush1.bf16.msra.mxu0 0
        %2221 = vmatprep.mubr.bf16.mxu0 0
        %2222 = vmatmul.mubr.bf16.gmra.mrb[0].mxu0 %v2181
        %v2223 = vpop.f32.mrb[0].mxu0
        %v2224 = vadd.f32 0.0, %v2223
        %v2225 = vpop.f32.mrb[0].mxu0
        %v2226 = vadd.f32 0.0, %v2225
        %v2227 = vpop.f32.mrb[0].mxu0
        %v2228 = vpop.f32.mrb[0].mxu0
        %2229 = vdwg.mxu0
        %v2230 = vadd.f32 %v1900, %v2224
        %v2231 = vadd.f32 %v1902, %v2226
        %v2233 = vsel %vm1680, %v1536, 0
        %v2236 = vsel %vm303, %v2102, 0
        %v2239 = vsel %vm303, %v2103, 0
        %2241 = vmatprep.subr.bf16.mxu0 %v2101
        %2242 = vmatpush1.bf16.msra.mxu0 %v2100
        %2243 = vmatprep.subr.bf16.mxu0 %v2239
        %2244 = vmatpush1.bf16.msra.mxu0 %v2236
        %2245 = vmatprep.subr.bf16.mxu0 0
        %2246 = vmatpush1.bf16.msra.mxu0 0
        %2247 = vmatprep.subr.bf16.mxu0 0
        %2248 = vmatpush1.bf16.msra.mxu0 0
        %2249 = vmatprep.subr.bf16.mxu0 0
        %2250 = vmatpush1.bf16.msra.mxu0 0
        %2251 = vmatprep.subr.bf16.mxu0 0
        %2252 = vmatpush1.bf16.msra.mxu0 0
        %2253 = vmatprep.subr.bf16.mxu0 0
        %2254 = vmatpush1.bf16.msra.mxu0 0
        %2255 = vmatprep.subr.bf16.mxu0 0
        %2256 = vmatpush1.bf16.msra.mxu0 0
        %2257 = vmatprep.subr.bf16.mxu0 0
        %2258 = vmatpush1.bf16.msra.mxu0 0
        %2259 = vmatprep.subr.bf16.mxu0 0
        %2260 = vmatpush1.bf16.msra.mxu0 0
        %2261 = vmatprep.subr.bf16.mxu0 0
        %2262 = vmatpush1.bf16.msra.mxu0 0
        %2263 = vmatprep.subr.bf16.mxu0 0
        %2264 = vmatpush1.bf16.msra.mxu0 0
        %2265 = vmatprep.subr.bf16.mxu0 0
        %2266 = vmatpush1.bf16.msra.mxu0 0
        %2267 = vmatprep.subr.bf16.mxu0 0
        %2268 = vmatpush1.bf16.msra.mxu0 0
        %2269 = vmatprep.subr.bf16.mxu0 0
        %2270 = vmatpush1.bf16.msra.mxu0 0
        %2271 = vmatprep.subr.bf16.mxu0 0
        %2272 = vmatpush1.bf16.msra.mxu0 0
        %2273 = vmatprep.mubr.bf16.mxu0 0
        %2274 = vmatmul.mubr.bf16.gmra.mrb[0].mxu0 %v2233
        %v2275 = vpop.f32.mrb[0].mxu0
        %v2276 = vadd.f32 0.0, %v2275
        %v2277 = vpop.f32.mrb[0].mxu0
        %v2278 = vadd.f32 0.0, %v2277
        %v2279 = vpop.f32.mrb[0].mxu0
        %v2280 = vpop.f32.mrb[0].mxu0
        %2281 = vdwg.mxu0
        %v2282 = vadd.f32 %v2000, %v2276
        %v2283 = vadd.f32 %v2002, %v2278
        %s2284 = scalar_lea.vmem %s2, 16
        %v2285 = vld [vmem:[%s2284] sm:$0xff]
        %v2286 = vmul.f32 %v2154, %v228
        %v2287 = vmul.f32 %v2155, %v229
        %v2288 = vadd.f32 %v2230, %v2286
        %v2289 = vadd.f32 %v2231, %v2287
        %v2290 = vmul.f32 %v2282, %v234
        %v2291 = vmul.f32 %v2283, %v235
        %v2292 = vadd.f32 %v2288, %v2290
        %v2293 = vadd.f32 %v2289, %v2291
        %2295 = vset.pattern.permute.xlu0 0
        %2296 = vperm.xlu0 %2295, %v2285
        %v2297 = vpop.permute.xlu0 %2296
        %v2299 = vadd.f32 %v2292, %v2297
        %v2300 = vadd.f32 %v2293, %v2297
        %v2301 = vadd.f32 %v2299, %v2300
        %2302 = vadd.xlane.f32.xlu0 %v2301
        %v2303 = vpop.xlane.xlu0 %2302
        %v2304 = vmul.f32 %v2303, %v836
        %v2305 = vsub.f32 %v2299, %v2304
        %v2306 = vsub.f32 %v2300, %v2304
        %v2307 = vmul.f32 %v2305, %v2305
        %v2308 = vmul.f32 %v2306, %v2306
        %v2309 = vadd.f32 %v2307, %v2308
        %2310 = vadd.xlane.f32.xlu0 %v2309
        %v2311 = vpop.xlane.xlu0 %2310
        %v2312 = vmul.f32 %v2311, %v836
        %v2313 = vadd.f32 %v2312, 1e-05
        %v2314 = vrsqrt.pop %v2313
        %v2315 = vmul.f32 %v2285, %v2314
        %2317 = vset.pattern.permute.xlu0 1
        %2318 = vperm.xlu0 %2317, %v2315
        %v2319 = vpop.permute.xlu0 %2318
        %v2321 = vmul.f32 %v2305, %v2319
        %v2322 = vmul.f32 %v2306, %v2319
        %2323 = vset.pattern.permute.xlu0 2
        %2324 = vperm.xlu0 %2323, %v2285
        %v2325 = vpop.permute.xlu0 %2324
        %v2327 = vadd.f32 %v2321, %v2325
        %v2328 = vadd.f32 %v2322, %v2325
        %vm2329 = vcmp.ge.f32.partialorder %v2327, 0.0
        %vm2330 = vcmp.ge.f32.partialorder %v2328, 0.0
        %2331 = vset.pattern.permute.xlu0 3
        %2332 = vperm.xlu0 %2331, %v2285
        %v2333 = vpop.permute.xlu0 %2332
        %v2335 = vmul.f32 %v2333, %v2327
        %v2336 = vmul.f32 %v2333, %v2328
        %v2337 = vsel %vm2329, %v2327, %v2335
        %v2338 = vsel %vm2330, %v2328, %v2336
        %2339 = vst [vmem:[#allocation2 + $0x8] sm:$0xff] %v2337
        %2340 = vst [vmem:[#allocation2 + $0x10] sm:$0xff] %v2338
        %s2341 = scalar_lea.vmem [#allocation3], 108
        %v2342 = vld [vmem:[%s2341] sm:$0xf]
        %v2343 = vld [vmem:[%s2341 + $0x4] sm:$0xf]
        %v2344 = vld [vmem:[%s2341 + $0x8] sm:$0xf]
        %v2345 = vld [vmem:[%s2341 + $0xc] sm:$0xf]
        %v2346 = vld [vmem:[%s2341 + $0x10] sm:$0xf]
        %v2347 = vld [vmem:[%s2341 + $0x14] sm:$0xf]
        %v2348 = vld [vmem:[%s2341 + $0x18] sm:$0xf]
        %v2349 = vld [vmem:[%s2341 + $0x1c] sm:$0xf]
        %v2350 = vld [vmem:[%s2341 + $0x20] sm:$0xf]
        %v2351 = vld [vmem:[#allocation2] sm:$0xff]
        %v2352 = vld [vmem:[#allocation2 + $0x8] sm:$0xff]
        %v2353 = vld [vmem:[#allocation2 + $0x20] sm:$0xff]
        %v2354 = vld [vmem:[#allocation2 + $0x28] sm:$0xff]
        %v2355 = vld [vmem:[#allocation2 + $0x40] sm:$0xff]
        %v2356 = vld [vmem:[#allocation2 + $0x48] sm:$0xff]
        %v2357 = vld [vmem:[#allocation2 + $0x60] sm:$0xff]
        %v2358 = vld [vmem:[#allocation2 + $0x68] sm:$0xff]
        %v2359 = vpack.c.bf16 %v2353, %v2351
        %v2360 = vpack.c.bf16 %v2354, %v2352
        %v2361 = vpack.c.bf16 %v2357, %v2355
        %v2362 = vpack.c.bf16 %v2358, %v2356
        %2363 = vrot.lane.b32.xlu0 %v2351, 1
        %v2364 = vpop.permute.xlu0 %2363
        %2365 = vrot.lane.b32.xlu0 %v2353, 1
        %v2366 = vpop.permute.xlu0 %2365
        %2367 = vrot.lane.b32.xlu0 %v2355, 1
        %v2368 = vpop.permute.xlu0 %2367
        %2369 = vrot.lane.b32.xlu0 %v2357, 1
        %v2370 = vpop.permute.xlu0 %2369
        %2371 = vrot.lane.b32.xlu0 %v2352, 1
        %v2372 = vpop.permute.xlu0 %2371
        %2373 = vrot.lane.b32.xlu0 %v2354, 1
        %v2374 = vpop.permute.xlu0 %2373
        %2375 = vrot.lane.b32.xlu0 %v2356, 1
        %v2376 = vpop.permute.xlu0 %2375
        %2377 = vrot.lane.b32.xlu0 %v2358, 1
        %v2378 = vpop.permute.xlu0 %2377
        %v2379 = vsel %vm269, %v2364, %v2372
        %v2380 = vsel %vm269, %v2366, %v2374
        %v2381 = vsel %vm269, %v2368, %v2376
        %v2382 = vsel %vm269, %v2370, %v2378
        %v2383 = vsel %vm269, %v2372, %v2364
        %v2384 = vsel %vm269, %v2374, %v2366
        %v2385 = vsel %vm269, %v2376, %v2368
        %v2386 = vsel %vm269, %v2378, %v2370
        %v2387 = vpack.c.bf16 %v2384, %v2383
        %v2388 = vpack.c.bf16 %v2380, %v2379
        %v2389 = vpack.c.bf16 %v2386, %v2385
        %v2390 = vpack.c.bf16 %v2382, %v2381
        %2391 = vrot.lane.b32.xlu0 %v2351, 127
        %v2392 = vpop.permute.xlu0 %2391
        %2393 = vrot.lane.b32.xlu0 %v2353, 127
        %v2394 = vpop.permute.xlu0 %2393
        %2395 = vrot.lane.b32.xlu0 %v2355, 127
        %v2396 = vpop.permute.xlu0 %2395
        %2397 = vrot.lane.b32.xlu0 %v2357, 127
        %v2398 = vpop.permute.xlu0 %2397
        %2399 = vrot.lane.b32.xlu0 %v2352, 127
        %v2400 = vpop.permute.xlu0 %2399
        %2401 = vrot.lane.b32.xlu0 %v2354, 127
        %v2402 = vpop.permute.xlu0 %2401
        %2403 = vrot.lane.b32.xlu0 %v2356, 127
        %v2404 = vpop.permute.xlu0 %2403
        %2405 = vrot.lane.b32.xlu0 %v2358, 127
        %v2406 = vpop.permute.xlu0 %2405
        %v2407 = vsel %vm278, %v2392, %v2400
        %v2408 = vsel %vm278, %v2394, %v2402
        %v2409 = vsel %vm278, %v2396, %v2404
        %v2410 = vsel %vm278, %v2398, %v2406
        %v2411 = vsel %vm278, %v2400, %v2392
        %v2412 = vsel %vm278, %v2402, %v2394
        %v2413 = vsel %vm278, %v2404, %v2396
        %v2414 = vsel %vm278, %v2406, %v2398
        %v2415 = vpack.c.bf16 %v2408, %v2407
        %v2416 = vpack.c.bf16 %v2412, %v2411
        %v2417 = vpack.c.bf16 %v2410, %v2409
        %v2418 = vpack.c.bf16 %v2414, %v2413
        %v2419 = vld [vmem:[#allocation2 + $0x10] sm:$0xff]
        %v2420 = vld [vmem:[#allocation2 + $0x30] sm:$0xff]
        %v2421 = vld [vmem:[#allocation2 + $0x50] sm:$0xff]
        %v2422 = vld [vmem:[#allocation2 + $0x70] sm:$0xff]
        %v2423 = vpack.c.bf16 %v2420, %v2419
        %v2424 = vpack.c.bf16 %v2422, %v2421
        %2425 = vrot.lane.b32.xlu0 %v2419, 1
        %v2426 = vpop.permute.xlu0 %2425
        %2427 = vrot.lane.b32.xlu0 %v2420, 1
        %v2428 = vpop.permute.xlu0 %2427
        %2429 = vrot.lane.b32.xlu0 %v2421, 1
        %v2430 = vpop.permute.xlu0 %2429
        %2431 = vrot.lane.b32.xlu0 %v2422, 1
        %v2432 = vpop.permute.xlu0 %2431
        %v2433 = vsel %vm269, %v2372, %v2426
        %v2434 = vsel %vm269, %v2374, %v2428
        %v2435 = vsel %vm269, %v2376, %v2430
        %v2436 = vsel %vm269, %v2378, %v2432
        %v2437 = vsel %vm269, %v2426, %v2372
        %v2438 = vsel %vm269, %v2428, %v2374
        %v2439 = vsel %vm269, %v2430, %v2376
        %v2440 = vsel %vm269, %v2432, %v2378
        %v2441 = vpack.c.bf16 %v2438, %v2437
        %v2442 = vpack.c.bf16 %v2434, %v2433
        %v2443 = vpack.c.bf16 %v2440, %v2439
        %v2444 = vpack.c.bf16 %v2436, %v2435
        %2445 = vrot.lane.b32.xlu0 %v2419, 127
        %v2446 = vpop.permute.xlu0 %2445
        %2447 = vrot.lane.b32.xlu0 %v2420, 127
        %v2448 = vpop.permute.xlu0 %2447
        %2449 = vrot.lane.b32.xlu0 %v2421, 127
        %v2450 = vpop.permute.xlu0 %2449
        %2451 = vrot.lane.b32.xlu0 %v2422, 127
        %v2452 = vpop.permute.xlu0 %2451
        %v2453 = vsel %vm278, %v2400, %v2446
        %v2454 = vsel %vm278, %v2402, %v2448
        %v2455 = vsel %vm278, %v2404, %v2450
        %v2456 = vsel %vm278, %v2406, %v2452
        %v2457 = vsel %vm278, %v2446, %v2400
        %v2458 = vsel %vm278, %v2448, %v2402
        %v2459 = vsel %vm278, %v2450, %v2404
        %v2460 = vsel %vm278, %v2452, %v2406
        %v2461 = vpack.c.bf16 %v2454, %v2453
        %v2462 = vpack.c.bf16 %v2458, %v2457
        %v2463 = vpack.c.bf16 %v2456, %v2455
        %v2464 = vpack.c.bf16 %v2460, %v2459
        %v2466 = vsel %vm911, %v2345, 0
        %2468 = vmatprep.subr.bf16.mxu0 %v2442
        %2469 = vmatpush1.bf16.msra.mxu0 %v2441
        %2470 = vmatprep.subr.bf16.mxu0 %v2444
        %2471 = vmatpush1.bf16.msra.mxu0 %v2443
        %2472 = vmatprep.subr.bf16.mxu0 0
        %2473 = vmatpush1.bf16.msra.mxu0 0
        %2474 = vmatprep.subr.bf16.mxu0 0
        %2475 = vmatpush1.bf16.msra.mxu0 0
        %2476 = vmatprep.subr.bf16.mxu0 0
        %2477 = vmatpush1.bf16.msra.mxu0 0
        %2478 = vmatprep.subr.bf16.mxu0 0
        %2479 = vmatpush1.bf16.msra.mxu0 0
        %2480 = vmatprep.subr.bf16.mxu0 0
        %2481 = vmatpush1.bf16.msra.mxu0 0
        %2482 = vmatprep.subr.bf16.mxu0 0
        %2483 = vmatpush1.bf16.msra.mxu0 0
        %2484 = vmatprep.subr.bf16.mxu0 0
        %2485 = vmatpush1.bf16.msra.mxu0 0
        %2486 = vmatprep.subr.bf16.mxu0 0
        %2487 = vmatpush1.bf16.msra.mxu0 0
        %2488 = vmatprep.subr.bf16.mxu0 0
        %2489 = vmatpush1.bf16.msra.mxu0 0
        %2490 = vmatprep.subr.bf16.mxu0 0
        %2491 = vmatpush1.bf16.msra.mxu0 0
        %2492 = vmatprep.subr.bf16.mxu0 0
        %2493 = vmatpush1.bf16.msra.mxu0 0
        %2494 = vmatprep.subr.bf16.mxu0 0
        %2495 = vmatpush1.bf16.msra.mxu0 0
        %2496 = vmatprep.subr.bf16.mxu0 0
        %2497 = vmatpush1.bf16.msra.mxu0 0
        %2498 = vmatprep.subr.bf16.mxu0 0
        %2499 = vmatpush1.bf16.msra.mxu0 0
        %2500 = vmatprep.mubr.bf16.mxu0 0
        %2501 = vmatmul.mubr.bf16.gmra.mrb[0].mxu0 %v2466
        %v2502 = vpop.f32.mrb[0].mxu0
        %v2503 = vadd.f32 0.0, %v2502
        %v2504 = vpop.f32.mrb[0].mxu0
        %v2505 = vadd.f32 0.0, %v2504
        %v2506 = vpop.f32.mrb[0].mxu0
        %v2507 = vpop.f32.mrb[0].mxu0
        %2508 = vdwg.mxu0
        %v2510 = vsel %vm911, %v2342, 0
        %2512 = vmatprep.subr.bf16.mxu0 %v2388
        %2513 = vmatpush1.bf16.msra.mxu0 %v2387
        %2514 = vmatprep.subr.bf16.mxu0 %v2390
        %2515 = vmatpush1.bf16.msra.mxu0 %v2389
        %2516 = vmatprep.subr.bf16.mxu0 0
        %2517 = vmatpush1.bf16.msra.mxu0 0
        %2518 = vmatprep.subr.bf16.mxu0 0
        %2519 = vmatpush1.bf16.msra.mxu0 0
        %2520 = vmatprep.subr.bf16.mxu0 0
        %2521 = vmatpush1.bf16.msra.mxu0 0
        %2522 = vmatprep.subr.bf16.mxu0 0
        %2523 = vmatpush1.bf16.msra.mxu0 0
        %2524 = vmatprep.subr.bf16.mxu0 0
        %2525 = vmatpush1.bf16.msra.mxu0 0
        %2526 = vmatprep.subr.bf16.mxu0 0
        %2527 = vmatpush1.bf16.msra.mxu0 0
        %2528 = vmatprep.subr.bf16.mxu0 0
        %2529 = vmatpush1.bf16.msra.mxu0 0
        %2530 = vmatprep.subr.bf16.mxu0 0
        %2531 = vmatpush1.bf16.msra.mxu0 0
        %2532 = vmatprep.subr.bf16.mxu0 0
        %2533 = vmatpush1.bf16.msra.mxu0 0
        %2534 = vmatprep.subr.bf16.mxu0 0
        %2535 = vmatpush1.bf16.msra.mxu0 0
        %2536 = vmatprep.subr.bf16.mxu0 0
        %2537 = vmatpush1.bf16.msra.mxu0 0
        %2538 = vmatprep.subr.bf16.mxu0 0
        %2539 = vmatpush1.bf16.msra.mxu0 0
        %2540 = vmatprep.subr.bf16.mxu0 0
        %2541 = vmatpush1.bf16.msra.mxu0 0
        %2542 = vmatprep.subr.bf16.mxu0 0
        %2543 = vmatpush1.bf16.msra.mxu0 0
        %2544 = vmatprep.mubr.bf16.mxu0 0
        %2545 = vmatmul.mubr.bf16.gmra.mrb[0].mxu0 %v2510
        %v2546 = vpop.f32.mrb[0].mxu0
        %v2547 = vadd.f32 %v2503, %v2546
        %v2548 = vpop.f32.mrb[0].mxu0
        %v2549 = vadd.f32 %v2505, %v2548
        %v2550 = vpop.f32.mrb[0].mxu0
        %v2551 = vpop.f32.mrb[0].mxu0
        %2552 = vdwg.mxu0
        %v2554 = vsel %vm911, %v2346, 0
        %2556 = vmatprep.subr.bf16.mxu0 %v2423
        %2557 = vmatpush1.bf16.msra.mxu0 %v2360
        %2558 = vmatprep.subr.bf16.mxu0 %v2424
        %2559 = vmatpush1.bf16.msra.mxu0 %v2362
        %2560 = vmatprep.subr.bf16.mxu0 0
        %2561 = vmatpush1.bf16.msra.mxu0 0
        %2562 = vmatprep.subr.bf16.mxu0 0
        %2563 = vmatpush1.bf16.msra.mxu0 0
        %2564 = vmatprep.subr.bf16.mxu0 0
        %2565 = vmatpush1.bf16.msra.mxu0 0
        %2566 = vmatprep.subr.bf16.mxu0 0
        %2567 = vmatpush1.bf16.msra.mxu0 0
        %2568 = vmatprep.subr.bf16.mxu0 0
        %2569 = vmatpush1.bf16.msra.mxu0 0
        %2570 = vmatprep.subr.bf16.mxu0 0
        %2571 = vmatpush1.bf16.msra.mxu0 0
        %2572 = vmatprep.subr.bf16.mxu0 0
        %2573 = vmatpush1.bf16.msra.mxu0 0
        %2574 = vmatprep.subr.bf16.mxu0 0
        %2575 = vmatpush1.bf16.msra.mxu0 0
        %2576 = vmatprep.subr.bf16.mxu0 0
        %2577 = vmatpush1.bf16.msra.mxu0 0
        %2578 = vmatprep.subr.bf16.mxu0 0
        %2579 = vmatpush1.bf16.msra.mxu0 0
        %2580 = vmatprep.subr.bf16.mxu0 0
        %2581 = vmatpush1.bf16.msra.mxu0 0
        %2582 = vmatprep.subr.bf16.mxu0 0
        %2583 = vmatpush1.bf16.msra.mxu0 0
        %2584 = vmatprep.subr.bf16.mxu0 0
        %2585 = vmatpush1.bf16.msra.mxu0 0
        %2586 = vmatprep.subr.bf16.mxu0 0
        %2587 = vmatpush1.bf16.msra.mxu0 0
        %2588 = vmatprep.mubr.bf16.mxu0 0
        %2589 = vmatmul.mubr.bf16.gmra.mrb[0].mxu0 %v2554
        %v2590 = vpop.f32.mrb[0].mxu0
        %v2591 = vadd.f32 0.0, %v2590
        %v2592 = vpop.f32.mrb[0].mxu0
        %v2593 = vadd.f32 0.0, %v2592
        %v2594 = vpop.f32.mrb[0].mxu0
        %v2595 = vpop.f32.mrb[0].mxu0
        %2596 = vdwg.mxu0
        %v2598 = vsel %vm911, %v2343, 0
        %2600 = vmatprep.subr.bf16.mxu0 %v2360
        %2601 = vmatpush1.bf16.msra.mxu0 %v2359
        %2602 = vmatprep.subr.bf16.mxu0 %v2362
        %2603 = vmatpush1.bf16.msra.mxu0 %v2361
        %2604 = vmatprep.subr.bf16.mxu0 0
        %2605 = vmatpush1.bf16.msra.mxu0 0
        %2606 = vmatprep.subr.bf16.mxu0 0
        %2607 = vmatpush1.bf16.msra.mxu0 0
        %2608 = vmatprep.subr.bf16.mxu0 0
        %2609 = vmatpush1.bf16.msra.mxu0 0
        %2610 = vmatprep.subr.bf16.mxu0 0
        %2611 = vmatpush1.bf16.msra.mxu0 0
        %2612 = vmatprep.subr.bf16.mxu0 0
        %2613 = vmatpush1.bf16.msra.mxu0 0
        %2614 = vmatprep.subr.bf16.mxu0 0
        %2615 = vmatpush1.bf16.msra.mxu0 0
        %2616 = vmatprep.subr.bf16.mxu0 0
        %2617 = vmatpush1.bf16.msra.mxu0 0
        %2618 = vmatprep.subr.bf16.mxu0 0
        %2619 = vmatpush1.bf16.msra.mxu0 0
        %2620 = vmatprep.subr.bf16.mxu0 0
        %2621 = vmatpush1.bf16.msra.mxu0 0
        %2622 = vmatprep.subr.bf16.mxu0 0
        %2623 = vmatpush1.bf16.msra.mxu0 0
        %2624 = vmatprep.subr.bf16.mxu0 0
        %2625 = vmatpush1.bf16.msra.mxu0 0
        %2626 = vmatprep.subr.bf16.mxu0 0
        %2627 = vmatpush1.bf16.msra.mxu0 0
        %2628 = vmatprep.subr.bf16.mxu0 0
        %2629 = vmatpush1.bf16.msra.mxu0 0
        %2630 = vmatprep.subr.bf16.mxu0 0
        %2631 = vmatpush1.bf16.msra.mxu0 0
        %2632 = vmatprep.mubr.bf16.mxu0 0
        %2633 = vmatmul.mubr.bf16.gmra.mrb[0].mxu0 %v2598
        %v2634 = vpop.f32.mrb[0].mxu0
        %v2635 = vadd.f32 %v2591, %v2634
        %v2636 = vpop.f32.mrb[0].mxu0
        %v2637 = vadd.f32 %v2593, %v2636
        %v2638 = vpop.f32.mrb[0].mxu0
        %v2639 = vpop.f32.mrb[0].mxu0
        %2640 = vdwg.mxu0
        %v2642 = vsel %vm911, %v2347, 0
        %2644 = vmatprep.subr.bf16.mxu0 %v2462
        %2645 = vmatpush1.bf16.msra.mxu0 %v2461
        %2646 = vmatprep.subr.bf16.mxu0 %v2464
        %2647 = vmatpush1.bf16.msra.mxu0 %v2463
        %2648 = vmatprep.subr.bf16.mxu0 0
        %2649 = vmatpush1.bf16.msra.mxu0 0
        %2650 = vmatprep.subr.bf16.mxu0 0
        %2651 = vmatpush1.bf16.msra.mxu0 0
        %2652 = vmatprep.subr.bf16.mxu0 0
        %2653 = vmatpush1.bf16.msra.mxu0 0
        %2654 = vmatprep.subr.bf16.mxu0 0
        %2655 = vmatpush1.bf16.msra.mxu0 0
        %2656 = vmatprep.subr.bf16.mxu0 0
        %2657 = vmatpush1.bf16.msra.mxu0 0
        %2658 = vmatprep.subr.bf16.mxu0 0
        %2659 = vmatpush1.bf16.msra.mxu0 0
        %2660 = vmatprep.subr.bf16.mxu0 0
        %2661 = vmatpush1.bf16.msra.mxu0 0
        %2662 = vmatprep.subr.bf16.mxu0 0
        %2663 = vmatpush1.bf16.msra.mxu0 0
        %2664 = vmatprep.subr.bf16.mxu0 0
        %2665 = vmatpush1.bf16.msra.mxu0 0
        %2666 = vmatprep.subr.bf16.mxu0 0
        %2667 = vmatpush1.bf16.msra.mxu0 0
        %2668 = vmatprep.subr.bf16.mxu0 0
        %2669 = vmatpush1.bf16.msra.mxu0 0
        %2670 = vmatprep.subr.bf16.mxu0 0
        %2671 = vmatpush1.bf16.msra.mxu0 0
        %2672 = vmatprep.subr.bf16.mxu0 0
        %2673 = vmatpush1.bf16.msra.mxu0 0
        %2674 = vmatprep.subr.bf16.mxu0 0
        %2675 = vmatpush1.bf16.msra.mxu0 0
        %2676 = vmatprep.mubr.bf16.mxu0 0
        %2677 = vmatmul.mubr.bf16.gmra.mrb[0].mxu0 %v2642
        %v2678 = vpop.f32.mrb[0].mxu0
        %v2679 = vadd.f32 0.0, %v2678
        %v2680 = vpop.f32.mrb[0].mxu0
        %v2681 = vadd.f32 0.0, %v2680
        %v2682 = vpop.f32.mrb[0].mxu0
        %v2683 = vpop.f32.mrb[0].mxu0
        %2684 = vdwg.mxu0
        %v2686 = vsel %vm911, %v2344, 0
        %2688 = vmatprep.subr.bf16.mxu0 %v2416
        %2689 = vmatpush1.bf16.msra.mxu0 %v2415
        %2690 = vmatprep.subr.bf16.mxu0 %v2418
        %2691 = vmatpush1.bf16.msra.mxu0 %v2417
        %2692 = vmatprep.subr.bf16.mxu0 0
        %2693 = vmatpush1.bf16.msra.mxu0 0
        %2694 = vmatprep.subr.bf16.mxu0 0
        %2695 = vmatpush1.bf16.msra.mxu0 0
        %2696 = vmatprep.subr.bf16.mxu0 0
        %2697 = vmatpush1.bf16.msra.mxu0 0
        %2698 = vmatprep.subr.bf16.mxu0 0
        %2699 = vmatpush1.bf16.msra.mxu0 0
        %2700 = vmatprep.subr.bf16.mxu0 0
        %2701 = vmatpush1.bf16.msra.mxu0 0
        %2702 = vmatprep.subr.bf16.mxu0 0
        %2703 = vmatpush1.bf16.msra.mxu0 0
        %2704 = vmatprep.subr.bf16.mxu0 0
        %2705 = vmatpush1.bf16.msra.mxu0 0
        %2706 = vmatprep.subr.bf16.mxu0 0
        %2707 = vmatpush1.bf16.msra.mxu0 0
        %2708 = vmatprep.subr.bf16.mxu0 0
        %2709 = vmatpush1.bf16.msra.mxu0 0
        %2710 = vmatprep.subr.bf16.mxu0 0
        %2711 = vmatpush1.bf16.msra.mxu0 0
        %2712 = vmatprep.subr.bf16.mxu0 0
        %2713 = vmatpush1.bf16.msra.mxu0 0
        %2714 = vmatprep.subr.bf16.mxu0 0
        %2715 = vmatpush1.bf16.msra.mxu0 0
        %2716 = vmatprep.subr.bf16.mxu0 0
        %2717 = vmatpush1.bf16.msra.mxu0 0
        %2718 = vmatprep.subr.bf16.mxu0 0
        %2719 = vmatpush1.bf16.msra.mxu0 0
        %2720 = vmatprep.mubr.bf16.mxu0 0
        %2721 = vmatmul.mubr.bf16.gmra.mrb[0].mxu0 %v2686
        %v2722 = vpop.f32.mrb[0].mxu0
        %v2723 = vadd.f32 %v2679, %v2722
        %v2724 = vpop.f32.mrb[0].mxu0
        %v2725 = vadd.f32 %v2681, %v2724
        %v2726 = vpop.f32.mrb[0].mxu0
        %v2727 = vpop.f32.mrb[0].mxu0
        %2728 = vdwg.mxu0
        %v2729 = vld [vmem:[#allocation2 + $0x10] sm:$0xff]
        %v2730 = vld [vmem:[#allocation2 + $0x18] sm:$0xff]
        %v2731 = vld [vmem:[#allocation2 + $0x30] sm:$0xff]
        %v2732 = vld [vmem:[#allocation2 + $0x38] sm:$0xff]
        %v2733 = vld [vmem:[#allocation2 + $0x50] sm:$0xff]
        %v2734 = vld [vmem:[#allocation2 + $0x58] sm:$0xff]
        %v2735 = vld [vmem:[#allocation2 + $0x70] sm:$0xff]
        %v2736 = vld [vmem:[#allocation2 + $0x78] sm:$0xff]
        %v2737 = vpack.c.bf16 %v2731, %v2729
        %v2738 = vpack.c.bf16 %v2732, %v2730
        %v2739 = vpack.c.bf16 %v2735, %v2733
        %v2740 = vpack.c.bf16 %v2736, %v2734
        %2741 = vrot.lane.b32.xlu0 %v2729, 1
        %v2742 = vpop.permute.xlu0 %2741
        %2743 = vrot.lane.b32.xlu0 %v2731, 1
        %v2744 = vpop.permute.xlu0 %2743
        %2745 = vrot.lane.b32.xlu0 %v2733, 1
        %v2746 = vpop.permute.xlu0 %2745
        %2747 = vrot.lane.b32.xlu0 %v2735, 1
        %v2748 = vpop.permute.xlu0 %2747
        %2749 = vrot.lane.b32.xlu0 %v2730, 1
        %v2750 = vpop.permute.xlu0 %2749
        %2751 = vrot.lane.b32.xlu0 %v2732, 1
        %v2752 = vpop.permute.xlu0 %2751
        %2753 = vrot.lane.b32.xlu0 %v2734, 1
        %v2754 = vpop.permute.xlu0 %2753
        %2755 = vrot.lane.b32.xlu0 %v2736, 1
        %v2756 = vpop.permute.xlu0 %2755
        %v2757 = vsel %vm269, %v2742, %v2750
        %v2758 = vsel %vm269, %v2744, %v2752
        %v2759 = vsel %vm269, %v2746, %v2754
        %v2760 = vsel %vm269, %v2748, %v2756
        %v2761 = vsel %vm269, %v2750, %v2742
        %v2762 = vsel %vm269, %v2752, %v2744
        %v2763 = vsel %vm269, %v2754, %v2746
        %v2764 = vsel %vm269, %v2756, %v2748
        %v2765 = vpack.c.bf16 %v2762, %v2761
        %v2766 = vpack.c.bf16 %v2758, %v2757
        %v2767 = vpack.c.bf16 %v2764, %v2763
        %v2768 = vpack.c.bf16 %v2760, %v2759
        %2769 = vrot.lane.b32.xlu0 %v2729, 127
        %v2770 = vpop.permute.xlu0 %2769
        %2771 = vrot.lane.b32.xlu0 %v2731, 127
        %v2772 = vpop.permute.xlu0 %2771
        %2773 = vrot.lane.b32.xlu0 %v2733, 127
        %v2774 = vpop.permute.xlu0 %2773
        %2775 = vrot.lane.b32.xlu0 %v2735, 127
        %v2776 = vpop.permute.xlu0 %2775
        %2777 = vrot.lane.b32.xlu0 %v2730, 127
        %v2778 = vpop.permute.xlu0 %2777
        %2779 = vrot.lane.b32.xlu0 %v2732, 127
        %v2780 = vpop.permute.xlu0 %2779
        %2781 = vrot.lane.b32.xlu0 %v2734, 127
        %v2782 = vpop.permute.xlu0 %2781
        %2783 = vrot.lane.b32.xlu0 %v2736, 127
        %v2784 = vpop.permute.xlu0 %2783
        %v2785 = vsel %vm278, %v2770, %v2778
        %v2786 = vsel %vm278, %v2772, %v2780
        %v2787 = vsel %vm278, %v2774, %v2782
        %v2788 = vsel %vm278, %v2776, %v2784
        %v2789 = vsel %vm278, %v2778, %v2770
        %v2790 = vsel %vm278, %v2780, %v2772
        %v2791 = vsel %vm278, %v2782, %v2774
        %v2792 = vsel %vm278, %v2784, %v2776
        %v2793 = vpack.c.bf16 %v2786, %v2785
        %v2794 = vpack.c.bf16 %v2790, %v2789
        %v2795 = vpack.c.bf16 %v2788, %v2787
        %v2796 = vpack.c.bf16 %v2792, %v2791
        %v2798 = vsel %vm911, %v2348, 0
        %2800 = vmatprep.subr.bf16.mxu0 %v2766
        %2801 = vmatpush1.bf16.msra.mxu0 %v2765
        %2802 = vmatprep.subr.bf16.mxu0 %v2768
        %2803 = vmatpush1.bf16.msra.mxu0 %v2767
        %2804 = vmatprep.subr.bf16.mxu0 0
        %2805 = vmatpush1.bf16.msra.mxu0 0
        %2806 = vmatprep.subr.bf16.mxu0 0
        %2807 = vmatpush1.bf16.msra.mxu0 0
        %2808 = vmatprep.subr.bf16.mxu0 0
        %2809 = vmatpush1.bf16.msra.mxu0 0
        %2810 = vmatprep.subr.bf16.mxu0 0
        %2811 = vmatpush1.bf16.msra.mxu0 0
        %2812 = vmatprep.subr.bf16.mxu0 0
        %2813 = vmatpush1.bf16.msra.mxu0 0
        %2814 = vmatprep.subr.bf16.mxu0 0
        %2815 = vmatpush1.bf16.msra.mxu0 0
        %2816 = vmatprep.subr.bf16.mxu0 0
        %2817 = vmatpush1.bf16.msra.mxu0 0
        %2818 = vmatprep.subr.bf16.mxu0 0
        %2819 = vmatpush1.bf16.msra.mxu0 0
        %2820 = vmatprep.subr.bf16.mxu0 0
        %2821 = vmatpush1.bf16.msra.mxu0 0
        %2822 = vmatprep.subr.bf16.mxu0 0
        %2823 = vmatpush1.bf16.msra.mxu0 0
        %2824 = vmatprep.subr.bf16.mxu0 0
        %2825 = vmatpush1.bf16.msra.mxu0 0
        %2826 = vmatprep.subr.bf16.mxu0 0
        %2827 = vmatpush1.bf16.msra.mxu0 0
        %2828 = vmatprep.subr.bf16.mxu0 0
        %2829 = vmatpush1.bf16.msra.mxu0 0
        %2830 = vmatprep.subr.bf16.mxu0 0
        %2831 = vmatpush1.bf16.msra.mxu0 0
        %2832 = vmatprep.mubr.bf16.mxu0 0
        %2833 = vmatmul.mubr.bf16.gmra.mrb[0].mxu0 %v2798
        %v2834 = vpop.f32.mrb[0].mxu0
        %v2835 = vadd.f32 0.0, %v2834
        %v2836 = vpop.f32.mrb[0].mxu0
        %v2837 = vadd.f32 0.0, %v2836
        %v2838 = vpop.f32.mrb[0].mxu0
        %v2839 = vpop.f32.mrb[0].mxu0
        %2840 = vdwg.mxu0
        %v2841 = vadd.f32 %v2547, %v2835
        %v2842 = vadd.f32 %v2549, %v2837
        %v2844 = vsel %vm911, %v2349, 0
        %2846 = vmatprep.subr.bf16.mxu0 %v2738
        %2847 = vmatpush1.bf16.msra.mxu0 %v2737
        %2848 = vmatprep.subr.bf16.mxu0 %v2740
        %2849 = vmatpush1.bf16.msra.mxu0 %v2739
        %2850 = vmatprep.subr.bf16.mxu0 0
        %2851 = vmatpush1.bf16.msra.mxu0 0
        %2852 = vmatprep.subr.bf16.mxu0 0
        %2853 = vmatpush1.bf16.msra.mxu0 0
        %2854 = vmatprep.subr.bf16.mxu0 0
        %2855 = vmatpush1.bf16.msra.mxu0 0
        %2856 = vmatprep.subr.bf16.mxu0 0
        %2857 = vmatpush1.bf16.msra.mxu0 0
        %2858 = vmatprep.subr.bf16.mxu0 0
        %2859 = vmatpush1.bf16.msra.mxu0 0
        %2860 = vmatprep.subr.bf16.mxu0 0
        %2861 = vmatpush1.bf16.msra.mxu0 0
        %2862 = vmatprep.subr.bf16.mxu0 0
        %2863 = vmatpush1.bf16.msra.mxu0 0
        %2864 = vmatprep.subr.bf16.mxu0 0
        %2865 = vmatpush1.bf16.msra.mxu0 0
        %2866 = vmatprep.subr.bf16.mxu0 0
        %2867 = vmatpush1.bf16.msra.mxu0 0
        %2868 = vmatprep.subr.bf16.mxu0 0
        %2869 = vmatpush1.bf16.msra.mxu0 0
        %2870 = vmatprep.subr.bf16.mxu0 0
        %2871 = vmatpush1.bf16.msra.mxu0 0
        %2872 = vmatprep.subr.bf16.mxu0 0
        %2873 = vmatpush1.bf16.msra.mxu0 0
        %2874 = vmatprep.subr.bf16.mxu0 0
        %2875 = vmatpush1.bf16.msra.mxu0 0
        %2876 = vmatprep.subr.bf16.mxu0 0
        %2877 = vmatpush1.bf16.msra.mxu0 0
        %2878 = vmatprep.mubr.bf16.mxu0 0
        %2879 = vmatmul.mubr.bf16.gmra.mrb[0].mxu0 %v2844
        %v2880 = vpop.f32.mrb[0].mxu0
        %v2881 = vadd.f32 0.0, %v2880
        %v2882 = vpop.f32.mrb[0].mxu0
        %v2883 = vadd.f32 0.0, %v2882
        %v2884 = vpop.f32.mrb[0].mxu0
        %v2885 = vpop.f32.mrb[0].mxu0
        %2886 = vdwg.mxu0
        %v2887 = vadd.f32 %v2635, %v2881
        %v2888 = vadd.f32 %v2637, %v2883
        %v2890 = vsel %vm911, %v2350, 0
        %2892 = vmatprep.subr.bf16.mxu0 %v2794
        %2893 = vmatpush1.bf16.msra.mxu0 %v2793
        %2894 = vmatprep.subr.bf16.mxu0 %v2796
        %2895 = vmatpush1.bf16.msra.mxu0 %v2795
        %2896 = vmatprep.subr.bf16.mxu0 0
        %2897 = vmatpush1.bf16.msra.mxu0 0
        %2898 = vmatprep.subr.bf16.mxu0 0
        %2899 = vmatpush1.bf16.msra.mxu0 0
        %2900 = vmatprep.subr.bf16.mxu0 0
        %2901 = vmatpush1.bf16.msra.mxu0 0
        %2902 = vmatprep.subr.bf16.mxu0 0
        %2903 = vmatpush1.bf16.msra.mxu0 0
        %2904 = vmatprep.subr.bf16.mxu0 0
        %2905 = vmatpush1.bf16.msra.mxu0 0
        %2906 = vmatprep.subr.bf16.mxu0 0
        %2907 = vmatpush1.bf16.msra.mxu0 0
        %2908 = vmatprep.subr.bf16.mxu0 0
        %2909 = vmatpush1.bf16.msra.mxu0 0
        %2910 = vmatprep.subr.bf16.mxu0 0
        %2911 = vmatpush1.bf16.msra.mxu0 0
        %2912 = vmatprep.subr.bf16.mxu0 0
        %2913 = vmatpush1.bf16.msra.mxu0 0
        %2914 = vmatprep.subr.bf16.mxu0 0
        %2915 = vmatpush1.bf16.msra.mxu0 0
        %2916 = vmatprep.subr.bf16.mxu0 0
        %2917 = vmatpush1.bf16.msra.mxu0 0
        %2918 = vmatprep.subr.bf16.mxu0 0
        %2919 = vmatpush1.bf16.msra.mxu0 0
        %2920 = vmatprep.subr.bf16.mxu0 0
        %2921 = vmatpush1.bf16.msra.mxu0 0
        %2922 = vmatprep.subr.bf16.mxu0 0
        %2923 = vmatpush1.bf16.msra.mxu0 0
        %2924 = vmatprep.mubr.bf16.mxu0 0
        %2925 = vmatmul.mubr.bf16.gmra.mrb[0].mxu0 %v2890
        %v2926 = vpop.f32.mrb[0].mxu0
        %v2927 = vadd.f32 0.0, %v2926
        %v2928 = vpop.f32.mrb[0].mxu0
        %v2929 = vadd.f32 0.0, %v2928
        %v2930 = vpop.f32.mrb[0].mxu0
        %v2931 = vpop.f32.mrb[0].mxu0
        %2932 = vdwg.mxu0
        %v2933 = vadd.f32 %v2723, %v2927
        %v2934 = vadd.f32 %v2725, %v2929
        %s2935 = scalar_lea.vmem %s2, 24
        %v2936 = vld [vmem:[%s2935] sm:$0xff]
        %v2937 = vmul.f32 %v2841, %v228
        %v2938 = vmul.f32 %v2842, %v229
        %v2939 = vadd.f32 %v2887, %v2937
        %v2940 = vadd.f32 %v2888, %v2938
        %v2941 = vmul.f32 %v2933, %v234
        %v2942 = vmul.f32 %v2934, %v235
        %v2943 = vadd.f32 %v2939, %v2941
        %v2944 = vadd.f32 %v2940, %v2942
        %2946 = vset.pattern.permute.xlu0 0
        %2947 = vperm.xlu0 %2946, %v2936
        %v2948 = vpop.permute.xlu0 %2947
        %v2950 = vadd.f32 %v2943, %v2948
        %v2951 = vadd.f32 %v2944, %v2948
        %v2952 = vadd.f32 %v2950, %v2951
        %2953 = vadd.xlane.f32.xlu0 %v2952
        %v2954 = vpop.xlane.xlu0 %2953
        %v2955 = vmul.f32 %v2954, %v836
        %v2956 = vsub.f32 %v2950, %v2955
        %v2957 = vsub.f32 %v2951, %v2955
        %v2958 = vmul.f32 %v2956, %v2956
        %v2959 = vmul.f32 %v2957, %v2957
        %v2960 = vadd.f32 %v2958, %v2959
        %2961 = vadd.xlane.f32.xlu0 %v2960
        %v2962 = vpop.xlane.xlu0 %2961
        %v2963 = vmul.f32 %v2962, %v836
        %v2964 = vadd.f32 %v2963, 1e-05
        %v2965 = vrsqrt.pop %v2964
        %v2966 = vmul.f32 %v2936, %v2965
        %2968 = vset.pattern.permute.xlu0 1
        %2969 = vperm.xlu0 %2968, %v2966
        %v2970 = vpop.permute.xlu0 %2969
        %v2972 = vmul.f32 %v2956, %v2970
        %v2973 = vmul.f32 %v2957, %v2970
        %2974 = vset.pattern.permute.xlu0 2
        %2975 = vperm.xlu0 %2974, %v2936
        %v2976 = vpop.permute.xlu0 %2975
        %v2978 = vadd.f32 %v2972, %v2976
        %v2979 = vadd.f32 %v2973, %v2976
        %vm2980 = vcmp.ge.f32.partialorder %v2978, 0.0
        %vm2981 = vcmp.ge.f32.partialorder %v2979, 0.0
        %2982 = vset.pattern.permute.xlu0 3
        %2983 = vperm.xlu0 %2982, %v2936
        %v2984 = vpop.permute.xlu0 %2983
        %v2986 = vmul.f32 %v2984, %v2978
        %v2987 = vmul.f32 %v2984, %v2979
        %v2988 = vsel %vm2980, %v2978, %v2986
        %v2989 = vsel %vm2981, %v2979, %v2987
        %2990 = vst [vmem:[%s178] sm:$0xff] %v2988
        %2991 = vst [vmem:[%s178 + $0x8] sm:$0xff] %v2989
        %s2992 = sand.u32 %s94, 1
        %s2993 = scalar_lea.sflag [#allocation5], %s2992
        %s2994 = sand.u32 %s94, 1
        %s2995 = smul.addr %s2994, 16
        %s2996 = scalar_lea.vmem [#allocation6], %s2995
        // Predicated region
        $region37: #{tpu_custom_call.1} parent=31 // pred_check
          %p2997 = pneg %p104
        $region38: #{tpu_custom_call.1} parent=31 // pred_check_branch
          %2999 = sbr.rel (%p2997) target = $region40
        $region39: #{tpu_custom_call.1} parent=31 // pred_region
          %s3001 = ssub.s32 256, 256
          %3002 = vsyncadd %s2993, %s3001
          %s3003 = smul.addr %s18, 2
          %s3004 = smul.addr %s3003, 128
          %s3005 = scalar_lea.hbm %s3, %s3004
          %s3007 = sshll.u32 %s2996, 4
          %s3008 = int_to_ptr.vmem [resolvable:$true] %s3007
          %3010 = dma.vmem_to_hbm [thread:$0]  %s3008, 256, %s3005, %s2993
        $region40: #{tpu_custom_call.1} parent=31 // pred_fallthru
          _
      $region32: #{tpu_custom_call.1} parent=5 // pred_fallthru
        _
      %p3011 = scmp.le.s32.totalorder 2, %s13
      // Predicated region
      $region41: #{tpu_custom_call.1} parent=5 // pred_check
        %p3012 = pneg %p3011
      $region42: #{tpu_custom_call.1} parent=5 // pred_check_branch
        %3014 = sbr.rel (%p3012) target = $region44
      $region43: #{tpu_custom_call.1} parent=5 // pred_region
        %s3015 = ssub.s32 %s13, 2
        // Predicated region
        $region45: #{tpu_custom_call.1} parent=43 // pred_check
          %p3016 = pneg %p110
        $region46: #{tpu_custom_call.1} parent=43 // pred_check_branch
          %3018 = sbr.rel (%p3016) target = $region48
        $region47: #{tpu_custom_call.1} parent=43 // pred_region
          %s3019 = sand.u32 %s95, 1
          %s3020 = scalar_lea.sflag [#allocation5], %s3019
          %s3021 = sand.u32 %s95, 1
          %s3022 = smul.addr %s3021, 16
          %s3023 = scalar_lea.vmem [#allocation6], %s3022
          %3024 = dma.done %s3020, 256
        $region48: #{tpu_custom_call.1} parent=43 // pred_fallthru
          _
      $region44: #{tpu_custom_call.1} parent=5 // pred_fallthru
        _
    $region6: #{tpu_custom_call.1} parent=1 // loop_footer
      %s17 = sadd.s32 1, %s13
    $region7: #{tpu_custom_call.1} parent=1 // loop_footer_branch
      %12 = sbr.rel target = $region3
    $region8: #{tpu_custom_call.1} parent=1 // loop_exit
      _
    %3025 = vsyncpa [#allocation4], 1
    %s3026 = scalar_lea.sflag [#allocation4], 1
    %3027 = vsyncpa %s3026, 1
    %3028 = vsyncpa [#allocation5], 1
    %s3029 = scalar_lea.sflag [#allocation5], 1
    %3030 = vsyncpa %s3029, 1

</llo_original>
